<compile_context>
chip_gen: v5e
topology: v5e:2x2
jax: 0.10.0
libtpu: 0.0.40
codegen_flags: <defaults>
</compile_context>

<pallas_src>
import functools

import jax
import jax.numpy as jnp
from jax import lax
from jax.experimental import pallas as pl
from jax.experimental.pallas import tpu as pltpu


_VMEM_LIMIT = 48 * 1024 * 1024  # > scoped defaults (16/32 MiB), < v7x 64 MiB.


def _largest_tile(n, cap=512):
    """Largest multiple-of-8 divisor of n that is <= cap (n itself if n <= cap)."""
    if n <= cap:
        return n
    t = (cap // 8) * 8
    while t > 8 and n % t:
        t -= 8
    return t if (t > 0 and n % t == 0) else n


# ---------------------------------------------------------------------------
# Kernel 1: Q/V projection + shared-QK key normalization (head-major outputs)
# ---------------------------------------------------------------------------
def _qkv_proj_kernel(x_ref, wq_ref, bq_ref, wv_ref, bv_ref,
                     q_ref, k_ref, v_ref, *, num_head):
    # x_ref: [tr, D]; w*_ref: [H, D, Dh]; b*_ref: [H, 1, Dh]
    # q/k/v_ref: [H, tr, Dh]  (head-major: per-head access is a leading-axis
    # ref index, never a lane-offset slice, and there is no lane concat).
    x = x_ref[...]
    for h in range(num_head):
        qh = jnp.dot(x, wq_ref[h], preferred_element_type=jnp.float32) + bq_ref[h]
        vh = jnp.dot(x, wv_ref[h], preferred_element_type=jnp.float32) + bv_ref[h]
        # Reformer shared-QK: keys are the per-head L2-normalized queries.
        inv = lax.rsqrt(jnp.sum(qh * qh, axis=-1, keepdims=True) + 1e-12)
        q_ref[h] = qh
        k_ref[h] = qh * inv
        v_ref[h] = vh


# ---------------------------------------------------------------------------
# Kernel 2: shared-QK attention core + W_o merge (batched over heads)
# ---------------------------------------------------------------------------
def _attn_core_kernel(mask_ref, q_ref, k_ref, v_ref, wo_ref, bo_ref, o_ref,
                      *, head_dim, tq):
    # mask_ref: [1, N]; q_ref: [H, tq, Dh]; k/v_ref: [H, N, Dh];
    # wo_ref: [H, Dh, D]; bo_ref: [1, D]; o_ref: [tq, D].
    qi = pl.program_id(1)
    n = k_ref.shape[1]
    row0 = pl.multiple_of(qi * tq, tq)

    # Mask operands built once per grid step and shared by all heads; the
    # single batched `where` below broadcasts across H exactly once.
    km = mask_ref[...]                                     # [1, N]
    key_invalid = km <= 0.0                                # [1, N] bool
    # Padded key -> -1e9 (dominates); self-attention on a valid key -> -5e4.
    fill = jnp.where(key_invalid, jnp.float32(-1e9), jnp.float32(-5e4))
    rows = row0 + lax.broadcasted_iota(jnp.int32, (tq, 1), 0)
    cols = lax.broadcasted_iota(jnp.int32, (1, n), 1)
    use_fill = jnp.logical_or(rows == cols, key_invalid)[None]   # [1, tq, N]
    fill_b = jnp.broadcast_to(fill, (tq, n))[None]                # [1, tq, N]

    q = q_ref[...]                                         # [H, tq, Dh]
    k = k_ref[...]                                         # [H, N,  Dh]
    v = v_ref[...]                                         # [H, N,  Dh]

    scale = jnp.float32(head_dim ** -0.5)
    # Batched-over-heads MXU matmuls (no per-head lane slicing / concat).
    s = lax.dot_general(q, k, (((2,), (2,)), ((0,), (0,))),
                        preferred_element_type=jnp.float32) * scale   # [H,tq,N]
    s = jnp.where(use_fill, fill_b, s)

    # Numerically-stable softmax; normalization on the EUP (approx reciprocal,
    # ~1e-3-level relative error, well inside the test tolerance).
    s_max = jnp.max(s, axis=-1, keepdims=True)
    p = jnp.exp(s - s_max)
    denom = jnp.sum(p, axis=-1, keepdims=True)
    attn = p * pl.reciprocal(denom, approx=True)

    o_heads = lax.dot_general(attn, v, (((2,), (1,)), ((0,), (0,))),
                              preferred_element_type=jnp.float32)      # [H,tq,Dh]
    # W_o(concat(heads)) == sum over heads of head_h @ W_o[h]: batched matmul
    # followed by a cheap reduce over the leading (non-tiled) head axis.
    o_proj = lax.dot_general(o_heads, wo_ref[...], (((2,), (1,)), ((0,), (0,))),
                             preferred_element_type=jnp.float32)       # [H,tq,D]
    o_ref[...] = jnp.sum(o_proj, axis=0) + bo_ref[...]


# ---------------------------------------------------------------------------
# Wrapper
# ---------------------------------------------------------------------------
def reformer_attention(x, mask, params, *, tq=None, tr=None):
    B, N, D = x.shape
    H = params["num_head"]
    Dh = params["head_dim"]

    x = x.astype(jnp.float32)                  # autocast(enabled=False) -> fp32
    mask3 = mask.astype(jnp.float32)[:, None, :]             # [B, 1, N]

    # Head-major weight layouts (tiny arrays, reshaped once per call).
    wq_h = params["wq"].reshape(D, H, Dh).transpose(1, 0, 2)  # [H, D, Dh]
    bq_h = params["bq"].reshape(1, H, Dh).transpose(1, 0, 2)  # [H, 1, Dh]
    wv_h = params["wv"].reshape(D, H, Dh).transpose(1, 0, 2)
    bv_h = params["bv"].reshape(1, H, Dh).transpose(1, 0, 2)
    wo_h = params["wo"].reshape(H, Dh, D)                     # [H, Dh, D]
    bo = params["bo"].reshape(1, D)

    if tr is None:
        tr = _largest_tile(N)
    if tq is None:
        tq = _largest_tile(N)
    assert N % tr == 0 and N % tq == 0, (N, tr, tq)
    assert (tr % 8 == 0 or tr == N) and (tq % 8 == 0 or tq == N), (tr, tq)

    cparams = pltpu.CompilerParams(
        dimension_semantics=("parallel", "parallel"),
        vmem_limit_bytes=_VMEM_LIMIT)

    # ---- stage 1: Q/V projection + K normalization (head-major) ----
    q, k, v = pl.pallas_call(
        functools.partial(_qkv_proj_kernel, num_head=H),
        out_shape=(
            jax.ShapeDtypeStruct((B, H, N, Dh), jnp.float32),
            jax.ShapeDtypeStruct((B, H, N, Dh), jnp.float32),
            jax.ShapeDtypeStruct((B, H, N, Dh), jnp.float32),
        ),
        grid=(B, N // tr),
        in_specs=[
            pl.BlockSpec((None, tr, D), lambda b, r: (b, r, 0)),        # x
            pl.BlockSpec((H, D, Dh), lambda b, r: (0, 0, 0)),           # wq
            pl.BlockSpec((H, 1, Dh), lambda b, r: (0, 0, 0)),           # bq
            pl.BlockSpec((H, D, Dh), lambda b, r: (0, 0, 0)),           # wv
            pl.BlockSpec((H, 1, Dh), lambda b, r: (0, 0, 0)),           # bv
        ],
        out_specs=(
            pl.BlockSpec((None, H, tr, Dh), lambda b, r: (b, 0, r, 0)),
            pl.BlockSpec((None, H, tr, Dh), lambda b, r: (b, 0, r, 0)),
            pl.BlockSpec((None, H, tr, Dh), lambda b, r: (b, 0, r, 0)),
        ),
        compiler_params=cparams,
    )(x, wq_h, bq_h, wv_h, bv_h)

    # ---- stage 2: attention core + W_o merge ----
    out = pl.pallas_call(
        functools.partial(_attn_core_kernel, head_dim=Dh, tq=tq),
        out_shape=jax.ShapeDtypeStruct((B, N, D), jnp.float32),
        grid=(B, N // tq),
        in_specs=[
            pl.BlockSpec((None, 1, N), lambda b, qi: (b, 0, 0)),          # mask
            pl.BlockSpec((None, H, tq, Dh), lambda b, qi: (b, 0, qi, 0)), # q
            pl.BlockSpec((None, H, N, Dh), lambda b, qi: (b, 0, 0, 0)),   # k
            pl.BlockSpec((None, H, N, Dh), lambda b, qi: (b, 0, 0, 0)),   # v
            pl.BlockSpec((H, Dh, D), lambda b, qi: (0, 0, 0)),            # wo
            pl.BlockSpec((1, D), lambda b, qi: (0, 0)),                   # bo
        ],
        out_specs=pl.BlockSpec((None, tq, D), lambda b, qi: (b, qi, 0)),
        compiler_params=cparams,
    )(mask3, q, k, v, wo_h, bo)

    return out


# ---------------------------------------------------------------------------
# Pure-JAX reference (for correctness check)
# ---------------------------------------------------------------------------
def reformer_attention_ref(x, mask, params):
    B, N, D = x.shape
    H, Dh = params["num_head"], params["head_dim"]
    x = x.astype(jnp.float32)
    mask = mask.astype(jnp.float32)

    q = x @ params["wq"] + params["bq"]
    v = x @ params["wv"] + params["bv"]
    q = q.reshape(B, N, H, Dh).transpose(0, 2, 1, 3)
    v = v.reshape(B, N, H, Dh).transpose(0, 2, 1, 3)
    k = q / jnp.sqrt(jnp.sum(q * q, axis=-1, keepdims=True) + 1e-12)

    s = jnp.einsum("bhqd,bhkd->bhqk", q, k) * (Dh ** -0.5)
    eye = jnp.eye(N, dtype=bool)
    s = jnp.where(eye[None, None], jnp.float32(-5e4), s)
    s = jnp.where(mask[:, None, None, :] > 0.0, s, jnp.float32(-1e9))
    p = jax.nn.softmax(s, axis=-1)
    o = jnp.einsum("bhqk,bhkd->bhqd", p, v)
    o = o.transpose(0, 2, 1, 3).reshape(B, N, H * Dh)
    return o @ params["wo"] + params["bo"]


# ---------------------------------------------------------------------------
# Deterministic parameter init (PyTorch nn.Linear default: U(-1/sqrt(in), ..))
# ---------------------------------------------------------------------------
def _linear_init(kw, kb, fan_in, fan_out):
    bound = 1.0 / (fan_in ** 0.5)
    w = jax.random.uniform(kw, (fan_in, fan_out), jnp.float32, -bound, bound)
    b = jax.random.uniform(kb, (1, fan_out), jnp.float32, -bound, bound)
    return w, b


if __name__ == "__main__":
    jax.config.update("jax_default_matmul_precision", "highest")

    config = {
        "hidden_dim": 32,
        "head_dim": 16,
        "num_head": 2,
        "attn_type": "lsh",
        "attention_grad_checkpointing": False,
    }
    B, N = 2, 128
    D, H, Dh = config["hidden_dim"], config["num_head"], config["head_dim"]

    key = jax.random.PRNGKey(0)
    keys = jax.random.split(key, 8)

    wq, bq = _linear_init(keys[0], keys[1], D, H * Dh)
    wv, bv = _linear_init(keys[2], keys[3], D, H * Dh)
    wo, bo = _linear_init(keys[4], keys[5], H * Dh, D)

    x = jax.random.normal(keys[6], (B, N, D), jnp.float32)
    mask = jnp.ones((B, N), jnp.float32).at[:, -5:].set(0.0)   # a bit of padding

    params = dict(
        num_head=H, head_dim=Dh,
        wq=wq, bq=bq, wv=wv, bv=bv, wo=wo, bo=bo,
    )

    out = reformer_attention(x, mask, params)
    out = jax.block_until_ready(out)

    assert out.shape == (B, N, D), out.shape
    assert bool(jnp.all(jnp.isfinite(out)))

    ref = reformer_attention_ref(x, mask, params)
    assert bool(jnp.allclose(out, ref, atol=1e-2, rtol=1e-2)), (
        float(jnp.max(jnp.abs(out - ref))))

    print("KERNEL_OK")
</pallas_src>

<mosaic_0001>
module attributes {stable_mosaic.version = 11 : i64} {
  func.func @_qkv_proj_kernel(%arg0: i32, %arg1: i32, %arg2: memref<1x128x32xf32, #tpu.memory_space<vmem>>, %arg3: memref<2x32x16xf32, #tpu.memory_space<vmem>>, %arg4: memref<2x1x16xf32, #tpu.memory_space<vmem>>, %arg5: memref<2x32x16xf32, #tpu.memory_space<vmem>>, %arg6: memref<2x1x16xf32, #tpu.memory_space<vmem>>, %arg7: memref<1x2x128x16xf32, #tpu.memory_space<vmem>>, %arg8: memref<1x2x128x16xf32, #tpu.memory_space<vmem>>, %arg9: memref<1x2x128x16xf32, #tpu.memory_space<vmem>>) attributes {dimension_semantics = [#tpu.dimension_semantics<parallel>, #tpu.dimension_semantics<parallel>], iteration_bounds = array<i64: 2, 1>, scalar_prefetch = 0 : i64, scratch_operands = 0 : i64, tpu.core_type = #tpu.core_type<tc>, window_params = [{transform_indices = @transform_0, window_bounds = array<i64: 1, 128, 32>}, {pipeline_mode = #tpu.pipeline_mode<synchronous>, transform_indices = @transform_1, window_bounds = array<i64: 2, 32, 16>}, {pipeline_mode = #tpu.pipeline_mode<synchronous>, transform_indices = @transform_2, window_bounds = array<i64: 2, 1, 16>}, {pipeline_mode = #tpu.pipeline_mode<synchronous>, transform_indices = @transform_3, window_bounds = array<i64: 2, 32, 16>}, {pipeline_mode = #tpu.pipeline_mode<synchronous>, transform_indices = @transform_4, window_bounds = array<i64: 2, 1, 16>}, {transform_indices = @transform_5, window_bounds = array<i64: 1, 2, 128, 16>}, {transform_indices = @transform_6, window_bounds = array<i64: 1, 2, 128, 16>}, {transform_indices = @transform_7, window_bounds = array<i64: 1, 2, 128, 16>}]} {
    %c0 = arith.constant 0 : index
    %c0_0 = arith.constant 0 : index
    %c0_1 = arith.constant 0 : index
    %0 = vector.load %arg2[%c0, %c0_0, %c0_1] : memref<1x128x32xf32, #tpu.memory_space<vmem>>, vector<1x128x32xf32>
    %1 = vector.shape_cast %0 : vector<1x128x32xf32> to vector<128x32xf32>
    %c0_2 = arith.constant 0 : index
    %c0_3 = arith.constant 0 : index
    %c0_4 = arith.constant 0 : index
    %2 = vector.load %arg3[%c0_2, %c0_3, %c0_4] : memref<2x32x16xf32, #tpu.memory_space<vmem>>, vector<1x32x16xf32>
    %3 = vector.shape_cast %2 : vector<1x32x16xf32> to vector<32x16xf32>
    %cst = arith.constant dense<0.000000e+00> : vector<128x16xf32>
    %4 = tpu.matmul %1, %3, %cst {dimension_numbers = #tpu.dot_dimension_numbers<[1], [0], [0], [1], [0, 0, 1, 1], [], []>, precision = #tpu.contract_precision<fp32>} : vector<128x32xf32>, vector<32x16xf32>, vector<128x16xf32> -> vector<128x16xf32>
    %c0_5 = arith.constant 0 : index
    %c0_6 = arith.constant 0 : index
    %c0_7 = arith.constant 0 : index
    %5 = vector.load %arg4[%c0_5, %c0_6, %c0_7] : memref<2x1x16xf32, #tpu.memory_space<vmem>>, vector<1x1x16xf32>
    %6 = vector.shape_cast %5 : vector<1x1x16xf32> to vector<1x16xf32>
    %7 = vector.broadcast %6 : vector<1x16xf32> to vector<128x16xf32>
    %8 = arith.addf %4, %7 : vector<128x16xf32>
    %c0_8 = arith.constant 0 : index
    %c0_9 = arith.constant 0 : index
    %c0_10 = arith.constant 0 : index
    %9 = vector.load %arg5[%c0_8, %c0_9, %c0_10] : memref<2x32x16xf32, #tpu.memory_space<vmem>>, vector<1x32x16xf32>
    %10 = vector.shape_cast %9 : vector<1x32x16xf32> to vector<32x16xf32>
    %cst_11 = arith.constant dense<0.000000e+00> : vector<128x16xf32>
    %11 = tpu.matmul %1, %10, %cst_11 {dimension_numbers = #tpu.dot_dimension_numbers<[1], [0], [0], [1], [0, 0, 1, 1], [], []>, precision = #tpu.contract_precision<fp32>} : vector<128x32xf32>, vector<32x16xf32>, vector<128x16xf32> -> vector<128x16xf32>
    %c0_12 = arith.constant 0 : index
    %c0_13 = arith.constant 0 : index
    %c0_14 = arith.constant 0 : index
    %12 = vector.load %arg6[%c0_12, %c0_13, %c0_14] : memref<2x1x16xf32, #tpu.memory_space<vmem>>, vector<1x1x16xf32>
    %13 = vector.shape_cast %12 : vector<1x1x16xf32> to vector<1x16xf32>
    %14 = vector.broadcast %13 : vector<1x16xf32> to vector<128x16xf32>
    %15 = arith.addf %11, %14 : vector<128x16xf32>
    %16 = arith.mulf %8, %8 : vector<128x16xf32>
    %cst_15 = arith.constant dense<0.000000e+00> : vector<128xf32>
    %17 = vector.multi_reduction <add>, %16, %cst_15 [1] : vector<128x16xf32> to vector<128xf32>
    %18 = vector.shape_cast %17 : vector<128xf32> to vector<128x1xf32>
    %cst_16 = arith.constant 9.99999996E-13 : f32
    %19 = vector.broadcast %cst_16 : f32 to vector<128x1xf32>
    %20 = arith.addf %18, %19 : vector<128x1xf32>
    %21 = math.rsqrt %20 : vector<128x1xf32>
    %c0_17 = arith.constant 0 : index
    %c0_18 = arith.constant 0 : index
    %c0_19 = arith.constant 0 : index
    %c0_20 = arith.constant 0 : index
    %22 = vector.load %arg7[%c0_17, %c0_18, %c0_19, %c0_20] : memref<1x2x128x16xf32, #tpu.memory_space<vmem>>, vector<1x1x128x16xf32>
    %23 = vector.shape_cast %22 : vector<1x1x128x16xf32> to vector<128x16xf32>
    %24 = vector.shape_cast %8 : vector<128x16xf32> to vector<1x1x128x16xf32>
    tpu.vector_store %arg7[%c0_17, %c0_18, %c0_19, %c0_20], %24 {strides = array<i32>} : memref<1x2x128x16xf32, #tpu.memory_space<vmem>>, vector<1x1x128x16xf32>,
    %25 = vector.broadcast %21 : vector<128x1xf32> to vector<128x16xf32>
    %26 = arith.mulf %8, %25 : vector<128x16xf32>
    %c0_21 = arith.constant 0 : index
    %c0_22 = arith.constant 0 : index
    %c0_23 = arith.constant 0 : index
    %c0_24 = arith.constant 0 : index
    %27 = vector.load %arg8[%c0_21, %c0_22, %c0_23, %c0_24] : memref<1x2x128x16xf32, #tpu.memory_space<vmem>>, vector<1x1x128x16xf32>
    %28 = vector.shape_cast %27 : vector<1x1x128x16xf32> to vector<128x16xf32>
    %29 = vector.shape_cast %26 : vector<128x16xf32> to vector<1x1x128x16xf32>
    tpu.vector_store %arg8[%c0_21, %c0_22, %c0_23, %c0_24], %29 {strides = array<i32>} : memref<1x2x128x16xf32, #tpu.memory_space<vmem>>, vector<1x1x128x16xf32>,
    %c0_25 = arith.constant 0 : index
    %c0_26 = arith.constant 0 : index
    %c0_27 = arith.constant 0 : index
    %c0_28 = arith.constant 0 : index
    %30 = vector.load %arg9[%c0_25, %c0_26, %c0_27, %c0_28] : memref<1x2x128x16xf32, #tpu.memory_space<vmem>>, vector<1x1x128x16xf32>
    %31 = vector.shape_cast %30 : vector<1x1x128x16xf32> to vector<128x16xf32>
    %32 = vector.shape_cast %15 : vector<128x16xf32> to vector<1x1x128x16xf32>
    tpu.vector_store %arg9[%c0_25, %c0_26, %c0_27, %c0_28], %32 {strides = array<i32>} : memref<1x2x128x16xf32, #tpu.memory_space<vmem>>, vector<1x1x128x16xf32>,
    %c1 = arith.constant 1 : index
    %c0_29 = arith.constant 0 : index
    %c0_30 = arith.constant 0 : index
    %33 = vector.load %arg3[%c1, %c0_29, %c0_30] : memref<2x32x16xf32, #tpu.memory_space<vmem>>, vector<1x32x16xf32>
    %34 = vector.shape_cast %33 : vector<1x32x16xf32> to vector<32x16xf32>
    %cst_31 = arith.constant dense<0.000000e+00> : vector<128x16xf32>
    %35 = tpu.matmul %1, %34, %cst_31 {dimension_numbers = #tpu.dot_dimension_numbers<[1], [0], [0], [1], [0, 0, 1, 1], [], []>, precision = #tpu.contract_precision<fp32>} : vector<128x32xf32>, vector<32x16xf32>, vector<128x16xf32> -> vector<128x16xf32>
    %c1_32 = arith.constant 1 : index
    %c0_33 = arith.constant 0 : index
    %c0_34 = arith.constant 0 : index
    %36 = vector.load %arg4[%c1_32, %c0_33, %c0_34] : memref<2x1x16xf32, #tpu.memory_space<vmem>>, vector<1x1x16xf32>
    %37 = vector.shape_cast %36 : vector<1x1x16xf32> to vector<1x16xf32>
    %38 = vector.broadcast %37 : vector<1x16xf32> to vector<128x16xf32>
    %39 = arith.addf %35, %38 : vector<128x16xf32>
    %c1_35 = arith.constant 1 : index
    %c0_36 = arith.constant 0 : index
    %c0_37 = arith.constant 0 : index
    %40 = vector.load %arg5[%c1_35, %c0_36, %c0_37] : memref<2x32x16xf32, #tpu.memory_space<vmem>>, vector<1x32x16xf32>
    %41 = vector.shape_cast %40 : vector<1x32x16xf32> to vector<32x16xf32>
    %cst_38 = arith.constant dense<0.000000e+00> : vector<128x16xf32>
    %42 = tpu.matmul %1, %41, %cst_38 {dimension_numbers = #tpu.dot_dimension_numbers<[1], [0], [0], [1], [0, 0, 1, 1], [], []>, precision = #tpu.contract_precision<fp32>} : vector<128x32xf32>, vector<32x16xf32>, vector<128x16xf32> -> vector<128x16xf32>
    %c1_39 = arith.constant 1 : index
    %c0_40 = arith.constant 0 : index
    %c0_41 = arith.constant 0 : index
    %43 = vector.load %arg6[%c1_39, %c0_40, %c0_41] : memref<2x1x16xf32, #tpu.memory_space<vmem>>, vector<1x1x16xf32>
    %44 = vector.shape_cast %43 : vector<1x1x16xf32> to vector<1x16xf32>
    %45 = vector.broadcast %44 : vector<1x16xf32> to vector<128x16xf32>
    %46 = arith.addf %42, %45 : vector<128x16xf32>
    %47 = arith.mulf %39, %39 : vector<128x16xf32>
    %cst_42 = arith.constant dense<0.000000e+00> : vector<128xf32>
    %48 = vector.multi_reduction <add>, %47, %cst_42 [1] : vector<128x16xf32> to vector<128xf32>
    %49 = vector.shape_cast %48 : vector<128xf32> to vector<128x1xf32>
    %cst_43 = arith.constant 9.99999996E-13 : f32
    %50 = vector.broadcast %cst_43 : f32 to vector<128x1xf32>
    %51 = arith.addf %49, %50 : vector<128x1xf32>
    %52 = math.rsqrt %51 : vector<128x1xf32>
    %c0_44 = arith.constant 0 : index
    %c1_45 = arith.constant 1 : index
    %c0_46 = arith.constant 0 : index
    %c0_47 = arith.constant 0 : index
    %53 = vector.load %arg7[%c0_44, %c1_45, %c0_46, %c0_47] : memref<1x2x128x16xf32, #tpu.memory_space<vmem>>, vector<1x1x128x16xf32>
    %54 = vector.shape_cast %53 : vector<1x1x128x16xf32> to vector<128x16xf32>
    %55 = vector.shape_cast %39 : vector<128x16xf32> to vector<1x1x128x16xf32>
    tpu.vector_store %arg7[%c0_44, %c1_45, %c0_46, %c0_47], %55 {strides = array<i32>} : memref<1x2x128x16xf32, #tpu.memory_space<vmem>>, vector<1x1x128x16xf32>,
    %56 = vector.broadcast %52 : vector<128x1xf32> to vector<128x16xf32>
    %57 = arith.mulf %39, %56 : vector<128x16xf32>
    %c0_48 = arith.constant 0 : index
    %c1_49 = arith.constant 1 : index
    %c0_50 = arith.constant 0 : index
    %c0_51 = arith.constant 0 : index
    %58 = vector.load %arg8[%c0_48, %c1_49, %c0_50, %c0_51] : memref<1x2x128x16xf32, #tpu.memory_space<vmem>>, vector<1x1x128x16xf32>
    %59 = vector.shape_cast %58 : vector<1x1x128x16xf32> to vector<128x16xf32>
    %60 = vector.shape_cast %57 : vector<128x16xf32> to vector<1x1x128x16xf32>
    tpu.vector_store %arg8[%c0_48, %c1_49, %c0_50, %c0_51], %60 {strides = array<i32>} : memref<1x2x128x16xf32, #tpu.memory_space<vmem>>, vector<1x1x128x16xf32>,
    %c0_52 = arith.constant 0 : index
    %c1_53 = arith.constant 1 : index
    %c0_54 = arith.constant 0 : index
    %c0_55 = arith.constant 0 : index
    %61 = vector.load %arg9[%c0_52, %c1_53, %c0_54, %c0_55] : memref<1x2x128x16xf32, #tpu.memory_space<vmem>>, vector<1x1x128x16xf32>
    %62 = vector.shape_cast %61 : vector<1x1x128x16xf32> to vector<128x16xf32>
    %63 = vector.shape_cast %46 : vector<128x16xf32> to vector<1x1x128x16xf32>
    tpu.vector_store %arg9[%c0_52, %c1_53, %c0_54, %c0_55], %63 {strides = array<i32>} : memref<1x2x128x16xf32, #tpu.memory_space<vmem>>, vector<1x1x128x16xf32>,
    return
  }
  func.func @transform_0(%arg0: i32, %arg1: i32) -> (i32, i32, i32) {
    %c0_i32 = arith.constant 0 : i32
    %c0_i32_0 = arith.constant 0 : i32
    return %arg0, %arg1, %c0_i32 : i32, i32, i32
  }
  func.func @transform_1(%arg0: i32, %arg1: i32) -> (i32, i32, i32) {
    %c0_i32 = arith.constant 0 : i32
    %c0_i32_0 = arith.constant 0 : i32
    %c0_i32_1 = arith.constant 0 : i32
    %c0_i32_2 = arith.constant 0 : i32
    return %c0_i32, %c0_i32_0, %c0_i32_1 : i32, i32, i32
  }
  func.func @transform_2(%arg0: i32, %arg1: i32) -> (i32, i32, i32) {
    %c0_i32 = arith.constant 0 : i32
    %c0_i32_0 = arith.constant 0 : i32
    %c0_i32_1 = arith.constant 0 : i32
    %c0_i32_2 = arith.constant 0 : i32
    return %c0_i32, %c0_i32_0, %c0_i32_1 : i32, i32, i32
  }
  func.func @transform_3(%arg0: i32, %arg1: i32) -> (i32, i32, i32) {
    %c0_i32 = arith.constant 0 : i32
    %c0_i32_0 = arith.constant 0 : i32
    %c0_i32_1 = arith.constant 0 : i32
    %c0_i32_2 = arith.constant 0 : i32
    return %c0_i32, %c0_i32_0, %c0_i32_1 : i32, i32, i32
  }
  func.func @transform_4(%arg0: i32, %arg1: i32) -> (i32, i32, i32) {
    %c0_i32 = arith.constant 0 : i32
    %c0_i32_0 = arith.constant 0 : i32
    %c0_i32_1 = arith.constant 0 : i32
    %c0_i32_2 = arith.constant 0 : i32
    return %c0_i32, %c0_i32_0, %c0_i32_1 : i32, i32, i32
  }
  func.func @transform_5(%arg0: i32, %arg1: i32) -> (i32, i32, i32, i32) {
    %c0_i32 = arith.constant 0 : i32
    %c0_i32_0 = arith.constant 0 : i32
    %c0_i32_1 = arith.constant 0 : i32
    return %arg0, %c0_i32, %arg1, %c0_i32_0 : i32, i32, i32, i32
  }
  func.func @transform_6(%arg0: i32, %arg1: i32) -> (i32, i32, i32, i32) {
    %c0_i32 = arith.constant 0 : i32
    %c0_i32_0 = arith.constant 0 : i32
    %c0_i32_1 = arith.constant 0 : i32
    return %arg0, %c0_i32, %arg1, %c0_i32_0 : i32, i32, i32, i32
  }
  func.func @transform_7(%arg0: i32, %arg1: i32) -> (i32, i32, i32, i32) {
    %c0_i32 = arith.constant 0 : i32
    %c0_i32_0 = arith.constant 0 : i32
    %c0_i32_1 = arith.constant 0 : i32
    return %arg0, %c0_i32, %arg1, %c0_i32_0 : i32, i32, i32, i32
  }
}

</mosaic_0001>

<llo_original>
// kernel: tpu_custom_call.1
$region0: #{tpu_custom_call.1}
  #allocation0 [shape = 'u32[]', space=smem, size = 0x4, offset = 0x4, fixed_abs, tag = 'smem constant byte address 0x4 - core index']
  #allocation1 [shape = 'u32[72,128]{1,0:T(1,128)}', space=vmem, size = 0x9000, scoped, tag = 'internal scratch']
  %s0 = inlined_call_operand.vmem [shape: f32[2,128,32], index: 0, kind: input, shape index: {}]
  %s1 = inlined_call_operand.vmem [shape: f32[2,32,16], index: 1, kind: input, shape index: {}]
  %s2 = inlined_call_operand.vmem [shape: f32[2,1,16], index: 2, kind: input, shape index: {}]
  %s3 = inlined_call_operand.vmem [shape: f32[2,32,16], index: 3, kind: input, shape index: {}]
  %s4 = inlined_call_operand.vmem [shape: f32[2,1,16], index: 4, kind: input, shape index: {}]
  %s5 = inlined_call_operand.vmem [shape: f32[2,2,128,16], index: 5, kind: output, shape index: {0}]
  %s6 = inlined_call_operand.vmem [shape: f32[2,2,128,16], index: 6, kind: output, shape index: {1}]
  %s7 = inlined_call_operand.vmem [shape: f32[2,2,128,16], index: 7, kind: output, shape index: {2}]
  %8 = xla_tuple %s5, %s6, %s7
  %s9 = sld [smem:[#allocation0]]
  $region69: #{tpu_custom_call.1} parent=0
    _
  %s11 = ssub.s32 1, %s9
  %s12 = scalar_select 0, %s11, %s9
  loop: start=0, step=1, limit=4
  $region2: #{tpu_custom_call.1} parent=0 // loop_pre_header
    _
  $region3: #{tpu_custom_call.1} parent=0 // loop_header
    %s14 = sphi 0, %s18
    %p15 = scmp.ge.s32.totalorder %s14, 4
    %s21 = sphi 0, %s33
    %s22 = sphi 0, %s29
    %s23 = sphi 0, %s21
    %s24 = sphi 0, %s22
    %s25 = sphi 0, %s23
    %s26 = sphi 0, %s24
    %s38 = sphi 0, %s40
    %s41 = sphi 0, %s38
    %s42 = sphi 0, %s41
    %s58 = sphi 0, %s42
    %s62 = sphi 0, %s62
    %s64 = sphi 0, %s62
    %s65 = sphi 0, %s64
    %s79 = sphi 0, %s65
    %s83 = sphi 0, %s83
    %s85 = sphi 0, %s83
    %s86 = sphi 0, %s85
    %s100 = sphi 0, %s86
    %s104 = sphi 0, %s104
    %s106 = sphi 0, %s104
    %s107 = sphi 0, %s106
    %s121 = sphi 0, %s107
    %s125 = sphi 0, %s125
    %s127 = sphi 0, %s125
    %s128 = sphi 0, %s127
    %s142 = sphi 0, %s128
    %s150 = sphi 0, %s152
    %s153 = sphi 0, %s150
    %s154 = sphi 0, %s153
    %s170 = sphi 0, %s154
    %s178 = sphi 0, %s180
    %s181 = sphi 0, %s178
    %s182 = sphi 0, %s181
    %s198 = sphi 0, %s182
    %s206 = sphi 0, %s208
    %s209 = sphi 0, %s206
    %s210 = sphi 0, %s209
    %s226 = sphi 0, %s210
  $region4: #{tpu_custom_call.1} parent=0 // loop_header_branch
    %17 = sbr.rel (%p15) target = $region8
  $region5: #{tpu_custom_call.1} parent=0 // loop_body
    %s19 = ssub.s32 %s14, 1
    %s20 = ssub.s32 %s14, 2
    %s27 = sadd.s32 1, %s22
    %p28 = scmp.ge.s32.totalorder %s27, 1
    %s29 = scalar_select %p28, 0, %s27
    %s30 = sadd.s32 1, %s21
    %s31 = scalar_select %p28, %s30, %s21
    %p32 = scmp.ge.s32.totalorder %s31, 2
    %s33 = scalar_select %p32, 0, %s31
    %s34 = ssub.s32 %s21, %s33
    %s35 = ssub.s32 %s22, %s29
    %s36 = sor.u32 %s34, %s35
    %p37 = scmp.eq.s32.totalorder %s36, 0
    %s39 = sadd.s32 %s38, 1
    %s40 = scalar_select %p37, %s38, %s39
    %p43 = pneg %p37
    %p44 = scmp.eq.s32.totalorder %s14, 1
    %p45 = por %p43, %p44
    %p46 = scmp.ne.s32.totalorder %s38, %s41
    %p47 = scmp.eq.s32.totalorder %s14, 0
    %p48 = por %p46, %p47
    %p49 = scmp.ne.s32.totalorder %s38, %s41
    %p50 = scmp.eq.s32.totalorder %s19, 1
    %p51 = por %p49, %p50
    %p52 = scmp.ne.s32.totalorder %s41, %s42
    %p53 = scmp.eq.s32.totalorder %s19, 0
    %p54 = por %p52, %p53
    %p55 = scmp.ne.s32.totalorder %s41, %s42
    %p56 = scmp.eq.s32.totalorder %s20, 1
    %p57 = por %p55, %p56
    %p59 = scmp.ne.s32.totalorder %s42, %s58
    %p60 = scmp.eq.s32.totalorder %s20, 0
    %p61 = por %p59, %p60
    %s63 = sadd.s32 %s62, 1
    %p66 = scmp.eq.s32.totalorder %s14, 1
    %p67 = scmp.ne.s32.totalorder %s62, %s64
    %p68 = scmp.eq.s32.totalorder %s14, 0
    %p69 = por %p67, %p68
    %p70 = scmp.ne.s32.totalorder %s62, %s64
    %p71 = scmp.eq.s32.totalorder %s19, 1
    %p72 = por %p70, %p71
    %p73 = scmp.ne.s32.totalorder %s64, %s65
    %p74 = scmp.eq.s32.totalorder %s19, 0
    %p75 = por %p73, %p74
    %p76 = scmp.ne.s32.totalorder %s64, %s65
    %p77 = scmp.eq.s32.totalorder %s20, 1
    %p78 = por %p76, %p77
    %p80 = scmp.ne.s32.totalorder %s65, %s79
    %p81 = scmp.eq.s32.totalorder %s20, 0
    %p82 = por %p80, %p81
    %s84 = sadd.s32 %s83, 1
    %p87 = scmp.eq.s32.totalorder %s14, 1
    %p88 = scmp.ne.s32.totalorder %s83, %s85
    %p89 = scmp.eq.s32.totalorder %s14, 0
    %p90 = por %p88, %p89
    %p91 = scmp.ne.s32.totalorder %s83, %s85
    %p92 = scmp.eq.s32.totalorder %s19, 1
    %p93 = por %p91, %p92
    %p94 = scmp.ne.s32.totalorder %s85, %s86
    %p95 = scmp.eq.s32.totalorder %s19, 0
    %p96 = por %p94, %p95
    %p97 = scmp.ne.s32.totalorder %s85, %s86
    %p98 = scmp.eq.s32.totalorder %s20, 1
    %p99 = por %p97, %p98
    %p101 = scmp.ne.s32.totalorder %s86, %s100
    %p102 = scmp.eq.s32.totalorder %s20, 0
    %p103 = por %p101, %p102
    %s105 = sadd.s32 %s104, 1
    %p108 = scmp.eq.s32.totalorder %s14, 1
    %p109 = scmp.ne.s32.totalorder %s104, %s106
    %p110 = scmp.eq.s32.totalorder %s14, 0
    %p111 = por %p109, %p110
    %p112 = scmp.ne.s32.totalorder %s104, %s106
    %p113 = scmp.eq.s32.totalorder %s19, 1
    %p114 = por %p112, %p113
    %p115 = scmp.ne.s32.totalorder %s106, %s107
    %p116 = scmp.eq.s32.totalorder %s19, 0
    %p117 = por %p115, %p116
    %p118 = scmp.ne.s32.totalorder %s106, %s107
    %p119 = scmp.eq.s32.totalorder %s20, 1
    %p120 = por %p118, %p119
    %p122 = scmp.ne.s32.totalorder %s107, %s121
    %p123 = scmp.eq.s32.totalorder %s20, 0
    %p124 = por %p122, %p123
    %s126 = sadd.s32 %s125, 1
    %p129 = scmp.eq.s32.totalorder %s14, 1
    %p130 = scmp.ne.s32.totalorder %s125, %s127
    %p131 = scmp.eq.s32.totalorder %s14, 0
    %p132 = por %p130, %p131
    %p133 = scmp.ne.s32.totalorder %s125, %s127
    %p134 = scmp.eq.s32.totalorder %s19, 1
    %p135 = por %p133, %p134
    %p136 = scmp.ne.s32.totalorder %s127, %s128
    %p137 = scmp.eq.s32.totalorder %s19, 0
    %p138 = por %p136, %p137
    %p139 = scmp.ne.s32.totalorder %s127, %s128
    %p140 = scmp.eq.s32.totalorder %s20, 1
    %p141 = por %p139, %p140
    %p143 = scmp.ne.s32.totalorder %s128, %s142
    %p144 = scmp.eq.s32.totalorder %s20, 0
    %p145 = por %p143, %p144
    %s146 = ssub.s32 %s21, %s33
    %s147 = ssub.s32 %s22, %s29
    %s148 = sor.u32 %s146, %s147
    %p149 = scmp.eq.s32.totalorder %s148, 0
    %s151 = sadd.s32 %s150, 1
    %s152 = scalar_select %p149, %s150, %s151
    %p155 = pneg %p149
    %p156 = scmp.eq.s32.totalorder %s14, 1
    %p157 = por %p155, %p156
    %p158 = scmp.ne.s32.totalorder %s150, %s153
    %p159 = scmp.eq.s32.totalorder %s14, 0
    %p160 = por %p158, %p159
    %p161 = scmp.ne.s32.totalorder %s150, %s153
    %p162 = scmp.eq.s32.totalorder %s19, 1
    %p163 = por %p161, %p162
    %p164 = scmp.ne.s32.totalorder %s153, %s154
    %p165 = scmp.eq.s32.totalorder %s19, 0
    %p166 = por %p164, %p165
    %p167 = scmp.ne.s32.totalorder %s153, %s154
    %p168 = scmp.eq.s32.totalorder %s20, 1
    %p169 = por %p167, %p168
    %p171 = scmp.ne.s32.totalorder %s154, %s170
    %p172 = scmp.eq.s32.totalorder %s20, 0
    %p173 = por %p171, %p172
    %s174 = ssub.s32 %s21, %s33
    %s175 = ssub.s32 %s22, %s29
    %s176 = sor.u32 %s174, %s175
    %p177 = scmp.eq.s32.totalorder %s176, 0
    %s179 = sadd.s32 %s178, 1
    %s180 = scalar_select %p177, %s178, %s179
    %p183 = pneg %p177
    %p184 = scmp.eq.s32.totalorder %s14, 1
    %p185 = por %p183, %p184
    %p186 = scmp.ne.s32.totalorder %s178, %s181
    %p187 = scmp.eq.s32.totalorder %s14, 0
    %p188 = por %p186, %p187
    %p189 = scmp.ne.s32.totalorder %s178, %s181
    %p190 = scmp.eq.s32.totalorder %s19, 1
    %p191 = por %p189, %p190
    %p192 = scmp.ne.s32.totalorder %s181, %s182
    %p193 = scmp.eq.s32.totalorder %s19, 0
    %p194 = por %p192, %p193
    %p195 = scmp.ne.s32.totalorder %s181, %s182
    %p196 = scmp.eq.s32.totalorder %s20, 1
    %p197 = por %p195, %p196
    %p199 = scmp.ne.s32.totalorder %s182, %s198
    %p200 = scmp.eq.s32.totalorder %s20, 0
    %p201 = por %p199, %p200
    %s202 = ssub.s32 %s21, %s33
    %s203 = ssub.s32 %s22, %s29
    %s204 = sor.u32 %s202, %s203
    %p205 = scmp.eq.s32.totalorder %s204, 0
    %s207 = sadd.s32 %s206, 1
    %s208 = scalar_select %p205, %s206, %s207
    %p211 = pneg %p205
    %p212 = scmp.eq.s32.totalorder %s14, 1
    %p213 = por %p211, %p212
    %p214 = scmp.ne.s32.totalorder %s206, %s209
    %p215 = scmp.eq.s32.totalorder %s14, 0
    %p216 = por %p214, %p215
    %p217 = scmp.ne.s32.totalorder %s206, %s209
    %p218 = scmp.eq.s32.totalorder %s19, 1
    %p219 = por %p217, %p218
    %p220 = scmp.ne.s32.totalorder %s209, %s210
    %p221 = scmp.eq.s32.totalorder %s19, 0
    %p222 = por %p220, %p221
    %p223 = scmp.ne.s32.totalorder %s209, %s210
    %p224 = scmp.eq.s32.totalorder %s20, 1
    %p225 = por %p223, %p224
    %p227 = scmp.ne.s32.totalorder %s210, %s226
    %p228 = scmp.eq.s32.totalorder %s20, 0
    %p229 = por %p227, %p228
    %p230 = scmp.le.s32.totalorder 1, %s14
    %p231 = scmp.lt.s32.totalorder %s14, 3
    %p232 = pnand %p230, %p231
    %p233 = pneg %p232
    // Predicated region
    $region9: #{tpu_custom_call.1} parent=5 // pred_check
      _
    $region10: #{tpu_custom_call.1} parent=5 // pred_check_branch
      %235 = sbr.rel (%p232) target = $region12
    $region11: #{tpu_custom_call.1} parent=5 // pred_region
      %s236 = ssub.s32 %s14, 1
      // Predicated region
      $region13: #{tpu_custom_call.1} parent=11 // pred_check
        %p237 = pneg %p75
      $region14: #{tpu_custom_call.1} parent=11 // pred_check_branch
        %239 = sbr.rel (%p237) target = $region16
      $region15: #{tpu_custom_call.1} parent=11 // pred_region
        _
      $region16: #{tpu_custom_call.1} parent=11 // pred_fallthru
        _
      // Predicated region
      $region17: #{tpu_custom_call.1} parent=11 // pred_check
        %p240 = pneg %p96
      $region18: #{tpu_custom_call.1} parent=11 // pred_check_branch
        %242 = sbr.rel (%p240) target = $region20
      $region19: #{tpu_custom_call.1} parent=11 // pred_region
        _
      $region20: #{tpu_custom_call.1} parent=11 // pred_fallthru
        _
      // Predicated region
      $region21: #{tpu_custom_call.1} parent=11 // pred_check
        %p243 = pneg %p117
      $region22: #{tpu_custom_call.1} parent=11 // pred_check_branch
        %245 = sbr.rel (%p243) target = $region24
      $region23: #{tpu_custom_call.1} parent=11 // pred_region
        _
      $region24: #{tpu_custom_call.1} parent=11 // pred_fallthru
        _
      // Predicated region
      $region25: #{tpu_custom_call.1} parent=11 // pred_check
        %p246 = pneg %p138
      $region26: #{tpu_custom_call.1} parent=11 // pred_check_branch
        %248 = sbr.rel (%p246) target = $region28
      $region27: #{tpu_custom_call.1} parent=11 // pred_region
        _
      $region28: #{tpu_custom_call.1} parent=11 // pred_fallthru
        _
    $region12: #{tpu_custom_call.1} parent=5 // pred_fallthru
      _
    %p249 = scmp.lt.s32.totalorder %s14, 2
    // Predicated region
    $region29: #{tpu_custom_call.1} parent=5 // pred_check
      %p250 = pneg %p249
    $region30: #{tpu_custom_call.1} parent=5 // pred_check_branch
      %252 = sbr.rel (%p250) target = $region32
    $region31: #{tpu_custom_call.1} parent=5 // pred_region
      // Predicated region
      $region33: #{tpu_custom_call.1} parent=31 // pred_check
        %p253 = pneg %p48
      $region34: #{tpu_custom_call.1} parent=31 // pred_check_branch
        %255 = sbr.rel (%p253) target = $region36
      $region35: #{tpu_custom_call.1} parent=31 // pred_region
        %s256 = smul.u32 16, %s22
        %p257 = scmp.lt.s32.totalorder %s21, 1
        %s258 = scalar_select %p257, %s21, 1
        %p259 = scmp.lt.s32.totalorder %s256, 15
        %s260 = scalar_select %p259, %s256, 15
        %s261 = smul.addr %s258, 16
        %s262 = sadd.s32 %s260, %s261
        %s263 = smul.addr %s262, 8
        %s264 = scalar_lea.vmem %s0, %s263
        %s265 = smul.u32 16, %s22
      $region36: #{tpu_custom_call.1} parent=31 // pred_fallthru
        _
    $region32: #{tpu_custom_call.1} parent=5 // pred_fallthru
      _
    %p266 = scmp.le.s32.totalorder 1, %s14
    %p267 = scmp.lt.s32.totalorder %s14, 3
    %p268 = pnand %p266, %p267
    %p269 = pneg %p268
    // Predicated region
    $region37: #{tpu_custom_call.1} parent=5 // pred_check
      _
    $region38: #{tpu_custom_call.1} parent=5 // pred_check_branch
      %271 = sbr.rel (%p268) target = $region40
    $region39: #{tpu_custom_call.1} parent=5 // pred_region
      %s272 = ssub.s32 %s14, 1
      %s273 = smul.u32 16, %s24
      %p274 = scmp.lt.s32.totalorder %s23, 1
      %s275 = scalar_select %p274, %s23, 1
      %p276 = scmp.lt.s32.totalorder %s273, 15
      %s277 = scalar_select %p276, %s273, 15
      %s278 = smul.addr %s275, 16
      %s279 = sadd.s32 %s277, %s278
      %s280 = smul.addr %s279, 8
      %s281 = scalar_lea.vmem %s0, %s280
      %p282 = pneg %p54
      %p283 = pneg %p51
      %p284 = pneg %p75
      %p285 = pneg %p72
      %p286 = pneg %p96
      %p287 = pneg %p93
      %p288 = pneg %p117
      %p289 = pneg %p114
      %p290 = pneg %p138
      %p291 = pneg %p135
      %p292 = pneg %p166
      %p293 = pneg %p163
      %s294 = smul.u32 16, %s24
      %p295 = scmp.lt.s32.totalorder %s23, 1
      %s296 = scalar_select %p295, %s23, 1
      %p297 = scmp.lt.s32.totalorder %s294, 15
      %s298 = scalar_select %p297, %s294, 15
      %s299 = smul.addr %s296, 32
      %s300 = sadd.s32 %s298, %s299
      %s301 = smul.addr %s300, 8
      %s302 = scalar_lea.vmem %s5, %s301
      %p303 = pneg %p194
      %p304 = pneg %p191
      %s305 = smul.u32 16, %s24
      %p306 = scmp.lt.s32.totalorder %s23, 1
      %s307 = scalar_select %p306, %s23, 1
      %p308 = scmp.lt.s32.totalorder %s305, 15
      %s309 = scalar_select %p308, %s305, 15
      %s310 = smul.addr %s307, 32
      %s311 = sadd.s32 %s309, %s310
      %s312 = smul.addr %s311, 8
      %s313 = scalar_lea.vmem %s6, %s312
      %p314 = pneg %p222
      %p315 = pneg %p219
      %s316 = smul.u32 16, %s24
      %p317 = scmp.lt.s32.totalorder %s23, 1
      %s318 = scalar_select %p317, %s23, 1
      %p319 = scmp.lt.s32.totalorder %s316, 15
      %s320 = scalar_select %p319, %s316, 15
      %s321 = smul.addr %s318, 32
      %s322 = sadd.s32 %s320, %s321
      %s323 = smul.addr %s322, 8
      %s324 = scalar_lea.vmem %s7, %s323
      %s325 = smul.u32 16, %s24
      %p326 = scmp.lt.s32.totalorder %s23, 1
      %s327 = scalar_select %p326, %s23, 1
      %p328 = scmp.lt.s32.totalorder %s325, 15
      %s329 = scalar_select %p328, %s325, 15
      %s330 = smul.addr %s327, 16
      %s331 = sadd.s32 %s329, %s330
      %s332 = smul.addr %s331, 8
      %s333 = scalar_lea.vmem %s0, %s332
      %s334 = smul.u32 16, %s24
      %s335 = smul.u32 16, %s24
      %p336 = scmp.lt.s32.totalorder %s23, 1
      %s337 = scalar_select %p336, %s23, 1
      %p338 = scmp.lt.s32.totalorder %s335, 15
      %s339 = scalar_select %p338, %s335, 15
      %s340 = smul.addr %s337, 32
      %s341 = sadd.s32 %s339, %s340
      %s342 = smul.addr %s341, 8
      %s343 = scalar_lea.vmem %s5, %s342
      %s344 = smul.u32 16, %s24
      %s345 = smul.u32 16, %s24
      %p346 = scmp.lt.s32.totalorder %s23, 1
      %s347 = scalar_select %p346, %s23, 1
      %p348 = scmp.lt.s32.totalorder %s345, 15
      %s349 = scalar_select %p348, %s345, 15
      %s350 = smul.addr %s347, 32
      %s351 = sadd.s32 %s349, %s350
      %s352 = smul.addr %s351, 8
      %s353 = scalar_lea.vmem %s6, %s352
      %s354 = smul.u32 16, %s24
      %s355 = smul.u32 16, %s24
      %p356 = scmp.lt.s32.totalorder %s23, 1
      %s357 = scalar_select %p356, %s23, 1
      %p358 = scmp.lt.s32.totalorder %s355, 15
      %s359 = scalar_select %p358, %s355, 15
      %s360 = smul.addr %s357, 32
      %s361 = sadd.s32 %s359, %s360
      %s362 = smul.addr %s361, 8
      %s363 = scalar_lea.vmem %s7, %s362
      %s364 = smul.u32 16, %s24
      %v365 = vld [vmem:[%s333] sm:$0xff]
      %v366 = vld [vmem:[%s333 + $0x8] sm:$0xff]
      %v367 = vld [vmem:[%s333 + $0x10] sm:$0xff]
      %v368 = vld [vmem:[%s333 + $0x18] sm:$0xff]
      %v369 = vld [vmem:[%s333 + $0x20] sm:$0xff]
      %v370 = vld [vmem:[%s333 + $0x28] sm:$0xff]
      %v371 = vld [vmem:[%s333 + $0x30] sm:$0xff]
      %v372 = vld [vmem:[%s333 + $0x38] sm:$0xff]
      %v373 = vld [vmem:[%s333 + $0x40] sm:$0xff]
      %v374 = vld [vmem:[%s333 + $0x48] sm:$0xff]
      %v375 = vld [vmem:[%s333 + $0x50] sm:$0xff]
      %v376 = vld [vmem:[%s333 + $0x58] sm:$0xff]
      %v377 = vld [vmem:[%s333 + $0x60] sm:$0xff]
      %v378 = vld [vmem:[%s333 + $0x68] sm:$0xff]
      %v379 = vld [vmem:[%s333 + $0x70] sm:$0xff]
      %v380 = vld [vmem:[%s333 + $0x78] sm:$0xff]
      %v381 = vld [vmem:[%s1] sm:$0xff]
      %v382 = vld [vmem:[%s1 + $0x8] sm:$0xff]
      %v383 = vld [vmem:[%s1 + $0x10] sm:$0xff]
      %v384 = vld [vmem:[%s1 + $0x18] sm:$0xff]
      %v385 = vld [vmem:[%s2] sm:$0x1]
      %v387 = vperm.slane %v385, 0
      %vm389 = vcmask 261120
      %v391 = vsel %vm389, %v365, 0
      %v394 = vsel %vm389, %v366, 0
      %v397 = vsel %vm389, %v367, 0
      %v400 = vsel %vm389, %v368, 0
      %v403 = vsel %vm389, %v369, 0
      %v406 = vsel %vm389, %v370, 0
      %v409 = vsel %vm389, %v371, 0
      %v412 = vsel %vm389, %v372, 0
      %v415 = vsel %vm389, %v373, 0
      %v418 = vsel %vm389, %v374, 0
      %v421 = vsel %vm389, %v375, 0
      %v424 = vsel %vm389, %v376, 0
      %v427 = vsel %vm389, %v377, 0
      %v430 = vsel %vm389, %v378, 0
      %v433 = vsel %vm389, %v379, 0
      %v436 = vsel %vm389, %v380, 0
      %438 = vmatpush.msra.mxu0 0.0
      %439 = vmatpush.msra.mxu0 0.0
      %440 = vmatpush.msra.mxu0 0.0
      %441 = vmatpush.msra.mxu0 0.0
      %442 = vmatpush.msra.mxu0 0.0
      %443 = vmatpush.msra.mxu0 0.0
      %444 = vmatpush.msra.mxu0 0.0
      %445 = vmatpush.msra.mxu0 0.0
      %446 = vmatpush.msra.mxu0 0.0
      %447 = vmatpush.msra.mxu0 0.0
      %448 = vmatpush.msra.mxu0 0.0
      %449 = vmatpush.msra.mxu0 0.0
      %v450 = vand.u32 %v384, 4294901760
      %451 = vmatpush.msra.mxu0 %v450
      %v452 = vand.u32 %v383, 4294901760
      %453 = vmatpush.msra.mxu0 %v452
      %v454 = vand.u32 %v382, 4294901760
      %455 = vmatpush.msra.mxu0 %v454
      %v456 = vand.u32 %v381, 4294901760
      %457 = vmatpush.msra.mxu0 %v456
      %v458 = vand.u32 %v391, 4294901760
      %v459 = vsub.f32 %v391, %v458
      %v460 = vand.u32 %v459, 4294901760
      %v461 = vsub.f32 %v459, %v460
      %v462 = vand.u32 %v461, 4294901760
      %463 = vmatmul.f32.gmra.mxu0 %v462
      %v464 = vpop.f32.mrf.mxu0
      %v465 = vadd.f32 %v387, %v464
      %v466 = vand.u32 %v394, 4294901760
      %v467 = vsub.f32 %v394, %v466
      %v468 = vand.u32 %v467, 4294901760
      %v469 = vsub.f32 %v467, %v468
      %v470 = vand.u32 %v469, 4294901760
      %471 = vmatmul.f32.gmra.mxu0 %v470
      %v472 = vpop.f32.mrf.mxu0
      %v473 = vadd.f32 %v387, %v472
      %v474 = vand.u32 %v397, 4294901760
      %v475 = vsub.f32 %v397, %v474
      %v476 = vand.u32 %v475, 4294901760
      %v477 = vsub.f32 %v475, %v476
      %v478 = vand.u32 %v477, 4294901760
      %479 = vmatmul.f32.gmra.mxu0 %v478
      %v480 = vpop.f32.mrf.mxu0
      %v481 = vadd.f32 %v387, %v480
      %v482 = vand.u32 %v400, 4294901760
      %v483 = vsub.f32 %v400, %v482
      %v484 = vand.u32 %v483, 4294901760
      %v485 = vsub.f32 %v483, %v484
      %v486 = vand.u32 %v485, 4294901760
      %487 = vmatmul.f32.gmra.mxu0 %v486
      %v488 = vpop.f32.mrf.mxu0
      %v489 = vadd.f32 %v387, %v488
      %v490 = vand.u32 %v403, 4294901760
      %v491 = vsub.f32 %v403, %v490
      %v492 = vand.u32 %v491, 4294901760
      %v493 = vsub.f32 %v491, %v492
      %v494 = vand.u32 %v493, 4294901760
      %495 = vmatmul.f32.gmra.mxu0 %v494
      %v496 = vpop.f32.mrf.mxu0
      %v497 = vadd.f32 %v387, %v496
      %v498 = vand.u32 %v406, 4294901760
      %v499 = vsub.f32 %v406, %v498
      %v500 = vand.u32 %v499, 4294901760
      %v501 = vsub.f32 %v499, %v500
      %v502 = vand.u32 %v501, 4294901760
      %503 = vmatmul.f32.gmra.mxu0 %v502
      %v504 = vpop.f32.mrf.mxu0
      %v505 = vadd.f32 %v387, %v504
      %v506 = vand.u32 %v409, 4294901760
      %v507 = vsub.f32 %v409, %v506
      %v508 = vand.u32 %v507, 4294901760
      %v509 = vsub.f32 %v507, %v508
      %v510 = vand.u32 %v509, 4294901760
      %511 = vmatmul.f32.gmra.mxu0 %v510
      %v512 = vpop.f32.mrf.mxu0
      %v513 = vadd.f32 %v387, %v512
      %v514 = vand.u32 %v412, 4294901760
      %v515 = vsub.f32 %v412, %v514
      %v516 = vand.u32 %v515, 4294901760
      %v517 = vsub.f32 %v515, %v516
      %v518 = vand.u32 %v517, 4294901760
      %519 = vmatmul.f32.gmra.mxu0 %v518
      %v520 = vpop.f32.mrf.mxu0
      %v521 = vadd.f32 %v387, %v520
      %v522 = vand.u32 %v415, 4294901760
      %v523 = vsub.f32 %v415, %v522
      %v524 = vand.u32 %v523, 4294901760
      %v525 = vsub.f32 %v523, %v524
      %v526 = vand.u32 %v525, 4294901760
      %527 = vmatmul.f32.gmra.mxu0 %v526
      %v528 = vpop.f32.mrf.mxu0
      %v529 = vadd.f32 %v387, %v528
      %v530 = vand.u32 %v418, 4294901760
      %v531 = vsub.f32 %v418, %v530
      %v532 = vand.u32 %v531, 4294901760
      %v533 = vsub.f32 %v531, %v532
      %v534 = vand.u32 %v533, 4294901760
      %535 = vmatmul.f32.gmra.mxu0 %v534
      %v536 = vpop.f32.mrf.mxu0
      %v537 = vadd.f32 %v387, %v536
      %v538 = vand.u32 %v421, 4294901760
      %v539 = vsub.f32 %v421, %v538
      %v540 = vand.u32 %v539, 4294901760
      %v541 = vsub.f32 %v539, %v540
      %v542 = vand.u32 %v541, 4294901760
      %543 = vmatmul.f32.gmra.mxu0 %v542
      %v544 = vpop.f32.mrf.mxu0
      %v545 = vadd.f32 %v387, %v544
      %v546 = vand.u32 %v424, 4294901760
      %v547 = vsub.f32 %v424, %v546
      %v548 = vand.u32 %v547, 4294901760
      %v549 = vsub.f32 %v547, %v548
      %v550 = vand.u32 %v549, 4294901760
      %551 = vmatmul.f32.gmra.mxu0 %v550
      %v552 = vpop.f32.mrf.mxu0
      %v553 = vadd.f32 %v387, %v552
      %v554 = vand.u32 %v427, 4294901760
      %v555 = vsub.f32 %v427, %v554
      %v556 = vand.u32 %v555, 4294901760
      %v557 = vsub.f32 %v555, %v556
      %v558 = vand.u32 %v557, 4294901760
      %559 = vmatmul.f32.gmra.mxu0 %v558
      %v560 = vpop.f32.mrf.mxu0
      %v561 = vadd.f32 %v387, %v560
      %v562 = vand.u32 %v430, 4294901760
      %v563 = vsub.f32 %v430, %v562
      %v564 = vand.u32 %v563, 4294901760
      %v565 = vsub.f32 %v563, %v564
      %v566 = vand.u32 %v565, 4294901760
      %567 = vmatmul.f32.gmra.mxu0 %v566
      %v568 = vpop.f32.mrf.mxu0
      %v569 = vadd.f32 %v387, %v568
      %v570 = vand.u32 %v433, 4294901760
      %v571 = vsub.f32 %v433, %v570
      %v572 = vand.u32 %v571, 4294901760
      %v573 = vsub.f32 %v571, %v572
      %v574 = vand.u32 %v573, 4294901760
      %575 = vmatmul.f32.gmra.mxu0 %v574
      %v576 = vpop.f32.mrf.mxu0
      %v577 = vadd.f32 %v387, %v576
      %v578 = vand.u32 %v436, 4294901760
      %v579 = vsub.f32 %v436, %v578
      %v580 = vand.u32 %v579, 4294901760
      %v581 = vsub.f32 %v579, %v580
      %v582 = vand.u32 %v581, 4294901760
      %583 = vmatmul.f32.gmra.mxu0 %v582
      %v584 = vpop.f32.mrf.mxu0
      %v585 = vadd.f32 %v387, %v584
      %586 = vdwg.mxu0
      %587 = vmatpush.msra.mxu0 0.0
      %588 = vmatpush.msra.mxu0 0.0
      %589 = vmatpush.msra.mxu0 0.0
      %590 = vmatpush.msra.mxu0 0.0
      %591 = vmatpush.msra.mxu0 0.0
      %592 = vmatpush.msra.mxu0 0.0
      %593 = vmatpush.msra.mxu0 0.0
      %594 = vmatpush.msra.mxu0 0.0
      %595 = vmatpush.msra.mxu0 0.0
      %596 = vmatpush.msra.mxu0 0.0
      %597 = vmatpush.msra.mxu0 0.0
      %598 = vmatpush.msra.mxu0 0.0
      %v599 = vand.u32 %v384, 4294901760
      %v600 = vsub.f32 %v384, %v599
      %v601 = vand.u32 %v600, 4294901760
      %v602 = vsub.f32 %v600, %v601
      %v603 = vand.u32 %v602, 4294901760
      %604 = vmatpush.msra.mxu0 %v603
      %v605 = vand.u32 %v383, 4294901760
      %v606 = vsub.f32 %v383, %v605
      %v607 = vand.u32 %v606, 4294901760
      %v608 = vsub.f32 %v606, %v607
      %v609 = vand.u32 %v608, 4294901760
      %610 = vmatpush.msra.mxu0 %v609
      %v611 = vand.u32 %v382, 4294901760
      %v612 = vsub.f32 %v382, %v611
      %v613 = vand.u32 %v612, 4294901760
      %v614 = vsub.f32 %v612, %v613
      %v615 = vand.u32 %v614, 4294901760
      %616 = vmatpush.msra.mxu0 %v615
      %v617 = vand.u32 %v381, 4294901760
      %v618 = vsub.f32 %v381, %v617
      %v619 = vand.u32 %v618, 4294901760
      %v620 = vsub.f32 %v618, %v619
      %v621 = vand.u32 %v620, 4294901760
      %622 = vmatpush.msra.mxu0 %v621
      %v623 = vand.u32 %v391, 4294901760
      %624 = vmatmul.f32.gmra.mxu0 %v623
      %v625 = vpop.f32.mrf.mxu0
      %v626 = vadd.f32 %v465, %v625
      %v627 = vand.u32 %v394, 4294901760
      %628 = vmatmul.f32.gmra.mxu0 %v627
      %v629 = vpop.f32.mrf.mxu0
      %v630 = vadd.f32 %v473, %v629
      %v631 = vand.u32 %v397, 4294901760
      %632 = vmatmul.f32.gmra.mxu0 %v631
      %v633 = vpop.f32.mrf.mxu0
      %v634 = vadd.f32 %v481, %v633
      %v635 = vand.u32 %v400, 4294901760
      %636 = vmatmul.f32.gmra.mxu0 %v635
      %v637 = vpop.f32.mrf.mxu0
      %v638 = vadd.f32 %v489, %v637
      %v639 = vand.u32 %v403, 4294901760
      %640 = vmatmul.f32.gmra.mxu0 %v639
      %v641 = vpop.f32.mrf.mxu0
      %v642 = vadd.f32 %v497, %v641
      %v643 = vand.u32 %v406, 4294901760
      %644 = vmatmul.f32.gmra.mxu0 %v643
      %v645 = vpop.f32.mrf.mxu0
      %v646 = vadd.f32 %v505, %v645
      %v647 = vand.u32 %v409, 4294901760
      %648 = vmatmul.f32.gmra.mxu0 %v647
      %v649 = vpop.f32.mrf.mxu0
      %v650 = vadd.f32 %v513, %v649
      %v651 = vand.u32 %v412, 4294901760
      %652 = vmatmul.f32.gmra.mxu0 %v651
      %v653 = vpop.f32.mrf.mxu0
      %v654 = vadd.f32 %v521, %v653
      %v655 = vand.u32 %v415, 4294901760
      %656 = vmatmul.f32.gmra.mxu0 %v655
      %v657 = vpop.f32.mrf.mxu0
      %v658 = vadd.f32 %v529, %v657
      %v659 = vand.u32 %v418, 4294901760
      %660 = vmatmul.f32.gmra.mxu0 %v659
      %v661 = vpop.f32.mrf.mxu0
      %v662 = vadd.f32 %v537, %v661
      %v663 = vand.u32 %v421, 4294901760
      %664 = vmatmul.f32.gmra.mxu0 %v663
      %v665 = vpop.f32.mrf.mxu0
      %v666 = vadd.f32 %v545, %v665
      %v667 = vand.u32 %v424, 4294901760
      %668 = vmatmul.f32.gmra.mxu0 %v667
      %v669 = vpop.f32.mrf.mxu0
      %v670 = vadd.f32 %v553, %v669
      %v671 = vand.u32 %v427, 4294901760
      %672 = vmatmul.f32.gmra.mxu0 %v671
      %v673 = vpop.f32.mrf.mxu0
      %v674 = vadd.f32 %v561, %v673
      %v675 = vand.u32 %v430, 4294901760
      %676 = vmatmul.f32.gmra.mxu0 %v675
      %v677 = vpop.f32.mrf.mxu0
      %v678 = vadd.f32 %v569, %v677
      %v679 = vand.u32 %v433, 4294901760
      %680 = vmatmul.f32.gmra.mxu0 %v679
      %v681 = vpop.f32.mrf.mxu0
      %v682 = vadd.f32 %v577, %v681
      %v683 = vand.u32 %v436, 4294901760
      %684 = vmatmul.f32.gmra.mxu0 %v683
      %v685 = vpop.f32.mrf.mxu0
      %v686 = vadd.f32 %v585, %v685
      %687 = vdwg.mxu0
      %688 = vmatpush.msra.mxu0 0.0
      %689 = vmatpush.msra.mxu0 0.0
      %690 = vmatpush.msra.mxu0 0.0
      %691 = vmatpush.msra.mxu0 0.0
      %692 = vmatpush.msra.mxu0 0.0
      %693 = vmatpush.msra.mxu0 0.0
      %694 = vmatpush.msra.mxu0 0.0
      %695 = vmatpush.msra.mxu0 0.0
      %696 = vmatpush.msra.mxu0 0.0
      %697 = vmatpush.msra.mxu0 0.0
      %698 = vmatpush.msra.mxu0 0.0
      %699 = vmatpush.msra.mxu0 0.0
      %v700 = vand.u32 %v384, 4294901760
      %v701 = vsub.f32 %v384, %v700
      %702 = vmatpush.msra.mxu0 %v701
      %v703 = vand.u32 %v383, 4294901760
      %v704 = vsub.f32 %v383, %v703
      %705 = vmatpush.msra.mxu0 %v704
      %v706 = vand.u32 %v382, 4294901760
      %v707 = vsub.f32 %v382, %v706
      %708 = vmatpush.msra.mxu0 %v707
      %v709 = vand.u32 %v381, 4294901760
      %v710 = vsub.f32 %v381, %v709
      %711 = vmatpush.msra.mxu0 %v710
      %v712 = vand.u32 %v391, 4294901760
      %v713 = vsub.f32 %v391, %v712
      %714 = vmatmul.f32.gmra.mxu0 %v713
      %v715 = vpop.f32.mrf.mxu0
      %v716 = vadd.f32 %v626, %v715
      %v717 = vand.u32 %v394, 4294901760
      %v718 = vsub.f32 %v394, %v717
      %719 = vmatmul.f32.gmra.mxu0 %v718
      %v720 = vpop.f32.mrf.mxu0
      %v721 = vadd.f32 %v630, %v720
      %v722 = vand.u32 %v397, 4294901760
      %v723 = vsub.f32 %v397, %v722
      %724 = vmatmul.f32.gmra.mxu0 %v723
      %v725 = vpop.f32.mrf.mxu0
      %v726 = vadd.f32 %v634, %v725
      %v727 = vand.u32 %v400, 4294901760
      %v728 = vsub.f32 %v400, %v727
      %729 = vmatmul.f32.gmra.mxu0 %v728
      %v730 = vpop.f32.mrf.mxu0
      %v731 = vadd.f32 %v638, %v730
      %v732 = vand.u32 %v403, 4294901760
      %v733 = vsub.f32 %v403, %v732
      %734 = vmatmul.f32.gmra.mxu0 %v733
      %v735 = vpop.f32.mrf.mxu0
      %v736 = vadd.f32 %v642, %v735
      %v737 = vand.u32 %v406, 4294901760
      %v738 = vsub.f32 %v406, %v737
      %739 = vmatmul.f32.gmra.mxu0 %v738
      %v740 = vpop.f32.mrf.mxu0
      %v741 = vadd.f32 %v646, %v740
      %v742 = vand.u32 %v409, 4294901760
      %v743 = vsub.f32 %v409, %v742
      %744 = vmatmul.f32.gmra.mxu0 %v743
      %v745 = vpop.f32.mrf.mxu0
      %v746 = vadd.f32 %v650, %v745
      %v747 = vand.u32 %v412, 4294901760
      %v748 = vsub.f32 %v412, %v747
      %749 = vmatmul.f32.gmra.mxu0 %v748
      %v750 = vpop.f32.mrf.mxu0
      %v751 = vadd.f32 %v654, %v750
      %v752 = vand.u32 %v415, 4294901760
      %v753 = vsub.f32 %v415, %v752
      %754 = vmatmul.f32.gmra.mxu0 %v753
      %v755 = vpop.f32.mrf.mxu0
      %v756 = vadd.f32 %v658, %v755
      %v757 = vand.u32 %v418, 4294901760
      %v758 = vsub.f32 %v418, %v757
      %759 = vmatmul.f32.gmra.mxu0 %v758
      %v760 = vpop.f32.mrf.mxu0
      %v761 = vadd.f32 %v662, %v760
      %v762 = vand.u32 %v421, 4294901760
      %v763 = vsub.f32 %v421, %v762
      %764 = vmatmul.f32.gmra.mxu0 %v763
      %v765 = vpop.f32.mrf.mxu0
      %v766 = vadd.f32 %v666, %v765
      %v767 = vand.u32 %v424, 4294901760
      %v768 = vsub.f32 %v424, %v767
      %769 = vmatmul.f32.gmra.mxu0 %v768
      %v770 = vpop.f32.mrf.mxu0
      %v771 = vadd.f32 %v670, %v770
      %v772 = vand.u32 %v427, 4294901760
      %v773 = vsub.f32 %v427, %v772
      %774 = vmatmul.f32.gmra.mxu0 %v773
      %v775 = vpop.f32.mrf.mxu0
      %v776 = vadd.f32 %v674, %v775
      %v777 = vand.u32 %v430, 4294901760
      %v778 = vsub.f32 %v430, %v777
      %779 = vmatmul.f32.gmra.mxu0 %v778
      %v780 = vpop.f32.mrf.mxu0
      %v781 = vadd.f32 %v678, %v780
      %v782 = vand.u32 %v433, 4294901760
      %v783 = vsub.f32 %v433, %v782
      %784 = vmatmul.f32.gmra.mxu0 %v783
      %v785 = vpop.f32.mrf.mxu0
      %v786 = vadd.f32 %v682, %v785
      %v787 = vand.u32 %v436, 4294901760
      %v788 = vsub.f32 %v436, %v787
      %789 = vmatmul.f32.gmra.mxu0 %v788
      %v790 = vpop.f32.mrf.mxu0
      %v791 = vadd.f32 %v686, %v790
      %792 = vdwg.mxu0
      %793 = vmatpush.msra.mxu0 0.0
      %794 = vmatpush.msra.mxu0 0.0
      %795 = vmatpush.msra.mxu0 0.0
      %796 = vmatpush.msra.mxu0 0.0
      %797 = vmatpush.msra.mxu0 0.0
      %798 = vmatpush.msra.mxu0 0.0
      %799 = vmatpush.msra.mxu0 0.0
      %800 = vmatpush.msra.mxu0 0.0
      %801 = vmatpush.msra.mxu0 0.0
      %802 = vmatpush.msra.mxu0 0.0
      %803 = vmatpush.msra.mxu0 0.0
      %804 = vmatpush.msra.mxu0 0.0
      %v805 = vand.u32 %v384, 4294901760
      %806 = vmatpush.msra.mxu0 %v805
      %v807 = vand.u32 %v383, 4294901760
      %808 = vmatpush.msra.mxu0 %v807
      %v809 = vand.u32 %v382, 4294901760
      %810 = vmatpush.msra.mxu0 %v809
      %v811 = vand.u32 %v381, 4294901760
      %812 = vmatpush.msra.mxu0 %v811
      %v813 = vand.u32 %v391, 4294901760
      %v814 = vsub.f32 %v391, %v813
      %v815 = vand.u32 %v814, 4294901760
      %816 = vmatmul.f32.gmra.mxu0 %v815
      %v817 = vpop.f32.mrf.mxu0
      %v818 = vadd.f32 %v716, %v817
      %v819 = vand.u32 %v394, 4294901760
      %v820 = vsub.f32 %v394, %v819
      %v821 = vand.u32 %v820, 4294901760
      %822 = vmatmul.f32.gmra.mxu0 %v821
      %v823 = vpop.f32.mrf.mxu0
      %v824 = vadd.f32 %v721, %v823
      %v825 = vand.u32 %v397, 4294901760
      %v826 = vsub.f32 %v397, %v825
      %v827 = vand.u32 %v826, 4294901760
      %828 = vmatmul.f32.gmra.mxu0 %v827
      %v829 = vpop.f32.mrf.mxu0
      %v830 = vadd.f32 %v726, %v829
      %v831 = vand.u32 %v400, 4294901760
      %v832 = vsub.f32 %v400, %v831
      %v833 = vand.u32 %v832, 4294901760
      %834 = vmatmul.f32.gmra.mxu0 %v833
      %v835 = vpop.f32.mrf.mxu0
      %v836 = vadd.f32 %v731, %v835
      %v837 = vand.u32 %v403, 4294901760
      %v838 = vsub.f32 %v403, %v837
      %v839 = vand.u32 %v838, 4294901760
      %840 = vmatmul.f32.gmra.mxu0 %v839
      %v841 = vpop.f32.mrf.mxu0
      %v842 = vadd.f32 %v736, %v841
      %v843 = vand.u32 %v406, 4294901760
      %v844 = vsub.f32 %v406, %v843
      %v845 = vand.u32 %v844, 4294901760
      %846 = vmatmul.f32.gmra.mxu0 %v845
      %v847 = vpop.f32.mrf.mxu0
      %v848 = vadd.f32 %v741, %v847
      %v849 = vand.u32 %v409, 4294901760
      %v850 = vsub.f32 %v409, %v849
      %v851 = vand.u32 %v850, 4294901760
      %852 = vmatmul.f32.gmra.mxu0 %v851
      %v853 = vpop.f32.mrf.mxu0
      %v854 = vadd.f32 %v746, %v853
      %v855 = vand.u32 %v412, 4294901760
      %v856 = vsub.f32 %v412, %v855
      %v857 = vand.u32 %v856, 4294901760
      %858 = vmatmul.f32.gmra.mxu0 %v857
      %v859 = vpop.f32.mrf.mxu0
      %v860 = vadd.f32 %v751, %v859
      %v861 = vand.u32 %v415, 4294901760
      %v862 = vsub.f32 %v415, %v861
      %v863 = vand.u32 %v862, 4294901760
      %864 = vmatmul.f32.gmra.mxu0 %v863
      %v865 = vpop.f32.mrf.mxu0
      %v866 = vadd.f32 %v756, %v865
      %v867 = vand.u32 %v418, 4294901760
      %v868 = vsub.f32 %v418, %v867
      %v869 = vand.u32 %v868, 4294901760
      %870 = vmatmul.f32.gmra.mxu0 %v869
      %v871 = vpop.f32.mrf.mxu0
      %v872 = vadd.f32 %v761, %v871
      %v873 = vand.u32 %v421, 4294901760
      %v874 = vsub.f32 %v421, %v873
      %v875 = vand.u32 %v874, 4294901760
      %876 = vmatmul.f32.gmra.mxu0 %v875
      %v877 = vpop.f32.mrf.mxu0
      %v878 = vadd.f32 %v766, %v877
      %v879 = vand.u32 %v424, 4294901760
      %v880 = vsub.f32 %v424, %v879
      %v881 = vand.u32 %v880, 4294901760
      %882 = vmatmul.f32.gmra.mxu0 %v881
      %v883 = vpop.f32.mrf.mxu0
      %v884 = vadd.f32 %v771, %v883
      %v885 = vand.u32 %v427, 4294901760
      %v886 = vsub.f32 %v427, %v885
      %v887 = vand.u32 %v886, 4294901760
      %888 = vmatmul.f32.gmra.mxu0 %v887
      %v889 = vpop.f32.mrf.mxu0
      %v890 = vadd.f32 %v776, %v889
      %v891 = vand.u32 %v430, 4294901760
      %v892 = vsub.f32 %v430, %v891
      %v893 = vand.u32 %v892, 4294901760
      %894 = vmatmul.f32.gmra.mxu0 %v893
      %v895 = vpop.f32.mrf.mxu0
      %v896 = vadd.f32 %v781, %v895
      %v897 = vand.u32 %v433, 4294901760
      %v898 = vsub.f32 %v433, %v897
      %v899 = vand.u32 %v898, 4294901760
      %900 = vmatmul.f32.gmra.mxu0 %v899
      %v901 = vpop.f32.mrf.mxu0
      %v902 = vadd.f32 %v786, %v901
      %v903 = vand.u32 %v436, 4294901760
      %v904 = vsub.f32 %v436, %v903
      %v905 = vand.u32 %v904, 4294901760
      %906 = vmatmul.f32.gmra.mxu0 %v905
      %v907 = vpop.f32.mrf.mxu0
      %v908 = vadd.f32 %v791, %v907
      %909 = vdwg.mxu0
      %910 = vmatpush.msra.mxu0 0.0
      %911 = vmatpush.msra.mxu0 0.0
      %912 = vmatpush.msra.mxu0 0.0
      %913 = vmatpush.msra.mxu0 0.0
      %914 = vmatpush.msra.mxu0 0.0
      %915 = vmatpush.msra.mxu0 0.0
      %916 = vmatpush.msra.mxu0 0.0
      %917 = vmatpush.msra.mxu0 0.0
      %918 = vmatpush.msra.mxu0 0.0
      %919 = vmatpush.msra.mxu0 0.0
      %920 = vmatpush.msra.mxu0 0.0
      %921 = vmatpush.msra.mxu0 0.0
      %v922 = vand.u32 %v384, 4294901760
      %v923 = vsub.f32 %v384, %v922
      %v924 = vand.u32 %v923, 4294901760
      %925 = vmatpush.msra.mxu0 %v924
      %v926 = vand.u32 %v383, 4294901760
      %v927 = vsub.f32 %v383, %v926
      %v928 = vand.u32 %v927, 4294901760
      %929 = vmatpush.msra.mxu0 %v928
      %v930 = vand.u32 %v382, 4294901760
      %v931 = vsub.f32 %v382, %v930
      %v932 = vand.u32 %v931, 4294901760
      %933 = vmatpush.msra.mxu0 %v932
      %v934 = vand.u32 %v381, 4294901760
      %v935 = vsub.f32 %v381, %v934
      %v936 = vand.u32 %v935, 4294901760
      %937 = vmatpush.msra.mxu0 %v936
      %v938 = vand.u32 %v391, 4294901760
      %939 = vmatmul.f32.gmra.mxu0 %v938
      %v940 = vpop.f32.mrf.mxu0
      %v941 = vadd.f32 %v818, %v940
      %v942 = vand.u32 %v394, 4294901760
      %943 = vmatmul.f32.gmra.mxu0 %v942
      %v944 = vpop.f32.mrf.mxu0
      %v945 = vadd.f32 %v824, %v944
      %v946 = vand.u32 %v397, 4294901760
      %947 = vmatmul.f32.gmra.mxu0 %v946
      %v948 = vpop.f32.mrf.mxu0
      %v949 = vadd.f32 %v830, %v948
      %v950 = vand.u32 %v400, 4294901760
      %951 = vmatmul.f32.gmra.mxu0 %v950
      %v952 = vpop.f32.mrf.mxu0
      %v953 = vadd.f32 %v836, %v952
      %v954 = vand.u32 %v403, 4294901760
      %955 = vmatmul.f32.gmra.mxu0 %v954
      %v956 = vpop.f32.mrf.mxu0
      %v957 = vadd.f32 %v842, %v956
      %v958 = vand.u32 %v406, 4294901760
      %959 = vmatmul.f32.gmra.mxu0 %v958
      %v960 = vpop.f32.mrf.mxu0
      %v961 = vadd.f32 %v848, %v960
      %v962 = vand.u32 %v409, 4294901760
      %963 = vmatmul.f32.gmra.mxu0 %v962
      %v964 = vpop.f32.mrf.mxu0
      %v965 = vadd.f32 %v854, %v964
      %v966 = vand.u32 %v412, 4294901760
      %967 = vmatmul.f32.gmra.mxu0 %v966
      %v968 = vpop.f32.mrf.mxu0
      %v969 = vadd.f32 %v860, %v968
      %v970 = vand.u32 %v415, 4294901760
      %971 = vmatmul.f32.gmra.mxu0 %v970
      %v972 = vpop.f32.mrf.mxu0
      %v973 = vadd.f32 %v866, %v972
      %v974 = vand.u32 %v418, 4294901760
      %975 = vmatmul.f32.gmra.mxu0 %v974
      %v976 = vpop.f32.mrf.mxu0
      %v977 = vadd.f32 %v872, %v976
      %v978 = vand.u32 %v421, 4294901760
      %979 = vmatmul.f32.gmra.mxu0 %v978
      %v980 = vpop.f32.mrf.mxu0
      %v981 = vadd.f32 %v878, %v980
      %v982 = vand.u32 %v424, 4294901760
      %983 = vmatmul.f32.gmra.mxu0 %v982
      %v984 = vpop.f32.mrf.mxu0
      %v985 = vadd.f32 %v884, %v984
      %v986 = vand.u32 %v427, 4294901760
      %987 = vmatmul.f32.gmra.mxu0 %v986
      %v988 = vpop.f32.mrf.mxu0
      %v989 = vadd.f32 %v890, %v988
      %v990 = vand.u32 %v430, 4294901760
      %991 = vmatmul.f32.gmra.mxu0 %v990
      %v992 = vpop.f32.mrf.mxu0
      %v993 = vadd.f32 %v896, %v992
      %v994 = vand.u32 %v433, 4294901760
      %995 = vmatmul.f32.gmra.mxu0 %v994
      %v996 = vpop.f32.mrf.mxu0
      %v997 = vadd.f32 %v902, %v996
      %v998 = vand.u32 %v436, 4294901760
      %999 = vmatmul.f32.gmra.mxu0 %v998
      %v1000 = vpop.f32.mrf.mxu0
      %v1001 = vadd.f32 %v908, %v1000
      %1002 = vdwg.mxu0
      %1003 = vmatpush.msra.mxu0 0.0
      %1004 = vmatpush.msra.mxu0 0.0
      %1005 = vmatpush.msra.mxu0 0.0
      %1006 = vmatpush.msra.mxu0 0.0
      %1007 = vmatpush.msra.mxu0 0.0
      %1008 = vmatpush.msra.mxu0 0.0
      %1009 = vmatpush.msra.mxu0 0.0
      %1010 = vmatpush.msra.mxu0 0.0
      %1011 = vmatpush.msra.mxu0 0.0
      %1012 = vmatpush.msra.mxu0 0.0
      %1013 = vmatpush.msra.mxu0 0.0
      %1014 = vmatpush.msra.mxu0 0.0
      %v1015 = vand.u32 %v384, 4294901760
      %1016 = vmatpush.msra.mxu0 %v1015
      %v1017 = vand.u32 %v383, 4294901760
      %1018 = vmatpush.msra.mxu0 %v1017
      %v1019 = vand.u32 %v382, 4294901760
      %1020 = vmatpush.msra.mxu0 %v1019
      %v1021 = vand.u32 %v381, 4294901760
      %1022 = vmatpush.msra.mxu0 %v1021
      %v1023 = vand.u32 %v391, 4294901760
      %1024 = vmatmul.f32.gmra.mxu0 %v1023
      %v1025 = vpop.f32.mrf.mxu0
      %v1026 = vadd.f32 %v941, %v1025
      %v1027 = vand.u32 %v394, 4294901760
      %1028 = vmatmul.f32.gmra.mxu0 %v1027
      %v1029 = vpop.f32.mrf.mxu0
      %v1030 = vadd.f32 %v945, %v1029
      %v1031 = vand.u32 %v397, 4294901760
      %1032 = vmatmul.f32.gmra.mxu0 %v1031
      %v1033 = vpop.f32.mrf.mxu0
      %v1034 = vadd.f32 %v949, %v1033
      %v1035 = vand.u32 %v400, 4294901760
      %1036 = vmatmul.f32.gmra.mxu0 %v1035
      %v1037 = vpop.f32.mrf.mxu0
      %v1038 = vadd.f32 %v953, %v1037
      %v1039 = vand.u32 %v403, 4294901760
      %1040 = vmatmul.f32.gmra.mxu0 %v1039
      %v1041 = vpop.f32.mrf.mxu0
      %v1042 = vadd.f32 %v957, %v1041
      %v1043 = vand.u32 %v406, 4294901760
      %1044 = vmatmul.f32.gmra.mxu0 %v1043
      %v1045 = vpop.f32.mrf.mxu0
      %v1046 = vadd.f32 %v961, %v1045
      %v1047 = vand.u32 %v409, 4294901760
      %1048 = vmatmul.f32.gmra.mxu0 %v1047
      %v1049 = vpop.f32.mrf.mxu0
      %v1050 = vadd.f32 %v965, %v1049
      %v1051 = vand.u32 %v412, 4294901760
      %1052 = vmatmul.f32.gmra.mxu0 %v1051
      %v1053 = vpop.f32.mrf.mxu0
      %v1054 = vadd.f32 %v969, %v1053
      %v1055 = vand.u32 %v415, 4294901760
      %1056 = vmatmul.f32.gmra.mxu0 %v1055
      %v1057 = vpop.f32.mrf.mxu0
      %v1058 = vadd.f32 %v973, %v1057
      %v1059 = vand.u32 %v418, 4294901760
      %1060 = vmatmul.f32.gmra.mxu0 %v1059
      %v1061 = vpop.f32.mrf.mxu0
      %v1062 = vadd.f32 %v977, %v1061
      %v1063 = vand.u32 %v421, 4294901760
      %1064 = vmatmul.f32.gmra.mxu0 %v1063
      %v1065 = vpop.f32.mrf.mxu0
      %v1066 = vadd.f32 %v981, %v1065
      %v1067 = vand.u32 %v424, 4294901760
      %1068 = vmatmul.f32.gmra.mxu0 %v1067
      %v1069 = vpop.f32.mrf.mxu0
      %v1070 = vadd.f32 %v985, %v1069
      %v1071 = vand.u32 %v427, 4294901760
      %1072 = vmatmul.f32.gmra.mxu0 %v1071
      %v1073 = vpop.f32.mrf.mxu0
      %v1074 = vadd.f32 %v989, %v1073
      %v1075 = vand.u32 %v430, 4294901760
      %1076 = vmatmul.f32.gmra.mxu0 %v1075
      %v1077 = vpop.f32.mrf.mxu0
      %v1078 = vadd.f32 %v993, %v1077
      %v1079 = vand.u32 %v433, 4294901760
      %1080 = vmatmul.f32.gmra.mxu0 %v1079
      %v1081 = vpop.f32.mrf.mxu0
      %v1082 = vadd.f32 %v997, %v1081
      %v1083 = vand.u32 %v436, 4294901760
      %1084 = vmatmul.f32.gmra.mxu0 %v1083
      %v1085 = vpop.f32.mrf.mxu0
      %v1086 = vadd.f32 %v1001, %v1085
      %1087 = vdwg.mxu0
      %v1088 = vld [vmem:[%s3] sm:$0xff]
      %v1089 = vld [vmem:[%s3 + $0x8] sm:$0xff]
      %v1090 = vld [vmem:[%s3 + $0x10] sm:$0xff]
      %v1091 = vld [vmem:[%s3 + $0x18] sm:$0xff]
      %v1092 = vld [vmem:[%s4] sm:$0x1]
      %v1094 = vperm.slane %v1092, 0
      %1096 = vmatpush.msra.mxu0 0.0
      %1097 = vmatpush.msra.mxu0 0.0
      %1098 = vmatpush.msra.mxu0 0.0
      %1099 = vmatpush.msra.mxu0 0.0
      %1100 = vmatpush.msra.mxu0 0.0
      %1101 = vmatpush.msra.mxu0 0.0
      %1102 = vmatpush.msra.mxu0 0.0
      %1103 = vmatpush.msra.mxu0 0.0
      %1104 = vmatpush.msra.mxu0 0.0
      %1105 = vmatpush.msra.mxu0 0.0
      %1106 = vmatpush.msra.mxu0 0.0
      %1107 = vmatpush.msra.mxu0 0.0
      %v1108 = vand.u32 %v1091, 4294901760
      %1109 = vmatpush.msra.mxu0 %v1108
      %v1110 = vand.u32 %v1090, 4294901760
      %1111 = vmatpush.msra.mxu0 %v1110
      %v1112 = vand.u32 %v1089, 4294901760
      %1113 = vmatpush.msra.mxu0 %v1112
      %v1114 = vand.u32 %v1088, 4294901760
      %1115 = vmatpush.msra.mxu0 %v1114
      %v1116 = vand.u32 %v391, 4294901760
      %v1117 = vsub.f32 %v391, %v1116
      %v1118 = vand.u32 %v1117, 4294901760
      %v1119 = vsub.f32 %v1117, %v1118
      %v1120 = vand.u32 %v1119, 4294901760
      %1121 = vmatmul.f32.gmra.mxu0 %v1120
      %v1122 = vpop.f32.mrf.mxu0
      %v1123 = vadd.f32 %v1094, %v1122
      %v1124 = vand.u32 %v394, 4294901760
      %v1125 = vsub.f32 %v394, %v1124
      %v1126 = vand.u32 %v1125, 4294901760
      %v1127 = vsub.f32 %v1125, %v1126
      %v1128 = vand.u32 %v1127, 4294901760
      %1129 = vmatmul.f32.gmra.mxu0 %v1128
      %v1130 = vpop.f32.mrf.mxu0
      %v1131 = vadd.f32 %v1094, %v1130
      %v1132 = vand.u32 %v397, 4294901760
      %v1133 = vsub.f32 %v397, %v1132
      %v1134 = vand.u32 %v1133, 4294901760
      %v1135 = vsub.f32 %v1133, %v1134
      %v1136 = vand.u32 %v1135, 4294901760
      %1137 = vmatmul.f32.gmra.mxu0 %v1136
      %v1138 = vpop.f32.mrf.mxu0
      %v1139 = vadd.f32 %v1094, %v1138
      %v1140 = vand.u32 %v400, 4294901760
      %v1141 = vsub.f32 %v400, %v1140
      %v1142 = vand.u32 %v1141, 4294901760
      %v1143 = vsub.f32 %v1141, %v1142
      %v1144 = vand.u32 %v1143, 4294901760
      %1145 = vmatmul.f32.gmra.mxu0 %v1144
      %v1146 = vpop.f32.mrf.mxu0
      %v1147 = vadd.f32 %v1094, %v1146
      %v1148 = vand.u32 %v403, 4294901760
      %v1149 = vsub.f32 %v403, %v1148
      %v1150 = vand.u32 %v1149, 4294901760
      %v1151 = vsub.f32 %v1149, %v1150
      %v1152 = vand.u32 %v1151, 4294901760
      %1153 = vmatmul.f32.gmra.mxu0 %v1152
      %v1154 = vpop.f32.mrf.mxu0
      %v1155 = vadd.f32 %v1094, %v1154
      %v1156 = vand.u32 %v406, 4294901760
      %v1157 = vsub.f32 %v406, %v1156
      %v1158 = vand.u32 %v1157, 4294901760
      %v1159 = vsub.f32 %v1157, %v1158
      %v1160 = vand.u32 %v1159, 4294901760
      %1161 = vmatmul.f32.gmra.mxu0 %v1160
      %v1162 = vpop.f32.mrf.mxu0
      %v1163 = vadd.f32 %v1094, %v1162
      %v1164 = vand.u32 %v409, 4294901760
      %v1165 = vsub.f32 %v409, %v1164
      %v1166 = vand.u32 %v1165, 4294901760
      %v1167 = vsub.f32 %v1165, %v1166
      %v1168 = vand.u32 %v1167, 4294901760
      %1169 = vmatmul.f32.gmra.mxu0 %v1168
      %v1170 = vpop.f32.mrf.mxu0
      %v1171 = vadd.f32 %v1094, %v1170
      %v1172 = vand.u32 %v412, 4294901760
      %v1173 = vsub.f32 %v412, %v1172
      %v1174 = vand.u32 %v1173, 4294901760
      %v1175 = vsub.f32 %v1173, %v1174
      %v1176 = vand.u32 %v1175, 4294901760
      %1177 = vmatmul.f32.gmra.mxu0 %v1176
      %v1178 = vpop.f32.mrf.mxu0
      %v1179 = vadd.f32 %v1094, %v1178
      %v1180 = vand.u32 %v415, 4294901760
      %v1181 = vsub.f32 %v415, %v1180
      %v1182 = vand.u32 %v1181, 4294901760
      %v1183 = vsub.f32 %v1181, %v1182
      %v1184 = vand.u32 %v1183, 4294901760
      %1185 = vmatmul.f32.gmra.mxu0 %v1184
      %v1186 = vpop.f32.mrf.mxu0
      %v1187 = vadd.f32 %v1094, %v1186
      %v1188 = vand.u32 %v418, 4294901760
      %v1189 = vsub.f32 %v418, %v1188
      %v1190 = vand.u32 %v1189, 4294901760
      %v1191 = vsub.f32 %v1189, %v1190
      %v1192 = vand.u32 %v1191, 4294901760
      %1193 = vmatmul.f32.gmra.mxu0 %v1192
      %v1194 = vpop.f32.mrf.mxu0
      %v1195 = vadd.f32 %v1094, %v1194
      %v1196 = vand.u32 %v421, 4294901760
      %v1197 = vsub.f32 %v421, %v1196
      %v1198 = vand.u32 %v1197, 4294901760
      %v1199 = vsub.f32 %v1197, %v1198
      %v1200 = vand.u32 %v1199, 4294901760
      %1201 = vmatmul.f32.gmra.mxu0 %v1200
      %v1202 = vpop.f32.mrf.mxu0
      %v1203 = vadd.f32 %v1094, %v1202
      %v1204 = vand.u32 %v424, 4294901760
      %v1205 = vsub.f32 %v424, %v1204
      %v1206 = vand.u32 %v1205, 4294901760
      %v1207 = vsub.f32 %v1205, %v1206
      %v1208 = vand.u32 %v1207, 4294901760
      %1209 = vmatmul.f32.gmra.mxu0 %v1208
      %v1210 = vpop.f32.mrf.mxu0
      %v1211 = vadd.f32 %v1094, %v1210
      %v1212 = vand.u32 %v427, 4294901760
      %v1213 = vsub.f32 %v427, %v1212
      %v1214 = vand.u32 %v1213, 4294901760
      %v1215 = vsub.f32 %v1213, %v1214
      %v1216 = vand.u32 %v1215, 4294901760
      %1217 = vmatmul.f32.gmra.mxu0 %v1216
      %v1218 = vpop.f32.mrf.mxu0
      %v1219 = vadd.f32 %v1094, %v1218
      %v1220 = vand.u32 %v430, 4294901760
      %v1221 = vsub.f32 %v430, %v1220
      %v1222 = vand.u32 %v1221, 4294901760
      %v1223 = vsub.f32 %v1221, %v1222
      %v1224 = vand.u32 %v1223, 4294901760
      %1225 = vmatmul.f32.gmra.mxu0 %v1224
      %v1226 = vpop.f32.mrf.mxu0
      %v1227 = vadd.f32 %v1094, %v1226
      %v1228 = vand.u32 %v433, 4294901760
      %v1229 = vsub.f32 %v433, %v1228
      %v1230 = vand.u32 %v1229, 4294901760
      %v1231 = vsub.f32 %v1229, %v1230
      %v1232 = vand.u32 %v1231, 4294901760
      %1233 = vmatmul.f32.gmra.mxu0 %v1232
      %v1234 = vpop.f32.mrf.mxu0
      %v1235 = vadd.f32 %v1094, %v1234
      %v1236 = vand.u32 %v436, 4294901760
      %v1237 = vsub.f32 %v436, %v1236
      %v1238 = vand.u32 %v1237, 4294901760
      %v1239 = vsub.f32 %v1237, %v1238
      %v1240 = vand.u32 %v1239, 4294901760
      %1241 = vmatmul.f32.gmra.mxu0 %v1240
      %v1242 = vpop.f32.mrf.mxu0
      %v1243 = vadd.f32 %v1094, %v1242
      %1244 = vdwg.mxu0
      %1245 = vmatpush.msra.mxu0 0.0
      %1246 = vmatpush.msra.mxu0 0.0
      %1247 = vmatpush.msra.mxu0 0.0
      %1248 = vmatpush.msra.mxu0 0.0
      %1249 = vmatpush.msra.mxu0 0.0
      %1250 = vmatpush.msra.mxu0 0.0
      %1251 = vmatpush.msra.mxu0 0.0
      %1252 = vmatpush.msra.mxu0 0.0
      %1253 = vmatpush.msra.mxu0 0.0
      %1254 = vmatpush.msra.mxu0 0.0
      %1255 = vmatpush.msra.mxu0 0.0
      %1256 = vmatpush.msra.mxu0 0.0
      %v1257 = vand.u32 %v1091, 4294901760
      %v1258 = vsub.f32 %v1091, %v1257
      %v1259 = vand.u32 %v1258, 4294901760
      %v1260 = vsub.f32 %v1258, %v1259
      %v1261 = vand.u32 %v1260, 4294901760
      %1262 = vmatpush.msra.mxu0 %v1261
      %v1263 = vand.u32 %v1090, 4294901760
      %v1264 = vsub.f32 %v1090, %v1263
      %v1265 = vand.u32 %v1264, 4294901760
      %v1266 = vsub.f32 %v1264, %v1265
      %v1267 = vand.u32 %v1266, 4294901760
      %1268 = vmatpush.msra.mxu0 %v1267
      %v1269 = vand.u32 %v1089, 4294901760
      %v1270 = vsub.f32 %v1089, %v1269
      %v1271 = vand.u32 %v1270, 4294901760
      %v1272 = vsub.f32 %v1270, %v1271
      %v1273 = vand.u32 %v1272, 4294901760
      %1274 = vmatpush.msra.mxu0 %v1273
      %v1275 = vand.u32 %v1088, 4294901760
      %v1276 = vsub.f32 %v1088, %v1275
      %v1277 = vand.u32 %v1276, 4294901760
      %v1278 = vsub.f32 %v1276, %v1277
      %v1279 = vand.u32 %v1278, 4294901760
      %1280 = vmatpush.msra.mxu0 %v1279
      %v1281 = vand.u32 %v391, 4294901760
      %1282 = vmatmul.f32.gmra.mxu0 %v1281
      %v1283 = vpop.f32.mrf.mxu0
      %v1284 = vadd.f32 %v1123, %v1283
      %v1285 = vand.u32 %v394, 4294901760
      %1286 = vmatmul.f32.gmra.mxu0 %v1285
      %v1287 = vpop.f32.mrf.mxu0
      %v1288 = vadd.f32 %v1131, %v1287
      %v1289 = vand.u32 %v397, 4294901760
      %1290 = vmatmul.f32.gmra.mxu0 %v1289
      %v1291 = vpop.f32.mrf.mxu0
      %v1292 = vadd.f32 %v1139, %v1291
      %v1293 = vand.u32 %v400, 4294901760
      %1294 = vmatmul.f32.gmra.mxu0 %v1293
      %v1295 = vpop.f32.mrf.mxu0
      %v1296 = vadd.f32 %v1147, %v1295
      %v1297 = vand.u32 %v403, 4294901760
      %1298 = vmatmul.f32.gmra.mxu0 %v1297
      %v1299 = vpop.f32.mrf.mxu0
      %v1300 = vadd.f32 %v1155, %v1299
      %v1301 = vand.u32 %v406, 4294901760
      %1302 = vmatmul.f32.gmra.mxu0 %v1301
      %v1303 = vpop.f32.mrf.mxu0
      %v1304 = vadd.f32 %v1163, %v1303
      %v1305 = vand.u32 %v409, 4294901760
      %1306 = vmatmul.f32.gmra.mxu0 %v1305
      %v1307 = vpop.f32.mrf.mxu0
      %v1308 = vadd.f32 %v1171, %v1307
      %v1309 = vand.u32 %v412, 4294901760
      %1310 = vmatmul.f32.gmra.mxu0 %v1309
      %v1311 = vpop.f32.mrf.mxu0
      %v1312 = vadd.f32 %v1179, %v1311
      %v1313 = vand.u32 %v415, 4294901760
      %1314 = vmatmul.f32.gmra.mxu0 %v1313
      %v1315 = vpop.f32.mrf.mxu0
      %v1316 = vadd.f32 %v1187, %v1315
      %v1317 = vand.u32 %v418, 4294901760
      %1318 = vmatmul.f32.gmra.mxu0 %v1317
      %v1319 = vpop.f32.mrf.mxu0
      %v1320 = vadd.f32 %v1195, %v1319
      %v1321 = vand.u32 %v421, 4294901760
      %1322 = vmatmul.f32.gmra.mxu0 %v1321
      %v1323 = vpop.f32.mrf.mxu0
      %v1324 = vadd.f32 %v1203, %v1323
      %v1325 = vand.u32 %v424, 4294901760
      %1326 = vmatmul.f32.gmra.mxu0 %v1325
      %v1327 = vpop.f32.mrf.mxu0
      %v1328 = vadd.f32 %v1211, %v1327
      %v1329 = vand.u32 %v427, 4294901760
      %1330 = vmatmul.f32.gmra.mxu0 %v1329
      %v1331 = vpop.f32.mrf.mxu0
      %v1332 = vadd.f32 %v1219, %v1331
      %v1333 = vand.u32 %v430, 4294901760
      %1334 = vmatmul.f32.gmra.mxu0 %v1333
      %v1335 = vpop.f32.mrf.mxu0
      %v1336 = vadd.f32 %v1227, %v1335
      %v1337 = vand.u32 %v433, 4294901760
      %1338 = vmatmul.f32.gmra.mxu0 %v1337
      %v1339 = vpop.f32.mrf.mxu0
      %v1340 = vadd.f32 %v1235, %v1339
      %v1341 = vand.u32 %v436, 4294901760
      %1342 = vmatmul.f32.gmra.mxu0 %v1341
      %v1343 = vpop.f32.mrf.mxu0
      %v1344 = vadd.f32 %v1243, %v1343
      %1345 = vdwg.mxu0
      %1346 = vmatpush.msra.mxu0 0.0
      %1347 = vmatpush.msra.mxu0 0.0
      %1348 = vmatpush.msra.mxu0 0.0
      %1349 = vmatpush.msra.mxu0 0.0
      %1350 = vmatpush.msra.mxu0 0.0
      %1351 = vmatpush.msra.mxu0 0.0
      %1352 = vmatpush.msra.mxu0 0.0
      %1353 = vmatpush.msra.mxu0 0.0
      %1354 = vmatpush.msra.mxu0 0.0
      %1355 = vmatpush.msra.mxu0 0.0
      %1356 = vmatpush.msra.mxu0 0.0
      %1357 = vmatpush.msra.mxu0 0.0
      %v1358 = vand.u32 %v1091, 4294901760
      %v1359 = vsub.f32 %v1091, %v1358
      %1360 = vmatpush.msra.mxu0 %v1359
      %v1361 = vand.u32 %v1090, 4294901760
      %v1362 = vsub.f32 %v1090, %v1361
      %1363 = vmatpush.msra.mxu0 %v1362
      %v1364 = vand.u32 %v1089, 4294901760
      %v1365 = vsub.f32 %v1089, %v1364
      %1366 = vmatpush.msra.mxu0 %v1365
      %v1367 = vand.u32 %v1088, 4294901760
      %v1368 = vsub.f32 %v1088, %v1367
      %1369 = vmatpush.msra.mxu0 %v1368
      %v1370 = vand.u32 %v391, 4294901760
      %v1371 = vsub.f32 %v391, %v1370
      %1372 = vmatmul.f32.gmra.mxu0 %v1371
      %v1373 = vpop.f32.mrf.mxu0
      %v1374 = vadd.f32 %v1284, %v1373
      %v1375 = vand.u32 %v394, 4294901760
      %v1376 = vsub.f32 %v394, %v1375
      %1377 = vmatmul.f32.gmra.mxu0 %v1376
      %v1378 = vpop.f32.mrf.mxu0
      %v1379 = vadd.f32 %v1288, %v1378
      %v1380 = vand.u32 %v397, 4294901760
      %v1381 = vsub.f32 %v397, %v1380
      %1382 = vmatmul.f32.gmra.mxu0 %v1381
      %v1383 = vpop.f32.mrf.mxu0
      %v1384 = vadd.f32 %v1292, %v1383
      %v1385 = vand.u32 %v400, 4294901760
      %v1386 = vsub.f32 %v400, %v1385
      %1387 = vmatmul.f32.gmra.mxu0 %v1386
      %v1388 = vpop.f32.mrf.mxu0
      %v1389 = vadd.f32 %v1296, %v1388
      %v1390 = vand.u32 %v403, 4294901760
      %v1391 = vsub.f32 %v403, %v1390
      %1392 = vmatmul.f32.gmra.mxu0 %v1391
      %v1393 = vpop.f32.mrf.mxu0
      %v1394 = vadd.f32 %v1300, %v1393
      %v1395 = vand.u32 %v406, 4294901760
      %v1396 = vsub.f32 %v406, %v1395
      %1397 = vmatmul.f32.gmra.mxu0 %v1396
      %v1398 = vpop.f32.mrf.mxu0
      %v1399 = vadd.f32 %v1304, %v1398
      %v1400 = vand.u32 %v409, 4294901760
      %v1401 = vsub.f32 %v409, %v1400
      %1402 = vmatmul.f32.gmra.mxu0 %v1401
      %v1403 = vpop.f32.mrf.mxu0
      %v1404 = vadd.f32 %v1308, %v1403
      %v1405 = vand.u32 %v412, 4294901760
      %v1406 = vsub.f32 %v412, %v1405
      %1407 = vmatmul.f32.gmra.mxu0 %v1406
      %v1408 = vpop.f32.mrf.mxu0
      %v1409 = vadd.f32 %v1312, %v1408
      %v1410 = vand.u32 %v415, 4294901760
      %v1411 = vsub.f32 %v415, %v1410
      %1412 = vmatmul.f32.gmra.mxu0 %v1411
      %v1413 = vpop.f32.mrf.mxu0
      %v1414 = vadd.f32 %v1316, %v1413
      %v1415 = vand.u32 %v418, 4294901760
      %v1416 = vsub.f32 %v418, %v1415
      %1417 = vmatmul.f32.gmra.mxu0 %v1416
      %v1418 = vpop.f32.mrf.mxu0
      %v1419 = vadd.f32 %v1320, %v1418
      %v1420 = vand.u32 %v421, 4294901760
      %v1421 = vsub.f32 %v421, %v1420
      %1422 = vmatmul.f32.gmra.mxu0 %v1421
      %v1423 = vpop.f32.mrf.mxu0
      %v1424 = vadd.f32 %v1324, %v1423
      %v1425 = vand.u32 %v424, 4294901760
      %v1426 = vsub.f32 %v424, %v1425
      %1427 = vmatmul.f32.gmra.mxu0 %v1426
      %v1428 = vpop.f32.mrf.mxu0
      %v1429 = vadd.f32 %v1328, %v1428
      %v1430 = vand.u32 %v427, 4294901760
      %v1431 = vsub.f32 %v427, %v1430
      %1432 = vmatmul.f32.gmra.mxu0 %v1431
      %v1433 = vpop.f32.mrf.mxu0
      %v1434 = vadd.f32 %v1332, %v1433
      %v1435 = vand.u32 %v430, 4294901760
      %v1436 = vsub.f32 %v430, %v1435
      %1437 = vmatmul.f32.gmra.mxu0 %v1436
      %v1438 = vpop.f32.mrf.mxu0
      %v1439 = vadd.f32 %v1336, %v1438
      %v1440 = vand.u32 %v433, 4294901760
      %v1441 = vsub.f32 %v433, %v1440
      %1442 = vmatmul.f32.gmra.mxu0 %v1441
      %v1443 = vpop.f32.mrf.mxu0
      %v1444 = vadd.f32 %v1340, %v1443
      %v1445 = vand.u32 %v436, 4294901760
      %v1446 = vsub.f32 %v436, %v1445
      %1447 = vmatmul.f32.gmra.mxu0 %v1446
      %v1448 = vpop.f32.mrf.mxu0
      %v1449 = vadd.f32 %v1344, %v1448
      %1450 = vdwg.mxu0
      %1451 = vmatpush.msra.mxu0 0.0
      %1452 = vmatpush.msra.mxu0 0.0
      %1453 = vmatpush.msra.mxu0 0.0
      %1454 = vmatpush.msra.mxu0 0.0
      %1455 = vmatpush.msra.mxu0 0.0
      %1456 = vmatpush.msra.mxu0 0.0
      %1457 = vmatpush.msra.mxu0 0.0
      %1458 = vmatpush.msra.mxu0 0.0
      %1459 = vmatpush.msra.mxu0 0.0
      %1460 = vmatpush.msra.mxu0 0.0
      %1461 = vmatpush.msra.mxu0 0.0
      %1462 = vmatpush.msra.mxu0 0.0
      %v1463 = vand.u32 %v1091, 4294901760
      %1464 = vmatpush.msra.mxu0 %v1463
      %v1465 = vand.u32 %v1090, 4294901760
      %1466 = vmatpush.msra.mxu0 %v1465
      %v1467 = vand.u32 %v1089, 4294901760
      %1468 = vmatpush.msra.mxu0 %v1467
      %v1469 = vand.u32 %v1088, 4294901760
      %1470 = vmatpush.msra.mxu0 %v1469
      %v1471 = vand.u32 %v391, 4294901760
      %v1472 = vsub.f32 %v391, %v1471
      %v1473 = vand.u32 %v1472, 4294901760
      %1474 = vmatmul.f32.gmra.mxu0 %v1473
      %v1475 = vpop.f32.mrf.mxu0
      %v1476 = vadd.f32 %v1374, %v1475
      %v1477 = vand.u32 %v394, 4294901760
      %v1478 = vsub.f32 %v394, %v1477
      %v1479 = vand.u32 %v1478, 4294901760
      %1480 = vmatmul.f32.gmra.mxu0 %v1479
      %v1481 = vpop.f32.mrf.mxu0
      %v1482 = vadd.f32 %v1379, %v1481
      %v1483 = vand.u32 %v397, 4294901760
      %v1484 = vsub.f32 %v397, %v1483
      %v1485 = vand.u32 %v1484, 4294901760
      %1486 = vmatmul.f32.gmra.mxu0 %v1485
      %v1487 = vpop.f32.mrf.mxu0
      %v1488 = vadd.f32 %v1384, %v1487
      %v1489 = vand.u32 %v400, 4294901760
      %v1490 = vsub.f32 %v400, %v1489
      %v1491 = vand.u32 %v1490, 4294901760
      %1492 = vmatmul.f32.gmra.mxu0 %v1491
      %v1493 = vpop.f32.mrf.mxu0
      %v1494 = vadd.f32 %v1389, %v1493
      %v1495 = vand.u32 %v403, 4294901760
      %v1496 = vsub.f32 %v403, %v1495
      %v1497 = vand.u32 %v1496, 4294901760
      %1498 = vmatmul.f32.gmra.mxu0 %v1497
      %v1499 = vpop.f32.mrf.mxu0
      %v1500 = vadd.f32 %v1394, %v1499
      %v1501 = vand.u32 %v406, 4294901760
      %v1502 = vsub.f32 %v406, %v1501
      %v1503 = vand.u32 %v1502, 4294901760
      %1504 = vmatmul.f32.gmra.mxu0 %v1503
      %v1505 = vpop.f32.mrf.mxu0
      %v1506 = vadd.f32 %v1399, %v1505
      %v1507 = vand.u32 %v409, 4294901760
      %v1508 = vsub.f32 %v409, %v1507
      %v1509 = vand.u32 %v1508, 4294901760
      %1510 = vmatmul.f32.gmra.mxu0 %v1509
      %v1511 = vpop.f32.mrf.mxu0
      %v1512 = vadd.f32 %v1404, %v1511
      %v1513 = vand.u32 %v412, 4294901760
      %v1514 = vsub.f32 %v412, %v1513
      %v1515 = vand.u32 %v1514, 4294901760
      %1516 = vmatmul.f32.gmra.mxu0 %v1515
      %v1517 = vpop.f32.mrf.mxu0
      %v1518 = vadd.f32 %v1409, %v1517
      %v1519 = vand.u32 %v415, 4294901760
      %v1520 = vsub.f32 %v415, %v1519
      %v1521 = vand.u32 %v1520, 4294901760
      %1522 = vmatmul.f32.gmra.mxu0 %v1521
      %v1523 = vpop.f32.mrf.mxu0
      %v1524 = vadd.f32 %v1414, %v1523
      %v1525 = vand.u32 %v418, 4294901760
      %v1526 = vsub.f32 %v418, %v1525
      %v1527 = vand.u32 %v1526, 4294901760
      %1528 = vmatmul.f32.gmra.mxu0 %v1527
      %v1529 = vpop.f32.mrf.mxu0
      %v1530 = vadd.f32 %v1419, %v1529
      %v1531 = vand.u32 %v421, 4294901760
      %v1532 = vsub.f32 %v421, %v1531
      %v1533 = vand.u32 %v1532, 4294901760
      %1534 = vmatmul.f32.gmra.mxu0 %v1533
      %v1535 = vpop.f32.mrf.mxu0
      %v1536 = vadd.f32 %v1424, %v1535
      %v1537 = vand.u32 %v424, 4294901760
      %v1538 = vsub.f32 %v424, %v1537
      %v1539 = vand.u32 %v1538, 4294901760
      %1540 = vmatmul.f32.gmra.mxu0 %v1539
      %v1541 = vpop.f32.mrf.mxu0
      %v1542 = vadd.f32 %v1429, %v1541
      %v1543 = vand.u32 %v427, 4294901760
      %v1544 = vsub.f32 %v427, %v1543
      %v1545 = vand.u32 %v1544, 4294901760
      %1546 = vmatmul.f32.gmra.mxu0 %v1545
      %v1547 = vpop.f32.mrf.mxu0
      %v1548 = vadd.f32 %v1434, %v1547
      %v1549 = vand.u32 %v430, 4294901760
      %v1550 = vsub.f32 %v430, %v1549
      %v1551 = vand.u32 %v1550, 4294901760
      %1552 = vmatmul.f32.gmra.mxu0 %v1551
      %v1553 = vpop.f32.mrf.mxu0
      %v1554 = vadd.f32 %v1439, %v1553
      %v1555 = vand.u32 %v433, 4294901760
      %v1556 = vsub.f32 %v433, %v1555
      %v1557 = vand.u32 %v1556, 4294901760
      %1558 = vmatmul.f32.gmra.mxu0 %v1557
      %v1559 = vpop.f32.mrf.mxu0
      %v1560 = vadd.f32 %v1444, %v1559
      %v1561 = vand.u32 %v436, 4294901760
      %v1562 = vsub.f32 %v436, %v1561
      %v1563 = vand.u32 %v1562, 4294901760
      %1564 = vmatmul.f32.gmra.mxu0 %v1563
      %v1565 = vpop.f32.mrf.mxu0
      %v1566 = vadd.f32 %v1449, %v1565
      %1567 = vdwg.mxu0
      %1568 = vmatpush.msra.mxu0 0.0
      %1569 = vmatpush.msra.mxu0 0.0
      %1570 = vmatpush.msra.mxu0 0.0
      %1571 = vmatpush.msra.mxu0 0.0
      %1572 = vmatpush.msra.mxu0 0.0
      %1573 = vmatpush.msra.mxu0 0.0
      %1574 = vmatpush.msra.mxu0 0.0
      %1575 = vmatpush.msra.mxu0 0.0
      %1576 = vmatpush.msra.mxu0 0.0
      %1577 = vmatpush.msra.mxu0 0.0
      %1578 = vmatpush.msra.mxu0 0.0
      %1579 = vmatpush.msra.mxu0 0.0
      %v1580 = vand.u32 %v1091, 4294901760
      %v1581 = vsub.f32 %v1091, %v1580
      %v1582 = vand.u32 %v1581, 4294901760
      %1583 = vmatpush.msra.mxu0 %v1582
      %v1584 = vand.u32 %v1090, 4294901760
      %v1585 = vsub.f32 %v1090, %v1584
      %v1586 = vand.u32 %v1585, 4294901760
      %1587 = vmatpush.msra.mxu0 %v1586
      %v1588 = vand.u32 %v1089, 4294901760
      %v1589 = vsub.f32 %v1089, %v1588
      %v1590 = vand.u32 %v1589, 4294901760
      %1591 = vmatpush.msra.mxu0 %v1590
      %v1592 = vand.u32 %v1088, 4294901760
      %v1593 = vsub.f32 %v1088, %v1592
      %v1594 = vand.u32 %v1593, 4294901760
      %1595 = vmatpush.msra.mxu0 %v1594
      %v1596 = vand.u32 %v391, 4294901760
      %1597 = vmatmul.f32.gmra.mxu0 %v1596
      %v1598 = vpop.f32.mrf.mxu0
      %v1599 = vadd.f32 %v1476, %v1598
      %v1600 = vand.u32 %v394, 4294901760
      %1601 = vmatmul.f32.gmra.mxu0 %v1600
      %v1602 = vpop.f32.mrf.mxu0
      %v1603 = vadd.f32 %v1482, %v1602
      %v1604 = vand.u32 %v397, 4294901760
      %1605 = vmatmul.f32.gmra.mxu0 %v1604
      %v1606 = vpop.f32.mrf.mxu0
      %v1607 = vadd.f32 %v1488, %v1606
      %v1608 = vand.u32 %v400, 4294901760
      %1609 = vmatmul.f32.gmra.mxu0 %v1608
      %v1610 = vpop.f32.mrf.mxu0
      %v1611 = vadd.f32 %v1494, %v1610
      %v1612 = vand.u32 %v403, 4294901760
      %1613 = vmatmul.f32.gmra.mxu0 %v1612
      %v1614 = vpop.f32.mrf.mxu0
      %v1615 = vadd.f32 %v1500, %v1614
      %v1616 = vand.u32 %v406, 4294901760
      %1617 = vmatmul.f32.gmra.mxu0 %v1616
      %v1618 = vpop.f32.mrf.mxu0
      %v1619 = vadd.f32 %v1506, %v1618
      %v1620 = vand.u32 %v409, 4294901760
      %1621 = vmatmul.f32.gmra.mxu0 %v1620
      %v1622 = vpop.f32.mrf.mxu0
      %v1623 = vadd.f32 %v1512, %v1622
      %v1624 = vand.u32 %v412, 4294901760
      %1625 = vmatmul.f32.gmra.mxu0 %v1624
      %v1626 = vpop.f32.mrf.mxu0
      %v1627 = vadd.f32 %v1518, %v1626
      %v1628 = vand.u32 %v415, 4294901760
      %1629 = vmatmul.f32.gmra.mxu0 %v1628
      %v1630 = vpop.f32.mrf.mxu0
      %v1631 = vadd.f32 %v1524, %v1630
      %v1632 = vand.u32 %v418, 4294901760
      %1633 = vmatmul.f32.gmra.mxu0 %v1632
      %v1634 = vpop.f32.mrf.mxu0
      %v1635 = vadd.f32 %v1530, %v1634
      %v1636 = vand.u32 %v421, 4294901760
      %1637 = vmatmul.f32.gmra.mxu0 %v1636
      %v1638 = vpop.f32.mrf.mxu0
      %v1639 = vadd.f32 %v1536, %v1638
      %v1640 = vand.u32 %v424, 4294901760
      %1641 = vmatmul.f32.gmra.mxu0 %v1640
      %v1642 = vpop.f32.mrf.mxu0
      %v1643 = vadd.f32 %v1542, %v1642
      %v1644 = vand.u32 %v427, 4294901760
      %1645 = vmatmul.f32.gmra.mxu0 %v1644
      %v1646 = vpop.f32.mrf.mxu0
      %v1647 = vadd.f32 %v1548, %v1646
      %v1648 = vand.u32 %v430, 4294901760
      %1649 = vmatmul.f32.gmra.mxu0 %v1648
      %v1650 = vpop.f32.mrf.mxu0
      %v1651 = vadd.f32 %v1554, %v1650
      %v1652 = vand.u32 %v433, 4294901760
      %1653 = vmatmul.f32.gmra.mxu0 %v1652
      %v1654 = vpop.f32.mrf.mxu0
      %v1655 = vadd.f32 %v1560, %v1654
      %v1656 = vand.u32 %v436, 4294901760
      %1657 = vmatmul.f32.gmra.mxu0 %v1656
      %v1658 = vpop.f32.mrf.mxu0
      %v1659 = vadd.f32 %v1566, %v1658
      %1660 = vdwg.mxu0
      %1661 = vmatpush.msra.mxu0 0.0
      %1662 = vmatpush.msra.mxu0 0.0
      %1663 = vmatpush.msra.mxu0 0.0
      %1664 = vmatpush.msra.mxu0 0.0
      %1665 = vmatpush.msra.mxu0 0.0
      %1666 = vmatpush.msra.mxu0 0.0
      %1667 = vmatpush.msra.mxu0 0.0
      %1668 = vmatpush.msra.mxu0 0.0
      %1669 = vmatpush.msra.mxu0 0.0
      %1670 = vmatpush.msra.mxu0 0.0
      %1671 = vmatpush.msra.mxu0 0.0
      %1672 = vmatpush.msra.mxu0 0.0
      %v1673 = vand.u32 %v1091, 4294901760
      %1674 = vmatpush.msra.mxu0 %v1673
      %v1675 = vand.u32 %v1090, 4294901760
      %1676 = vmatpush.msra.mxu0 %v1675
      %v1677 = vand.u32 %v1089, 4294901760
      %1678 = vmatpush.msra.mxu0 %v1677
      %v1679 = vand.u32 %v1088, 4294901760
      %1680 = vmatpush.msra.mxu0 %v1679
      %v1681 = vand.u32 %v391, 4294901760
      %1682 = vmatmul.f32.gmra.mxu0 %v1681
      %v1683 = vpop.f32.mrf.mxu0
      %v1684 = vadd.f32 %v1599, %v1683
      %v1685 = vand.u32 %v394, 4294901760
      %1686 = vmatmul.f32.gmra.mxu0 %v1685
      %v1687 = vpop.f32.mrf.mxu0
      %v1688 = vadd.f32 %v1603, %v1687
      %v1689 = vand.u32 %v397, 4294901760
      %1690 = vmatmul.f32.gmra.mxu0 %v1689
      %v1691 = vpop.f32.mrf.mxu0
      %v1692 = vadd.f32 %v1607, %v1691
      %v1693 = vand.u32 %v400, 4294901760
      %1694 = vmatmul.f32.gmra.mxu0 %v1693
      %v1695 = vpop.f32.mrf.mxu0
      %v1696 = vadd.f32 %v1611, %v1695
      %v1697 = vand.u32 %v403, 4294901760
      %1698 = vmatmul.f32.gmra.mxu0 %v1697
      %v1699 = vpop.f32.mrf.mxu0
      %v1700 = vadd.f32 %v1615, %v1699
      %v1701 = vand.u32 %v406, 4294901760
      %1702 = vmatmul.f32.gmra.mxu0 %v1701
      %v1703 = vpop.f32.mrf.mxu0
      %v1704 = vadd.f32 %v1619, %v1703
      %v1705 = vand.u32 %v409, 4294901760
      %1706 = vmatmul.f32.gmra.mxu0 %v1705
      %v1707 = vpop.f32.mrf.mxu0
      %v1708 = vadd.f32 %v1623, %v1707
      %v1709 = vand.u32 %v412, 4294901760
      %1710 = vmatmul.f32.gmra.mxu0 %v1709
      %v1711 = vpop.f32.mrf.mxu0
      %v1712 = vadd.f32 %v1627, %v1711
      %v1713 = vand.u32 %v415, 4294901760
      %1714 = vmatmul.f32.gmra.mxu0 %v1713
      %v1715 = vpop.f32.mrf.mxu0
      %v1716 = vadd.f32 %v1631, %v1715
      %v1717 = vand.u32 %v418, 4294901760
      %1718 = vmatmul.f32.gmra.mxu0 %v1717
      %v1719 = vpop.f32.mrf.mxu0
      %v1720 = vadd.f32 %v1635, %v1719
      %v1721 = vand.u32 %v421, 4294901760
      %1722 = vmatmul.f32.gmra.mxu0 %v1721
      %v1723 = vpop.f32.mrf.mxu0
      %v1724 = vadd.f32 %v1639, %v1723
      %v1725 = vand.u32 %v424, 4294901760
      %1726 = vmatmul.f32.gmra.mxu0 %v1725
      %v1727 = vpop.f32.mrf.mxu0
      %v1728 = vadd.f32 %v1643, %v1727
      %v1729 = vand.u32 %v427, 4294901760
      %1730 = vmatmul.f32.gmra.mxu0 %v1729
      %v1731 = vpop.f32.mrf.mxu0
      %v1732 = vadd.f32 %v1647, %v1731
      %v1733 = vand.u32 %v430, 4294901760
      %1734 = vmatmul.f32.gmra.mxu0 %v1733
      %v1735 = vpop.f32.mrf.mxu0
      %v1736 = vadd.f32 %v1651, %v1735
      %v1737 = vand.u32 %v433, 4294901760
      %1738 = vmatmul.f32.gmra.mxu0 %v1737
      %v1739 = vpop.f32.mrf.mxu0
      %v1740 = vadd.f32 %v1655, %v1739
      %v1741 = vand.u32 %v436, 4294901760
      %1742 = vmatmul.f32.gmra.mxu0 %v1741
      %v1743 = vpop.f32.mrf.mxu0
      %v1744 = vadd.f32 %v1659, %v1743
      %1745 = vdwg.mxu0
      %v1746 = vmul.f32 %v1026, %v1026
      %v1747 = vmul.f32 %v1030, %v1030
      %v1748 = vmul.f32 %v1034, %v1034
      %v1749 = vmul.f32 %v1038, %v1038
      %v1750 = vmul.f32 %v1042, %v1042
      %v1751 = vmul.f32 %v1046, %v1046
      %v1752 = vmul.f32 %v1050, %v1050
      %v1753 = vmul.f32 %v1054, %v1054
      %v1754 = vmul.f32 %v1058, %v1058
      %v1755 = vmul.f32 %v1062, %v1062
      %v1756 = vmul.f32 %v1066, %v1066
      %v1757 = vmul.f32 %v1070, %v1070
      %v1758 = vmul.f32 %v1074, %v1074
      %v1759 = vmul.f32 %v1078, %v1078
      %v1760 = vmul.f32 %v1082, %v1082
      %v1761 = vmul.f32 %v1086, %v1086
      %vm1762 = vcmask 130048
      %v1763 = vsel %vm1762, %v1746, 0.0
      %1764 = vadd.xlane.f32.xlu0 %v1763
      %v1765 = vpop.xlane.xlu0 %1764
      %v1766 = vsel %vm1762, %v1747, 0.0
      %1767 = vadd.xlane.f32.xlu0 %v1766
      %v1768 = vpop.xlane.xlu0 %1767
      %v1769 = vsel %vm1762, %v1748, 0.0
      %1770 = vadd.xlane.f32.xlu0 %v1769
      %v1771 = vpop.xlane.xlu0 %1770
      %v1772 = vsel %vm1762, %v1749, 0.0
      %1773 = vadd.xlane.f32.xlu0 %v1772
      %v1774 = vpop.xlane.xlu0 %1773
      %v1775 = vsel %vm1762, %v1750, 0.0
      %1776 = vadd.xlane.f32.xlu0 %v1775
      %v1777 = vpop.xlane.xlu0 %1776
      %v1778 = vsel %vm1762, %v1751, 0.0
      %1779 = vadd.xlane.f32.xlu0 %v1778
      %v1780 = vpop.xlane.xlu0 %1779
      %v1781 = vsel %vm1762, %v1752, 0.0
      %1782 = vadd.xlane.f32.xlu0 %v1781
      %v1783 = vpop.xlane.xlu0 %1782
      %v1784 = vsel %vm1762, %v1753, 0.0
      %1785 = vadd.xlane.f32.xlu0 %v1784
      %v1786 = vpop.xlane.xlu0 %1785
      %v1787 = vsel %vm1762, %v1754, 0.0
      %1788 = vadd.xlane.f32.xlu0 %v1787
      %v1789 = vpop.xlane.xlu0 %1788
      %v1790 = vsel %vm1762, %v1755, 0.0
      %1791 = vadd.xlane.f32.xlu0 %v1790
      %v1792 = vpop.xlane.xlu0 %1791
      %v1793 = vsel %vm1762, %v1756, 0.0
      %1794 = vadd.xlane.f32.xlu0 %v1793
      %v1795 = vpop.xlane.xlu0 %1794
      %v1796 = vsel %vm1762, %v1757, 0.0
      %1797 = vadd.xlane.f32.xlu0 %v1796
      %v1798 = vpop.xlane.xlu0 %1797
      %v1799 = vsel %vm1762, %v1758, 0.0
      %1800 = vadd.xlane.f32.xlu0 %v1799
      %v1801 = vpop.xlane.xlu0 %1800
      %v1802 = vsel %vm1762, %v1759, 0.0
      %1803 = vadd.xlane.f32.xlu0 %v1802
      %v1804 = vpop.xlane.xlu0 %1803
      %v1805 = vsel %vm1762, %v1760, 0.0
      %1806 = vadd.xlane.f32.xlu0 %v1805
      %v1807 = vpop.xlane.xlu0 %1806
      %v1808 = vsel %vm1762, %v1761, 0.0
      %1809 = vadd.xlane.f32.xlu0 %v1808
      %v1810 = vpop.xlane.xlu0 %1809
      %v1811 = vadd.f32 %v1765, 1e-12
      %v1812 = vadd.f32 %v1768, 1e-12
      %v1813 = vadd.f32 %v1771, 1e-12
      %v1814 = vadd.f32 %v1774, 1e-12
      %v1815 = vadd.f32 %v1777, 1e-12
      %v1816 = vadd.f32 %v1780, 1e-12
      %v1817 = vadd.f32 %v1783, 1e-12
      %v1818 = vadd.f32 %v1786, 1e-12
      %v1819 = vadd.f32 %v1789, 1e-12
      %v1820 = vadd.f32 %v1792, 1e-12
      %v1821 = vadd.f32 %v1795, 1e-12
      %v1822 = vadd.f32 %v1798, 1e-12
      %v1823 = vadd.f32 %v1801, 1e-12
      %v1824 = vadd.f32 %v1804, 1e-12
      %v1825 = vadd.f32 %v1807, 1e-12
      %v1826 = vadd.f32 %v1810, 1e-12
      %v1827 = vrsqrt.pop %v1811
      %v1828 = vmul.f32 %v1827, %v1811
      %v1829 = vmul.f32 %v1828, %v1827
      %v1830 = vmul.f32 0.5, %v1829
      %v1831 = vsub.f32 1.5, %v1830
      %v1832 = vmul.f32 %v1827, %v1831
      %vm1833 = vweird.f32 %v1811
      %vm1834 = vweird.f32 %v1827
      %vm1835 = vmor %vm1833, %vm1834
      %v1836 = vsel %vm1835, %v1827, %v1832
      %v1837 = vrsqrt.pop %v1812
      %v1838 = vmul.f32 %v1837, %v1812
      %v1839 = vmul.f32 %v1838, %v1837
      %v1840 = vmul.f32 0.5, %v1839
      %v1841 = vsub.f32 1.5, %v1840
      %v1842 = vmul.f32 %v1837, %v1841
      %vm1843 = vweird.f32 %v1812
      %vm1844 = vweird.f32 %v1837
      %vm1845 = vmor %vm1843, %vm1844
      %v1846 = vsel %vm1845, %v1837, %v1842
      %v1847 = vrsqrt.pop %v1813
      %v1848 = vmul.f32 %v1847, %v1813
      %v1849 = vmul.f32 %v1848, %v1847
      %v1850 = vmul.f32 0.5, %v1849
      %v1851 = vsub.f32 1.5, %v1850
      %v1852 = vmul.f32 %v1847, %v1851
      %vm1853 = vweird.f32 %v1813
      %vm1854 = vweird.f32 %v1847
      %vm1855 = vmor %vm1853, %vm1854
      %v1856 = vsel %vm1855, %v1847, %v1852
      %v1857 = vrsqrt.pop %v1814
      %v1858 = vmul.f32 %v1857, %v1814
      %v1859 = vmul.f32 %v1858, %v1857
      %v1860 = vmul.f32 0.5, %v1859
      %v1861 = vsub.f32 1.5, %v1860
      %v1862 = vmul.f32 %v1857, %v1861
      %vm1863 = vweird.f32 %v1814
      %vm1864 = vweird.f32 %v1857
      %vm1865 = vmor %vm1863, %vm1864
      %v1866 = vsel %vm1865, %v1857, %v1862
      %v1867 = vrsqrt.pop %v1815
      %v1868 = vmul.f32 %v1867, %v1815
      %v1869 = vmul.f32 %v1868, %v1867
      %v1870 = vmul.f32 0.5, %v1869
      %v1871 = vsub.f32 1.5, %v1870
      %v1872 = vmul.f32 %v1867, %v1871
      %vm1873 = vweird.f32 %v1815
      %vm1874 = vweird.f32 %v1867
      %vm1875 = vmor %vm1873, %vm1874
      %v1876 = vsel %vm1875, %v1867, %v1872
      %v1877 = vrsqrt.pop %v1816
      %v1878 = vmul.f32 %v1877, %v1816
      %v1879 = vmul.f32 %v1878, %v1877
      %v1880 = vmul.f32 0.5, %v1879
      %v1881 = vsub.f32 1.5, %v1880
      %v1882 = vmul.f32 %v1877, %v1881
      %vm1883 = vweird.f32 %v1816
      %vm1884 = vweird.f32 %v1877
      %vm1885 = vmor %vm1883, %vm1884
      %v1886 = vsel %vm1885, %v1877, %v1882
      %v1887 = vrsqrt.pop %v1817
      %v1888 = vmul.f32 %v1887, %v1817
      %v1889 = vmul.f32 %v1888, %v1887
      %v1890 = vmul.f32 0.5, %v1889
      %v1891 = vsub.f32 1.5, %v1890
      %v1892 = vmul.f32 %v1887, %v1891
      %vm1893 = vweird.f32 %v1817
      %vm1894 = vweird.f32 %v1887
      %vm1895 = vmor %vm1893, %vm1894
      %v1896 = vsel %vm1895, %v1887, %v1892
      %v1897 = vrsqrt.pop %v1818
      %v1898 = vmul.f32 %v1897, %v1818
      %v1899 = vmul.f32 %v1898, %v1897
      %v1900 = vmul.f32 0.5, %v1899
      %v1901 = vsub.f32 1.5, %v1900
      %v1902 = vmul.f32 %v1897, %v1901
      %vm1903 = vweird.f32 %v1818
      %vm1904 = vweird.f32 %v1897
      %vm1905 = vmor %vm1903, %vm1904
      %v1906 = vsel %vm1905, %v1897, %v1902
      %v1907 = vrsqrt.pop %v1819
      %v1908 = vmul.f32 %v1907, %v1819
      %v1909 = vmul.f32 %v1908, %v1907
      %v1910 = vmul.f32 0.5, %v1909
      %v1911 = vsub.f32 1.5, %v1910
      %v1912 = vmul.f32 %v1907, %v1911
      %vm1913 = vweird.f32 %v1819
      %vm1914 = vweird.f32 %v1907
      %vm1915 = vmor %vm1913, %vm1914
      %v1916 = vsel %vm1915, %v1907, %v1912
      %v1917 = vrsqrt.pop %v1820
      %v1918 = vmul.f32 %v1917, %v1820
      %v1919 = vmul.f32 %v1918, %v1917
      %v1920 = vmul.f32 0.5, %v1919
      %v1921 = vsub.f32 1.5, %v1920
      %v1922 = vmul.f32 %v1917, %v1921
      %vm1923 = vweird.f32 %v1820
      %vm1924 = vweird.f32 %v1917
      %vm1925 = vmor %vm1923, %vm1924
      %v1926 = vsel %vm1925, %v1917, %v1922
      %v1927 = vrsqrt.pop %v1821
      %v1928 = vmul.f32 %v1927, %v1821
      %v1929 = vmul.f32 %v1928, %v1927
      %v1930 = vmul.f32 0.5, %v1929
      %v1931 = vsub.f32 1.5, %v1930
      %v1932 = vmul.f32 %v1927, %v1931
      %vm1933 = vweird.f32 %v1821
      %vm1934 = vweird.f32 %v1927
      %vm1935 = vmor %vm1933, %vm1934
      %v1936 = vsel %vm1935, %v1927, %v1932
      %v1937 = vrsqrt.pop %v1822
      %v1938 = vmul.f32 %v1937, %v1822
      %v1939 = vmul.f32 %v1938, %v1937
      %v1940 = vmul.f32 0.5, %v1939
      %v1941 = vsub.f32 1.5, %v1940
      %v1942 = vmul.f32 %v1937, %v1941
      %vm1943 = vweird.f32 %v1822
      %vm1944 = vweird.f32 %v1937
      %vm1945 = vmor %vm1943, %vm1944
      %v1946 = vsel %vm1945, %v1937, %v1942
      %v1947 = vrsqrt.pop %v1823
      %v1948 = vmul.f32 %v1947, %v1823
      %v1949 = vmul.f32 %v1948, %v1947
      %v1950 = vmul.f32 0.5, %v1949
      %v1951 = vsub.f32 1.5, %v1950
      %v1952 = vmul.f32 %v1947, %v1951
      %vm1953 = vweird.f32 %v1823
      %vm1954 = vweird.f32 %v1947
      %vm1955 = vmor %vm1953, %vm1954
      %v1956 = vsel %vm1955, %v1947, %v1952
      %v1957 = vrsqrt.pop %v1824
      %v1958 = vmul.f32 %v1957, %v1824
      %v1959 = vmul.f32 %v1958, %v1957
      %v1960 = vmul.f32 0.5, %v1959
      %v1961 = vsub.f32 1.5, %v1960
      %v1962 = vmul.f32 %v1957, %v1961
      %vm1963 = vweird.f32 %v1824
      %vm1964 = vweird.f32 %v1957
      %vm1965 = vmor %vm1963, %vm1964
      %v1966 = vsel %vm1965, %v1957, %v1962
      %v1967 = vrsqrt.pop %v1825
      %v1968 = vmul.f32 %v1967, %v1825
      %v1969 = vmul.f32 %v1968, %v1967
      %v1970 = vmul.f32 0.5, %v1969
      %v1971 = vsub.f32 1.5, %v1970
      %v1972 = vmul.f32 %v1967, %v1971
      %vm1973 = vweird.f32 %v1825
      %vm1974 = vweird.f32 %v1967
      %vm1975 = vmor %vm1973, %vm1974
      %v1976 = vsel %vm1975, %v1967, %v1972
      %v1977 = vrsqrt.pop %v1826
      %v1978 = vmul.f32 %v1977, %v1826
      %v1979 = vmul.f32 %v1978, %v1977
      %v1980 = vmul.f32 0.5, %v1979
      %v1981 = vsub.f32 1.5, %v1980
      %v1982 = vmul.f32 %v1977, %v1981
      %vm1983 = vweird.f32 %v1826
      %vm1984 = vweird.f32 %v1977
      %vm1985 = vmor %vm1983, %vm1984
      %v1986 = vsel %vm1985, %v1977, %v1982
      %1987 = vst.msk [vmem:[%s343] sm:$0xff] %vm1762, %v1026
      %1988 = vst.msk [vmem:[%s343 + $0x8] sm:$0xff] %vm1762, %v1030
      %1989 = vst.msk [vmem:[%s343 + $0x10] sm:$0xff] %vm1762, %v1034
      %1990 = vst.msk [vmem:[%s343 + $0x18] sm:$0xff] %vm1762, %v1038
      %1991 = vst.msk [vmem:[%s343 + $0x20] sm:$0xff] %vm1762, %v1042
      %1992 = vst.msk [vmem:[%s343 + $0x28] sm:$0xff] %vm1762, %v1046
      %1993 = vst.msk [vmem:[%s343 + $0x30] sm:$0xff] %vm1762, %v1050
      %1994 = vst.msk [vmem:[%s343 + $0x38] sm:$0xff] %vm1762, %v1054
      %1995 = vst.msk [vmem:[%s343 + $0x40] sm:$0xff] %vm1762, %v1058
      %1996 = vst.msk [vmem:[%s343 + $0x48] sm:$0xff] %vm1762, %v1062
      %1997 = vst.msk [vmem:[%s343 + $0x50] sm:$0xff] %vm1762, %v1066
      %1998 = vst.msk [vmem:[%s343 + $0x58] sm:$0xff] %vm1762, %v1070
      %1999 = vst.msk [vmem:[%s343 + $0x60] sm:$0xff] %vm1762, %v1074
      %2000 = vst.msk [vmem:[%s343 + $0x68] sm:$0xff] %vm1762, %v1078
      %2001 = vst.msk [vmem:[%s343 + $0x70] sm:$0xff] %vm1762, %v1082
      %2002 = vst.msk [vmem:[%s343 + $0x78] sm:$0xff] %vm1762, %v1086
      %v2003 = vmul.f32 %v1026, %v1836
      %v2004 = vmul.f32 %v1030, %v1846
      %v2005 = vmul.f32 %v1034, %v1856
      %v2006 = vmul.f32 %v1038, %v1866
      %v2007 = vmul.f32 %v1042, %v1876
      %v2008 = vmul.f32 %v1046, %v1886
      %v2009 = vmul.f32 %v1050, %v1896
      %v2010 = vmul.f32 %v1054, %v1906
      %v2011 = vmul.f32 %v1058, %v1916
      %v2012 = vmul.f32 %v1062, %v1926
      %v2013 = vmul.f32 %v1066, %v1936
      %v2014 = vmul.f32 %v1070, %v1946
      %v2015 = vmul.f32 %v1074, %v1956
      %v2016 = vmul.f32 %v1078, %v1966
      %v2017 = vmul.f32 %v1082, %v1976
      %v2018 = vmul.f32 %v1086, %v1986
      %2019 = vst.msk [vmem:[%s353] sm:$0xff] %vm1762, %v2003
      %2020 = vst.msk [vmem:[%s353 + $0x8] sm:$0xff] %vm1762, %v2004
      %2021 = vst.msk [vmem:[%s353 + $0x10] sm:$0xff] %vm1762, %v2005
      %2022 = vst.msk [vmem:[%s353 + $0x18] sm:$0xff] %vm1762, %v2006
      %2023 = vst.msk [vmem:[%s353 + $0x20] sm:$0xff] %vm1762, %v2007
      %2024 = vst.msk [vmem:[%s353 + $0x28] sm:$0xff] %vm1762, %v2008
      %2025 = vst.msk [vmem:[%s353 + $0x30] sm:$0xff] %vm1762, %v2009
      %2026 = vst.msk [vmem:[%s353 + $0x38] sm:$0xff] %vm1762, %v2010
      %2027 = vst.msk [vmem:[%s353 + $0x40] sm:$0xff] %vm1762, %v2011
      %2028 = vst.msk [vmem:[%s353 + $0x48] sm:$0xff] %vm1762, %v2012
      %2029 = vst.msk [vmem:[%s353 + $0x50] sm:$0xff] %vm1762, %v2013
      %2030 = vst.msk [vmem:[%s353 + $0x58] sm:$0xff] %vm1762, %v2014
      %2031 = vst.msk [vmem:[%s353 + $0x60] sm:$0xff] %vm1762, %v2015
      %2032 = vst.msk [vmem:[%s353 + $0x68] sm:$0xff] %vm1762, %v2016
      %2033 = vst.msk [vmem:[%s353 + $0x70] sm:$0xff] %vm1762, %v2017
      %2034 = vst.msk [vmem:[%s353 + $0x78] sm:$0xff] %vm1762, %v2018
      %2035 = vst.msk [vmem:[%s363] sm:$0xff] %vm1762, %v1684
      %2036 = vst.msk [vmem:[%s363 + $0x8] sm:$0xff] %vm1762, %v1688
      %2037 = vst.msk [vmem:[%s363 + $0x10] sm:$0xff] %vm1762, %v1692
      %2038 = vst.msk [vmem:[%s363 + $0x18] sm:$0xff] %vm1762, %v1696
      %2039 = vst.msk [vmem:[%s363 + $0x20] sm:$0xff] %vm1762, %v1700
      %2040 = vst.msk [vmem:[%s363 + $0x28] sm:$0xff] %vm1762, %v1704
      %2041 = vst.msk [vmem:[%s363 + $0x30] sm:$0xff] %vm1762, %v1708
      %2042 = vst.msk [vmem:[%s363 + $0x38] sm:$0xff] %vm1762, %v1712
      %2043 = vst.msk [vmem:[%s363 + $0x40] sm:$0xff] %vm1762, %v1716
      %2044 = vst.msk [vmem:[%s363 + $0x48] sm:$0xff] %vm1762, %v1720
      %2045 = vst.msk [vmem:[%s363 + $0x50] sm:$0xff] %vm1762, %v1724
      %2046 = vst.msk [vmem:[%s363 + $0x58] sm:$0xff] %vm1762, %v1728
      %2047 = vst.msk [vmem:[%s363 + $0x60] sm:$0xff] %vm1762, %v1732
      %2048 = vst.msk [vmem:[%s363 + $0x68] sm:$0xff] %vm1762, %v1736
      %2049 = vst.msk [vmem:[%s363 + $0x70] sm:$0xff] %vm1762, %v1740
      %2050 = vst.msk [vmem:[%s363 + $0x78] sm:$0xff] %vm1762, %v1744
      %s2051 = scalar_lea.vmem %s1, 32
      %v2052 = vld [vmem:[%s2051] sm:$0xff]
      %v2053 = vld [vmem:[%s2051 + $0x8] sm:$0xff]
      %v2054 = vld [vmem:[%s2051 + $0x10] sm:$0xff]
      %v2055 = vld [vmem:[%s2051 + $0x18] sm:$0xff]
      %s2056 = scalar_lea.vmem %s2, 1
      %v2057 = vld [vmem:[%s2056] sm:$0x1]
      %v2059 = vperm.slane %v2057, 0
      %2061 = vmatpush.msra.mxu0 0.0
      %2062 = vmatpush.msra.mxu0 0.0
      %2063 = vmatpush.msra.mxu0 0.0
      %2064 = vmatpush.msra.mxu0 0.0
      %2065 = vmatpush.msra.mxu0 0.0
      %2066 = vmatpush.msra.mxu0 0.0
      %2067 = vmatpush.msra.mxu0 0.0
      %2068 = vmatpush.msra.mxu0 0.0
      %2069 = vmatpush.msra.mxu0 0.0
      %2070 = vmatpush.msra.mxu0 0.0
      %2071 = vmatpush.msra.mxu0 0.0
      %2072 = vmatpush.msra.mxu0 0.0
      %v2073 = vand.u32 %v2055, 4294901760
      %2074 = vmatpush.msra.mxu0 %v2073
      %v2075 = vand.u32 %v2054, 4294901760
      %2076 = vmatpush.msra.mxu0 %v2075
      %v2077 = vand.u32 %v2053, 4294901760
      %2078 = vmatpush.msra.mxu0 %v2077
      %v2079 = vand.u32 %v2052, 4294901760
      %2080 = vmatpush.msra.mxu0 %v2079
      %v2081 = vand.u32 %v391, 4294901760
      %v2082 = vsub.f32 %v391, %v2081
      %v2083 = vand.u32 %v2082, 4294901760
      %v2084 = vsub.f32 %v2082, %v2083
      %v2085 = vand.u32 %v2084, 4294901760
      %2086 = vmatmul.f32.gmra.mxu0 %v2085
      %v2087 = vpop.f32.mrf.mxu0
      %v2088 = vadd.f32 %v2059, %v2087
      %v2089 = vand.u32 %v394, 4294901760
      %v2090 = vsub.f32 %v394, %v2089
      %v2091 = vand.u32 %v2090, 4294901760
      %v2092 = vsub.f32 %v2090, %v2091
      %v2093 = vand.u32 %v2092, 4294901760
      %2094 = vmatmul.f32.gmra.mxu0 %v2093
      %v2095 = vpop.f32.mrf.mxu0
      %v2096 = vadd.f32 %v2059, %v2095
      %v2097 = vand.u32 %v397, 4294901760
      %v2098 = vsub.f32 %v397, %v2097
      %v2099 = vand.u32 %v2098, 4294901760
      %v2100 = vsub.f32 %v2098, %v2099
      %v2101 = vand.u32 %v2100, 4294901760
      %2102 = vmatmul.f32.gmra.mxu0 %v2101
      %v2103 = vpop.f32.mrf.mxu0
      %v2104 = vadd.f32 %v2059, %v2103
      %v2105 = vand.u32 %v400, 4294901760
      %v2106 = vsub.f32 %v400, %v2105
      %v2107 = vand.u32 %v2106, 4294901760
      %v2108 = vsub.f32 %v2106, %v2107
      %v2109 = vand.u32 %v2108, 4294901760
      %2110 = vmatmul.f32.gmra.mxu0 %v2109
      %v2111 = vpop.f32.mrf.mxu0
      %v2112 = vadd.f32 %v2059, %v2111
      %v2113 = vand.u32 %v403, 4294901760
      %v2114 = vsub.f32 %v403, %v2113
      %v2115 = vand.u32 %v2114, 4294901760
      %v2116 = vsub.f32 %v2114, %v2115
      %v2117 = vand.u32 %v2116, 4294901760
      %2118 = vmatmul.f32.gmra.mxu0 %v2117
      %v2119 = vpop.f32.mrf.mxu0
      %v2120 = vadd.f32 %v2059, %v2119
      %v2121 = vand.u32 %v406, 4294901760
      %v2122 = vsub.f32 %v406, %v2121
      %v2123 = vand.u32 %v2122, 4294901760
      %v2124 = vsub.f32 %v2122, %v2123
      %v2125 = vand.u32 %v2124, 4294901760
      %2126 = vmatmul.f32.gmra.mxu0 %v2125
      %v2127 = vpop.f32.mrf.mxu0
      %v2128 = vadd.f32 %v2059, %v2127
      %v2129 = vand.u32 %v409, 4294901760
      %v2130 = vsub.f32 %v409, %v2129
      %v2131 = vand.u32 %v2130, 4294901760
      %v2132 = vsub.f32 %v2130, %v2131
      %v2133 = vand.u32 %v2132, 4294901760
      %2134 = vmatmul.f32.gmra.mxu0 %v2133
      %v2135 = vpop.f32.mrf.mxu0
      %v2136 = vadd.f32 %v2059, %v2135
      %v2137 = vand.u32 %v412, 4294901760
      %v2138 = vsub.f32 %v412, %v2137
      %v2139 = vand.u32 %v2138, 4294901760
      %v2140 = vsub.f32 %v2138, %v2139
      %v2141 = vand.u32 %v2140, 4294901760
      %2142 = vmatmul.f32.gmra.mxu0 %v2141
      %v2143 = vpop.f32.mrf.mxu0
      %v2144 = vadd.f32 %v2059, %v2143
      %v2145 = vand.u32 %v415, 4294901760
      %v2146 = vsub.f32 %v415, %v2145
      %v2147 = vand.u32 %v2146, 4294901760
      %v2148 = vsub.f32 %v2146, %v2147
      %v2149 = vand.u32 %v2148, 4294901760
      %2150 = vmatmul.f32.gmra.mxu0 %v2149
      %v2151 = vpop.f32.mrf.mxu0
      %v2152 = vadd.f32 %v2059, %v2151
      %v2153 = vand.u32 %v418, 4294901760
      %v2154 = vsub.f32 %v418, %v2153
      %v2155 = vand.u32 %v2154, 4294901760
      %v2156 = vsub.f32 %v2154, %v2155
      %v2157 = vand.u32 %v2156, 4294901760
      %2158 = vmatmul.f32.gmra.mxu0 %v2157
      %v2159 = vpop.f32.mrf.mxu0
      %v2160 = vadd.f32 %v2059, %v2159
      %v2161 = vand.u32 %v421, 4294901760
      %v2162 = vsub.f32 %v421, %v2161
      %v2163 = vand.u32 %v2162, 4294901760
      %v2164 = vsub.f32 %v2162, %v2163
      %v2165 = vand.u32 %v2164, 4294901760
      %2166 = vmatmul.f32.gmra.mxu0 %v2165
      %v2167 = vpop.f32.mrf.mxu0
      %v2168 = vadd.f32 %v2059, %v2167
      %v2169 = vand.u32 %v424, 4294901760
      %v2170 = vsub.f32 %v424, %v2169
      %v2171 = vand.u32 %v2170, 4294901760
      %v2172 = vsub.f32 %v2170, %v2171
      %v2173 = vand.u32 %v2172, 4294901760
      %2174 = vmatmul.f32.gmra.mxu0 %v2173
      %v2175 = vpop.f32.mrf.mxu0
      %v2176 = vadd.f32 %v2059, %v2175
      %v2177 = vand.u32 %v427, 4294901760
      %v2178 = vsub.f32 %v427, %v2177
      %v2179 = vand.u32 %v2178, 4294901760
      %v2180 = vsub.f32 %v2178, %v2179
      %v2181 = vand.u32 %v2180, 4294901760
      %2182 = vmatmul.f32.gmra.mxu0 %v2181
      %v2183 = vpop.f32.mrf.mxu0
      %v2184 = vadd.f32 %v2059, %v2183
      %v2185 = vand.u32 %v430, 4294901760
      %v2186 = vsub.f32 %v430, %v2185
      %v2187 = vand.u32 %v2186, 4294901760
      %v2188 = vsub.f32 %v2186, %v2187
      %v2189 = vand.u32 %v2188, 4294901760
      %2190 = vmatmul.f32.gmra.mxu0 %v2189
      %v2191 = vpop.f32.mrf.mxu0
      %v2192 = vadd.f32 %v2059, %v2191
      %v2193 = vand.u32 %v433, 4294901760
      %v2194 = vsub.f32 %v433, %v2193
      %v2195 = vand.u32 %v2194, 4294901760
      %v2196 = vsub.f32 %v2194, %v2195
      %v2197 = vand.u32 %v2196, 4294901760
      %2198 = vmatmul.f32.gmra.mxu0 %v2197
      %v2199 = vpop.f32.mrf.mxu0
      %v2200 = vadd.f32 %v2059, %v2199
      %v2201 = vand.u32 %v436, 4294901760
      %v2202 = vsub.f32 %v436, %v2201
      %v2203 = vand.u32 %v2202, 4294901760
      %v2204 = vsub.f32 %v2202, %v2203
      %v2205 = vand.u32 %v2204, 4294901760
      %2206 = vmatmul.f32.gmra.mxu0 %v2205
      %v2207 = vpop.f32.mrf.mxu0
      %v2208 = vadd.f32 %v2059, %v2207
      %2209 = vdwg.mxu0
      %2210 = vmatpush.msra.mxu0 0.0
      %2211 = vmatpush.msra.mxu0 0.0
      %2212 = vmatpush.msra.mxu0 0.0
      %2213 = vmatpush.msra.mxu0 0.0
      %2214 = vmatpush.msra.mxu0 0.0
      %2215 = vmatpush.msra.mxu0 0.0
      %2216 = vmatpush.msra.mxu0 0.0
      %2217 = vmatpush.msra.mxu0 0.0
      %2218 = vmatpush.msra.mxu0 0.0
      %2219 = vmatpush.msra.mxu0 0.0
      %2220 = vmatpush.msra.mxu0 0.0
      %2221 = vmatpush.msra.mxu0 0.0
      %v2222 = vand.u32 %v2055, 4294901760
      %v2223 = vsub.f32 %v2055, %v2222
      %v2224 = vand.u32 %v2223, 4294901760
      %v2225 = vsub.f32 %v2223, %v2224
      %v2226 = vand.u32 %v2225, 4294901760
      %2227 = vmatpush.msra.mxu0 %v2226
      %v2228 = vand.u32 %v2054, 4294901760
      %v2229 = vsub.f32 %v2054, %v2228
      %v2230 = vand.u32 %v2229, 4294901760
      %v2231 = vsub.f32 %v2229, %v2230
      %v2232 = vand.u32 %v2231, 4294901760
      %2233 = vmatpush.msra.mxu0 %v2232
      %v2234 = vand.u32 %v2053, 4294901760
      %v2235 = vsub.f32 %v2053, %v2234
      %v2236 = vand.u32 %v2235, 4294901760
      %v2237 = vsub.f32 %v2235, %v2236
      %v2238 = vand.u32 %v2237, 4294901760
      %2239 = vmatpush.msra.mxu0 %v2238
      %v2240 = vand.u32 %v2052, 4294901760
      %v2241 = vsub.f32 %v2052, %v2240
      %v2242 = vand.u32 %v2241, 4294901760
      %v2243 = vsub.f32 %v2241, %v2242
      %v2244 = vand.u32 %v2243, 4294901760
      %2245 = vmatpush.msra.mxu0 %v2244
      %v2246 = vand.u32 %v391, 4294901760
      %2247 = vmatmul.f32.gmra.mxu0 %v2246
      %v2248 = vpop.f32.mrf.mxu0
      %v2249 = vadd.f32 %v2088, %v2248
      %v2250 = vand.u32 %v394, 4294901760
      %2251 = vmatmul.f32.gmra.mxu0 %v2250
      %v2252 = vpop.f32.mrf.mxu0
      %v2253 = vadd.f32 %v2096, %v2252
      %v2254 = vand.u32 %v397, 4294901760
      %2255 = vmatmul.f32.gmra.mxu0 %v2254
      %v2256 = vpop.f32.mrf.mxu0
      %v2257 = vadd.f32 %v2104, %v2256
      %v2258 = vand.u32 %v400, 4294901760
      %2259 = vmatmul.f32.gmra.mxu0 %v2258
      %v2260 = vpop.f32.mrf.mxu0
      %v2261 = vadd.f32 %v2112, %v2260
      %v2262 = vand.u32 %v403, 4294901760
      %2263 = vmatmul.f32.gmra.mxu0 %v2262
      %v2264 = vpop.f32.mrf.mxu0
      %v2265 = vadd.f32 %v2120, %v2264
      %v2266 = vand.u32 %v406, 4294901760
      %2267 = vmatmul.f32.gmra.mxu0 %v2266
      %v2268 = vpop.f32.mrf.mxu0
      %v2269 = vadd.f32 %v2128, %v2268
      %v2270 = vand.u32 %v409, 4294901760
      %2271 = vmatmul.f32.gmra.mxu0 %v2270
      %v2272 = vpop.f32.mrf.mxu0
      %v2273 = vadd.f32 %v2136, %v2272
      %v2274 = vand.u32 %v412, 4294901760
      %2275 = vmatmul.f32.gmra.mxu0 %v2274
      %v2276 = vpop.f32.mrf.mxu0
      %v2277 = vadd.f32 %v2144, %v2276
      %v2278 = vand.u32 %v415, 4294901760
      %2279 = vmatmul.f32.gmra.mxu0 %v2278
      %v2280 = vpop.f32.mrf.mxu0
      %v2281 = vadd.f32 %v2152, %v2280
      %v2282 = vand.u32 %v418, 4294901760
      %2283 = vmatmul.f32.gmra.mxu0 %v2282
      %v2284 = vpop.f32.mrf.mxu0
      %v2285 = vadd.f32 %v2160, %v2284
      %v2286 = vand.u32 %v421, 4294901760
      %2287 = vmatmul.f32.gmra.mxu0 %v2286
      %v2288 = vpop.f32.mrf.mxu0
      %v2289 = vadd.f32 %v2168, %v2288
      %v2290 = vand.u32 %v424, 4294901760
      %2291 = vmatmul.f32.gmra.mxu0 %v2290
      %v2292 = vpop.f32.mrf.mxu0
      %v2293 = vadd.f32 %v2176, %v2292
      %v2294 = vand.u32 %v427, 4294901760
      %2295 = vmatmul.f32.gmra.mxu0 %v2294
      %v2296 = vpop.f32.mrf.mxu0
      %v2297 = vadd.f32 %v2184, %v2296
      %v2298 = vand.u32 %v430, 4294901760
      %2299 = vmatmul.f32.gmra.mxu0 %v2298
      %v2300 = vpop.f32.mrf.mxu0
      %v2301 = vadd.f32 %v2192, %v2300
      %v2302 = vand.u32 %v433, 4294901760
      %2303 = vmatmul.f32.gmra.mxu0 %v2302
      %v2304 = vpop.f32.mrf.mxu0
      %v2305 = vadd.f32 %v2200, %v2304
      %v2306 = vand.u32 %v436, 4294901760
      %2307 = vmatmul.f32.gmra.mxu0 %v2306
      %v2308 = vpop.f32.mrf.mxu0
      %v2309 = vadd.f32 %v2208, %v2308
      %2310 = vdwg.mxu0
      %2311 = vmatpush.msra.mxu0 0.0
      %2312 = vmatpush.msra.mxu0 0.0
      %2313 = vmatpush.msra.mxu0 0.0
      %2314 = vmatpush.msra.mxu0 0.0
      %2315 = vmatpush.msra.mxu0 0.0
      %2316 = vmatpush.msra.mxu0 0.0
      %2317 = vmatpush.msra.mxu0 0.0
      %2318 = vmatpush.msra.mxu0 0.0
      %2319 = vmatpush.msra.mxu0 0.0
      %2320 = vmatpush.msra.mxu0 0.0
      %2321 = vmatpush.msra.mxu0 0.0
      %2322 = vmatpush.msra.mxu0 0.0
      %v2323 = vand.u32 %v2055, 4294901760
      %v2324 = vsub.f32 %v2055, %v2323
      %2325 = vmatpush.msra.mxu0 %v2324
      %v2326 = vand.u32 %v2054, 4294901760
      %v2327 = vsub.f32 %v2054, %v2326
      %2328 = vmatpush.msra.mxu0 %v2327
      %v2329 = vand.u32 %v2053, 4294901760
      %v2330 = vsub.f32 %v2053, %v2329
      %2331 = vmatpush.msra.mxu0 %v2330
      %v2332 = vand.u32 %v2052, 4294901760
      %v2333 = vsub.f32 %v2052, %v2332
      %2334 = vmatpush.msra.mxu0 %v2333
      %v2335 = vand.u32 %v391, 4294901760
      %v2336 = vsub.f32 %v391, %v2335
      %2337 = vmatmul.f32.gmra.mxu0 %v2336
      %v2338 = vpop.f32.mrf.mxu0
      %v2339 = vadd.f32 %v2249, %v2338
      %v2340 = vand.u32 %v394, 4294901760
      %v2341 = vsub.f32 %v394, %v2340
      %2342 = vmatmul.f32.gmra.mxu0 %v2341
      %v2343 = vpop.f32.mrf.mxu0
      %v2344 = vadd.f32 %v2253, %v2343
      %v2345 = vand.u32 %v397, 4294901760
      %v2346 = vsub.f32 %v397, %v2345
      %2347 = vmatmul.f32.gmra.mxu0 %v2346
      %v2348 = vpop.f32.mrf.mxu0
      %v2349 = vadd.f32 %v2257, %v2348
      %v2350 = vand.u32 %v400, 4294901760
      %v2351 = vsub.f32 %v400, %v2350
      %2352 = vmatmul.f32.gmra.mxu0 %v2351
      %v2353 = vpop.f32.mrf.mxu0
      %v2354 = vadd.f32 %v2261, %v2353
      %v2355 = vand.u32 %v403, 4294901760
      %v2356 = vsub.f32 %v403, %v2355
      %2357 = vmatmul.f32.gmra.mxu0 %v2356
      %v2358 = vpop.f32.mrf.mxu0
      %v2359 = vadd.f32 %v2265, %v2358
      %v2360 = vand.u32 %v406, 4294901760
      %v2361 = vsub.f32 %v406, %v2360
      %2362 = vmatmul.f32.gmra.mxu0 %v2361
      %v2363 = vpop.f32.mrf.mxu0
      %v2364 = vadd.f32 %v2269, %v2363
      %v2365 = vand.u32 %v409, 4294901760
      %v2366 = vsub.f32 %v409, %v2365
      %2367 = vmatmul.f32.gmra.mxu0 %v2366
      %v2368 = vpop.f32.mrf.mxu0
      %v2369 = vadd.f32 %v2273, %v2368
      %v2370 = vand.u32 %v412, 4294901760
      %v2371 = vsub.f32 %v412, %v2370
      %2372 = vmatmul.f32.gmra.mxu0 %v2371
      %v2373 = vpop.f32.mrf.mxu0
      %v2374 = vadd.f32 %v2277, %v2373
      %v2375 = vand.u32 %v415, 4294901760
      %v2376 = vsub.f32 %v415, %v2375
      %2377 = vmatmul.f32.gmra.mxu0 %v2376
      %v2378 = vpop.f32.mrf.mxu0
      %v2379 = vadd.f32 %v2281, %v2378
      %v2380 = vand.u32 %v418, 4294901760
      %v2381 = vsub.f32 %v418, %v2380
      %2382 = vmatmul.f32.gmra.mxu0 %v2381
      %v2383 = vpop.f32.mrf.mxu0
      %v2384 = vadd.f32 %v2285, %v2383
      %v2385 = vand.u32 %v421, 4294901760
      %v2386 = vsub.f32 %v421, %v2385
      %2387 = vmatmul.f32.gmra.mxu0 %v2386
      %v2388 = vpop.f32.mrf.mxu0
      %v2389 = vadd.f32 %v2289, %v2388
      %v2390 = vand.u32 %v424, 4294901760
      %v2391 = vsub.f32 %v424, %v2390
      %2392 = vmatmul.f32.gmra.mxu0 %v2391
      %v2393 = vpop.f32.mrf.mxu0
      %v2394 = vadd.f32 %v2293, %v2393
      %v2395 = vand.u32 %v427, 4294901760
      %v2396 = vsub.f32 %v427, %v2395
      %2397 = vmatmul.f32.gmra.mxu0 %v2396
      %v2398 = vpop.f32.mrf.mxu0
      %v2399 = vadd.f32 %v2297, %v2398
      %v2400 = vand.u32 %v430, 4294901760
      %v2401 = vsub.f32 %v430, %v2400
      %2402 = vmatmul.f32.gmra.mxu0 %v2401
      %v2403 = vpop.f32.mrf.mxu0
      %v2404 = vadd.f32 %v2301, %v2403
      %v2405 = vand.u32 %v433, 4294901760
      %v2406 = vsub.f32 %v433, %v2405
      %2407 = vmatmul.f32.gmra.mxu0 %v2406
      %v2408 = vpop.f32.mrf.mxu0
      %v2409 = vadd.f32 %v2305, %v2408
      %v2410 = vand.u32 %v436, 4294901760
      %v2411 = vsub.f32 %v436, %v2410
      %2412 = vmatmul.f32.gmra.mxu0 %v2411
      %v2413 = vpop.f32.mrf.mxu0
      %v2414 = vadd.f32 %v2309, %v2413
      %2415 = vdwg.mxu0
      %2416 = vmatpush.msra.mxu0 0.0
      %2417 = vmatpush.msra.mxu0 0.0
      %2418 = vmatpush.msra.mxu0 0.0
      %2419 = vmatpush.msra.mxu0 0.0
      %2420 = vmatpush.msra.mxu0 0.0
      %2421 = vmatpush.msra.mxu0 0.0
      %2422 = vmatpush.msra.mxu0 0.0
      %2423 = vmatpush.msra.mxu0 0.0
      %2424 = vmatpush.msra.mxu0 0.0
      %2425 = vmatpush.msra.mxu0 0.0
      %2426 = vmatpush.msra.mxu0 0.0
      %2427 = vmatpush.msra.mxu0 0.0
      %v2428 = vand.u32 %v2055, 4294901760
      %2429 = vmatpush.msra.mxu0 %v2428
      %v2430 = vand.u32 %v2054, 4294901760
      %2431 = vmatpush.msra.mxu0 %v2430
      %v2432 = vand.u32 %v2053, 4294901760
      %2433 = vmatpush.msra.mxu0 %v2432
      %v2434 = vand.u32 %v2052, 4294901760
      %2435 = vmatpush.msra.mxu0 %v2434
      %v2436 = vand.u32 %v391, 4294901760
      %v2437 = vsub.f32 %v391, %v2436
      %v2438 = vand.u32 %v2437, 4294901760
      %2439 = vmatmul.f32.gmra.mxu0 %v2438
      %v2440 = vpop.f32.mrf.mxu0
      %v2441 = vadd.f32 %v2339, %v2440
      %v2442 = vand.u32 %v394, 4294901760
      %v2443 = vsub.f32 %v394, %v2442
      %v2444 = vand.u32 %v2443, 4294901760
      %2445 = vmatmul.f32.gmra.mxu0 %v2444
      %v2446 = vpop.f32.mrf.mxu0
      %v2447 = vadd.f32 %v2344, %v2446
      %v2448 = vand.u32 %v397, 4294901760
      %v2449 = vsub.f32 %v397, %v2448
      %v2450 = vand.u32 %v2449, 4294901760
      %2451 = vmatmul.f32.gmra.mxu0 %v2450
      %v2452 = vpop.f32.mrf.mxu0
      %v2453 = vadd.f32 %v2349, %v2452
      %v2454 = vand.u32 %v400, 4294901760
      %v2455 = vsub.f32 %v400, %v2454
      %v2456 = vand.u32 %v2455, 4294901760
      %2457 = vmatmul.f32.gmra.mxu0 %v2456
      %v2458 = vpop.f32.mrf.mxu0
      %v2459 = vadd.f32 %v2354, %v2458
      %v2460 = vand.u32 %v403, 4294901760
      %v2461 = vsub.f32 %v403, %v2460
      %v2462 = vand.u32 %v2461, 4294901760
      %2463 = vmatmul.f32.gmra.mxu0 %v2462
      %v2464 = vpop.f32.mrf.mxu0
      %v2465 = vadd.f32 %v2359, %v2464
      %v2466 = vand.u32 %v406, 4294901760
      %v2467 = vsub.f32 %v406, %v2466
      %v2468 = vand.u32 %v2467, 4294901760
      %2469 = vmatmul.f32.gmra.mxu0 %v2468
      %v2470 = vpop.f32.mrf.mxu0
      %v2471 = vadd.f32 %v2364, %v2470
      %v2472 = vand.u32 %v409, 4294901760
      %v2473 = vsub.f32 %v409, %v2472
      %v2474 = vand.u32 %v2473, 4294901760
      %2475 = vmatmul.f32.gmra.mxu0 %v2474
      %v2476 = vpop.f32.mrf.mxu0
      %v2477 = vadd.f32 %v2369, %v2476
      %v2478 = vand.u32 %v412, 4294901760
      %v2479 = vsub.f32 %v412, %v2478
      %v2480 = vand.u32 %v2479, 4294901760
      %2481 = vmatmul.f32.gmra.mxu0 %v2480
      %v2482 = vpop.f32.mrf.mxu0
      %v2483 = vadd.f32 %v2374, %v2482
      %v2484 = vand.u32 %v415, 4294901760
      %v2485 = vsub.f32 %v415, %v2484
      %v2486 = vand.u32 %v2485, 4294901760
      %2487 = vmatmul.f32.gmra.mxu0 %v2486
      %v2488 = vpop.f32.mrf.mxu0
      %v2489 = vadd.f32 %v2379, %v2488
      %v2490 = vand.u32 %v418, 4294901760
      %v2491 = vsub.f32 %v418, %v2490
      %v2492 = vand.u32 %v2491, 4294901760
      %2493 = vmatmul.f32.gmra.mxu0 %v2492
      %v2494 = vpop.f32.mrf.mxu0
      %v2495 = vadd.f32 %v2384, %v2494
      %v2496 = vand.u32 %v421, 4294901760
      %v2497 = vsub.f32 %v421, %v2496
      %v2498 = vand.u32 %v2497, 4294901760
      %2499 = vmatmul.f32.gmra.mxu0 %v2498
      %v2500 = vpop.f32.mrf.mxu0
      %v2501 = vadd.f32 %v2389, %v2500
      %v2502 = vand.u32 %v424, 4294901760
      %v2503 = vsub.f32 %v424, %v2502
      %v2504 = vand.u32 %v2503, 4294901760
      %2505 = vmatmul.f32.gmra.mxu0 %v2504
      %v2506 = vpop.f32.mrf.mxu0
      %v2507 = vadd.f32 %v2394, %v2506
      %v2508 = vand.u32 %v427, 4294901760
      %v2509 = vsub.f32 %v427, %v2508
      %v2510 = vand.u32 %v2509, 4294901760
      %2511 = vmatmul.f32.gmra.mxu0 %v2510
      %v2512 = vpop.f32.mrf.mxu0
      %v2513 = vadd.f32 %v2399, %v2512
      %v2514 = vand.u32 %v430, 4294901760
      %v2515 = vsub.f32 %v430, %v2514
      %v2516 = vand.u32 %v2515, 4294901760
      %2517 = vmatmul.f32.gmra.mxu0 %v2516
      %v2518 = vpop.f32.mrf.mxu0
      %v2519 = vadd.f32 %v2404, %v2518
      %v2520 = vand.u32 %v433, 4294901760
      %v2521 = vsub.f32 %v433, %v2520
      %v2522 = vand.u32 %v2521, 4294901760
      %2523 = vmatmul.f32.gmra.mxu0 %v2522
      %v2524 = vpop.f32.mrf.mxu0
      %v2525 = vadd.f32 %v2409, %v2524
      %v2526 = vand.u32 %v436, 4294901760
      %v2527 = vsub.f32 %v436, %v2526
      %v2528 = vand.u32 %v2527, 4294901760
      %2529 = vmatmul.f32.gmra.mxu0 %v2528
      %v2530 = vpop.f32.mrf.mxu0
      %v2531 = vadd.f32 %v2414, %v2530
      %2532 = vdwg.mxu0
      %2533 = vmatpush.msra.mxu0 0.0
      %2534 = vmatpush.msra.mxu0 0.0
      %2535 = vmatpush.msra.mxu0 0.0
      %2536 = vmatpush.msra.mxu0 0.0
      %2537 = vmatpush.msra.mxu0 0.0
      %2538 = vmatpush.msra.mxu0 0.0
      %2539 = vmatpush.msra.mxu0 0.0
      %2540 = vmatpush.msra.mxu0 0.0
      %2541 = vmatpush.msra.mxu0 0.0
      %2542 = vmatpush.msra.mxu0 0.0
      %2543 = vmatpush.msra.mxu0 0.0
      %2544 = vmatpush.msra.mxu0 0.0
      %v2545 = vand.u32 %v2055, 4294901760
      %v2546 = vsub.f32 %v2055, %v2545
      %v2547 = vand.u32 %v2546, 4294901760
      %2548 = vmatpush.msra.mxu0 %v2547
      %v2549 = vand.u32 %v2054, 4294901760
      %v2550 = vsub.f32 %v2054, %v2549
      %v2551 = vand.u32 %v2550, 4294901760
      %2552 = vmatpush.msra.mxu0 %v2551
      %v2553 = vand.u32 %v2053, 4294901760
      %v2554 = vsub.f32 %v2053, %v2553
      %v2555 = vand.u32 %v2554, 4294901760
      %2556 = vmatpush.msra.mxu0 %v2555
      %v2557 = vand.u32 %v2052, 4294901760
      %v2558 = vsub.f32 %v2052, %v2557
      %v2559 = vand.u32 %v2558, 4294901760
      %2560 = vmatpush.msra.mxu0 %v2559
      %v2561 = vand.u32 %v391, 4294901760
      %2562 = vmatmul.f32.gmra.mxu0 %v2561
      %v2563 = vpop.f32.mrf.mxu0
      %v2564 = vadd.f32 %v2441, %v2563
      %v2565 = vand.u32 %v394, 4294901760
      %2566 = vmatmul.f32.gmra.mxu0 %v2565
      %v2567 = vpop.f32.mrf.mxu0
      %v2568 = vadd.f32 %v2447, %v2567
      %v2569 = vand.u32 %v397, 4294901760
      %2570 = vmatmul.f32.gmra.mxu0 %v2569
      %v2571 = vpop.f32.mrf.mxu0
      %v2572 = vadd.f32 %v2453, %v2571
      %v2573 = vand.u32 %v400, 4294901760
      %2574 = vmatmul.f32.gmra.mxu0 %v2573
      %v2575 = vpop.f32.mrf.mxu0
      %v2576 = vadd.f32 %v2459, %v2575
      %v2577 = vand.u32 %v403, 4294901760
      %2578 = vmatmul.f32.gmra.mxu0 %v2577
      %v2579 = vpop.f32.mrf.mxu0
      %v2580 = vadd.f32 %v2465, %v2579
      %v2581 = vand.u32 %v406, 4294901760
      %2582 = vmatmul.f32.gmra.mxu0 %v2581
      %v2583 = vpop.f32.mrf.mxu0
      %v2584 = vadd.f32 %v2471, %v2583
      %v2585 = vand.u32 %v409, 4294901760
      %2586 = vmatmul.f32.gmra.mxu0 %v2585
      %v2587 = vpop.f32.mrf.mxu0
      %v2588 = vadd.f32 %v2477, %v2587
      %v2589 = vand.u32 %v412, 4294901760
      %2590 = vmatmul.f32.gmra.mxu0 %v2589
      %v2591 = vpop.f32.mrf.mxu0
      %v2592 = vadd.f32 %v2483, %v2591
      %v2593 = vand.u32 %v415, 4294901760
      %2594 = vmatmul.f32.gmra.mxu0 %v2593
      %v2595 = vpop.f32.mrf.mxu0
      %v2596 = vadd.f32 %v2489, %v2595
      %v2597 = vand.u32 %v418, 4294901760
      %2598 = vmatmul.f32.gmra.mxu0 %v2597
      %v2599 = vpop.f32.mrf.mxu0
      %v2600 = vadd.f32 %v2495, %v2599
      %v2601 = vand.u32 %v421, 4294901760
      %2602 = vmatmul.f32.gmra.mxu0 %v2601
      %v2603 = vpop.f32.mrf.mxu0
      %v2604 = vadd.f32 %v2501, %v2603
      %v2605 = vand.u32 %v424, 4294901760
      %2606 = vmatmul.f32.gmra.mxu0 %v2605
      %v2607 = vpop.f32.mrf.mxu0
      %v2608 = vadd.f32 %v2507, %v2607
      %v2609 = vand.u32 %v427, 4294901760
      %2610 = vmatmul.f32.gmra.mxu0 %v2609
      %v2611 = vpop.f32.mrf.mxu0
      %v2612 = vadd.f32 %v2513, %v2611
      %v2613 = vand.u32 %v430, 4294901760
      %2614 = vmatmul.f32.gmra.mxu0 %v2613
      %v2615 = vpop.f32.mrf.mxu0
      %v2616 = vadd.f32 %v2519, %v2615
      %v2617 = vand.u32 %v433, 4294901760
      %2618 = vmatmul.f32.gmra.mxu0 %v2617
      %v2619 = vpop.f32.mrf.mxu0
      %v2620 = vadd.f32 %v2525, %v2619
      %v2621 = vand.u32 %v436, 4294901760
      %2622 = vmatmul.f32.gmra.mxu0 %v2621
      %v2623 = vpop.f32.mrf.mxu0
      %v2624 = vadd.f32 %v2531, %v2623
      %2625 = vdwg.mxu0
      %2626 = vmatpush.msra.mxu0 0.0
      %2627 = vmatpush.msra.mxu0 0.0
      %2628 = vmatpush.msra.mxu0 0.0
      %2629 = vmatpush.msra.mxu0 0.0
      %2630 = vmatpush.msra.mxu0 0.0
      %2631 = vmatpush.msra.mxu0 0.0
      %2632 = vmatpush.msra.mxu0 0.0
      %2633 = vmatpush.msra.mxu0 0.0
      %2634 = vmatpush.msra.mxu0 0.0
      %2635 = vmatpush.msra.mxu0 0.0
      %2636 = vmatpush.msra.mxu0 0.0
      %2637 = vmatpush.msra.mxu0 0.0
      %v2638 = vand.u32 %v2055, 4294901760
      %2639 = vmatpush.msra.mxu0 %v2638
      %v2640 = vand.u32 %v2054, 4294901760
      %2641 = vmatpush.msra.mxu0 %v2640
      %v2642 = vand.u32 %v2053, 4294901760
      %2643 = vmatpush.msra.mxu0 %v2642
      %v2644 = vand.u32 %v2052, 4294901760
      %2645 = vmatpush.msra.mxu0 %v2644
      %v2646 = vand.u32 %v391, 4294901760
      %2647 = vmatmul.f32.gmra.mxu0 %v2646
      %v2648 = vpop.f32.mrf.mxu0
      %v2649 = vadd.f32 %v2564, %v2648
      %v2650 = vand.u32 %v394, 4294901760
      %2651 = vmatmul.f32.gmra.mxu0 %v2650
      %v2652 = vpop.f32.mrf.mxu0
      %v2653 = vadd.f32 %v2568, %v2652
      %v2654 = vand.u32 %v397, 4294901760
      %2655 = vmatmul.f32.gmra.mxu0 %v2654
      %v2656 = vpop.f32.mrf.mxu0
      %v2657 = vadd.f32 %v2572, %v2656
      %v2658 = vand.u32 %v400, 4294901760
      %2659 = vmatmul.f32.gmra.mxu0 %v2658
      %v2660 = vpop.f32.mrf.mxu0
      %v2661 = vadd.f32 %v2576, %v2660
      %v2662 = vand.u32 %v403, 4294901760
      %2663 = vmatmul.f32.gmra.mxu0 %v2662
      %v2664 = vpop.f32.mrf.mxu0
      %v2665 = vadd.f32 %v2580, %v2664
      %v2666 = vand.u32 %v406, 4294901760
      %2667 = vmatmul.f32.gmra.mxu0 %v2666
      %v2668 = vpop.f32.mrf.mxu0
      %v2669 = vadd.f32 %v2584, %v2668
      %v2670 = vand.u32 %v409, 4294901760
      %2671 = vmatmul.f32.gmra.mxu0 %v2670
      %v2672 = vpop.f32.mrf.mxu0
      %v2673 = vadd.f32 %v2588, %v2672
      %v2674 = vand.u32 %v412, 4294901760
      %2675 = vmatmul.f32.gmra.mxu0 %v2674
      %v2676 = vpop.f32.mrf.mxu0
      %v2677 = vadd.f32 %v2592, %v2676
      %v2678 = vand.u32 %v415, 4294901760
      %2679 = vmatmul.f32.gmra.mxu0 %v2678
      %v2680 = vpop.f32.mrf.mxu0
      %v2681 = vadd.f32 %v2596, %v2680
      %v2682 = vand.u32 %v418, 4294901760
      %2683 = vmatmul.f32.gmra.mxu0 %v2682
      %v2684 = vpop.f32.mrf.mxu0
      %v2685 = vadd.f32 %v2600, %v2684
      %v2686 = vand.u32 %v421, 4294901760
      %2687 = vmatmul.f32.gmra.mxu0 %v2686
      %v2688 = vpop.f32.mrf.mxu0
      %v2689 = vadd.f32 %v2604, %v2688
      %v2690 = vand.u32 %v424, 4294901760
      %2691 = vmatmul.f32.gmra.mxu0 %v2690
      %v2692 = vpop.f32.mrf.mxu0
      %v2693 = vadd.f32 %v2608, %v2692
      %v2694 = vand.u32 %v427, 4294901760
      %2695 = vmatmul.f32.gmra.mxu0 %v2694
      %v2696 = vpop.f32.mrf.mxu0
      %v2697 = vadd.f32 %v2612, %v2696
      %v2698 = vand.u32 %v430, 4294901760
      %2699 = vmatmul.f32.gmra.mxu0 %v2698
      %v2700 = vpop.f32.mrf.mxu0
      %v2701 = vadd.f32 %v2616, %v2700
      %v2702 = vand.u32 %v433, 4294901760
      %2703 = vmatmul.f32.gmra.mxu0 %v2702
      %v2704 = vpop.f32.mrf.mxu0
      %v2705 = vadd.f32 %v2620, %v2704
      %v2706 = vand.u32 %v436, 4294901760
      %2707 = vmatmul.f32.gmra.mxu0 %v2706
      %v2708 = vpop.f32.mrf.mxu0
      %v2709 = vadd.f32 %v2624, %v2708
      %2710 = vdwg.mxu0
      %s2711 = scalar_lea.vmem %s3, 32
      %v2712 = vld [vmem:[%s2711] sm:$0xff]
      %v2713 = vld [vmem:[%s2711 + $0x8] sm:$0xff]
      %v2714 = vld [vmem:[%s2711 + $0x10] sm:$0xff]
      %v2715 = vld [vmem:[%s2711 + $0x18] sm:$0xff]
      %s2716 = scalar_lea.vmem %s4, 1
      %v2717 = vld [vmem:[%s2716] sm:$0x1]
      %v2719 = vperm.slane %v2717, 0
      %2721 = vmatpush.msra.mxu0 0.0
      %2722 = vmatpush.msra.mxu0 0.0
      %2723 = vmatpush.msra.mxu0 0.0
      %2724 = vmatpush.msra.mxu0 0.0
      %2725 = vmatpush.msra.mxu0 0.0
      %2726 = vmatpush.msra.mxu0 0.0
      %2727 = vmatpush.msra.mxu0 0.0
      %2728 = vmatpush.msra.mxu0 0.0
      %2729 = vmatpush.msra.mxu0 0.0
      %2730 = vmatpush.msra.mxu0 0.0
      %2731 = vmatpush.msra.mxu0 0.0
      %2732 = vmatpush.msra.mxu0 0.0
      %v2733 = vand.u32 %v2715, 4294901760
      %2734 = vmatpush.msra.mxu0 %v2733
      %v2735 = vand.u32 %v2714, 4294901760
      %2736 = vmatpush.msra.mxu0 %v2735
      %v2737 = vand.u32 %v2713, 4294901760
      %2738 = vmatpush.msra.mxu0 %v2737
      %v2739 = vand.u32 %v2712, 4294901760
      %2740 = vmatpush.msra.mxu0 %v2739
      %v2741 = vand.u32 %v391, 4294901760
      %v2742 = vsub.f32 %v391, %v2741
      %v2743 = vand.u32 %v2742, 4294901760
      %v2744 = vsub.f32 %v2742, %v2743
      %v2745 = vand.u32 %v2744, 4294901760
      %2746 = vmatmul.f32.gmra.mxu0 %v2745
      %v2747 = vpop.f32.mrf.mxu0
      %v2748 = vadd.f32 %v2719, %v2747
      %v2749 = vand.u32 %v394, 4294901760
      %v2750 = vsub.f32 %v394, %v2749
      %v2751 = vand.u32 %v2750, 4294901760
      %v2752 = vsub.f32 %v2750, %v2751
      %v2753 = vand.u32 %v2752, 4294901760
      %2754 = vmatmul.f32.gmra.mxu0 %v2753
      %v2755 = vpop.f32.mrf.mxu0
      %v2756 = vadd.f32 %v2719, %v2755
      %v2757 = vand.u32 %v397, 4294901760
      %v2758 = vsub.f32 %v397, %v2757
      %v2759 = vand.u32 %v2758, 4294901760
      %v2760 = vsub.f32 %v2758, %v2759
      %v2761 = vand.u32 %v2760, 4294901760
      %2762 = vmatmul.f32.gmra.mxu0 %v2761
      %v2763 = vpop.f32.mrf.mxu0
      %v2764 = vadd.f32 %v2719, %v2763
      %v2765 = vand.u32 %v400, 4294901760
      %v2766 = vsub.f32 %v400, %v2765
      %v2767 = vand.u32 %v2766, 4294901760
      %v2768 = vsub.f32 %v2766, %v2767
      %v2769 = vand.u32 %v2768, 4294901760
      %2770 = vmatmul.f32.gmra.mxu0 %v2769
      %v2771 = vpop.f32.mrf.mxu0
      %v2772 = vadd.f32 %v2719, %v2771
      %v2773 = vand.u32 %v403, 4294901760
      %v2774 = vsub.f32 %v403, %v2773
      %v2775 = vand.u32 %v2774, 4294901760
      %v2776 = vsub.f32 %v2774, %v2775
      %v2777 = vand.u32 %v2776, 4294901760
      %2778 = vmatmul.f32.gmra.mxu0 %v2777
      %v2779 = vpop.f32.mrf.mxu0
      %v2780 = vadd.f32 %v2719, %v2779
      %v2781 = vand.u32 %v406, 4294901760
      %v2782 = vsub.f32 %v406, %v2781
      %v2783 = vand.u32 %v2782, 4294901760
      %v2784 = vsub.f32 %v2782, %v2783
      %v2785 = vand.u32 %v2784, 4294901760
      %2786 = vmatmul.f32.gmra.mxu0 %v2785
      %v2787 = vpop.f32.mrf.mxu0
      %v2788 = vadd.f32 %v2719, %v2787
      %v2789 = vand.u32 %v409, 4294901760
      %v2790 = vsub.f32 %v409, %v2789
      %v2791 = vand.u32 %v2790, 4294901760
      %v2792 = vsub.f32 %v2790, %v2791
      %v2793 = vand.u32 %v2792, 4294901760
      %2794 = vmatmul.f32.gmra.mxu0 %v2793
      %v2795 = vpop.f32.mrf.mxu0
      %v2796 = vadd.f32 %v2719, %v2795
      %v2797 = vand.u32 %v412, 4294901760
      %v2798 = vsub.f32 %v412, %v2797
      %v2799 = vand.u32 %v2798, 4294901760
      %v2800 = vsub.f32 %v2798, %v2799
      %v2801 = vand.u32 %v2800, 4294901760
      %2802 = vmatmul.f32.gmra.mxu0 %v2801
      %v2803 = vpop.f32.mrf.mxu0
      %v2804 = vadd.f32 %v2719, %v2803
      %v2805 = vand.u32 %v415, 4294901760
      %v2806 = vsub.f32 %v415, %v2805
      %v2807 = vand.u32 %v2806, 4294901760
      %v2808 = vsub.f32 %v2806, %v2807
      %v2809 = vand.u32 %v2808, 4294901760
      %2810 = vmatmul.f32.gmra.mxu0 %v2809
      %v2811 = vpop.f32.mrf.mxu0
      %v2812 = vadd.f32 %v2719, %v2811
      %v2813 = vand.u32 %v418, 4294901760
      %v2814 = vsub.f32 %v418, %v2813
      %v2815 = vand.u32 %v2814, 4294901760
      %v2816 = vsub.f32 %v2814, %v2815
      %v2817 = vand.u32 %v2816, 4294901760
      %2818 = vmatmul.f32.gmra.mxu0 %v2817
      %v2819 = vpop.f32.mrf.mxu0
      %v2820 = vadd.f32 %v2719, %v2819
      %v2821 = vand.u32 %v421, 4294901760
      %v2822 = vsub.f32 %v421, %v2821
      %v2823 = vand.u32 %v2822, 4294901760
      %v2824 = vsub.f32 %v2822, %v2823
      %v2825 = vand.u32 %v2824, 4294901760
      %2826 = vmatmul.f32.gmra.mxu0 %v2825
      %v2827 = vpop.f32.mrf.mxu0
      %v2828 = vadd.f32 %v2719, %v2827
      %v2829 = vand.u32 %v424, 4294901760
      %v2830 = vsub.f32 %v424, %v2829
      %v2831 = vand.u32 %v2830, 4294901760
      %v2832 = vsub.f32 %v2830, %v2831
      %v2833 = vand.u32 %v2832, 4294901760
      %2834 = vmatmul.f32.gmra.mxu0 %v2833
      %v2835 = vpop.f32.mrf.mxu0
      %v2836 = vadd.f32 %v2719, %v2835
      %v2837 = vand.u32 %v427, 4294901760
      %v2838 = vsub.f32 %v427, %v2837
      %v2839 = vand.u32 %v2838, 4294901760
      %v2840 = vsub.f32 %v2838, %v2839
      %v2841 = vand.u32 %v2840, 4294901760
      %2842 = vmatmul.f32.gmra.mxu0 %v2841
      %v2843 = vpop.f32.mrf.mxu0
      %v2844 = vadd.f32 %v2719, %v2843
      %v2845 = vand.u32 %v430, 4294901760
      %v2846 = vsub.f32 %v430, %v2845
      %v2847 = vand.u32 %v2846, 4294901760
      %v2848 = vsub.f32 %v2846, %v2847
      %v2849 = vand.u32 %v2848, 4294901760
      %2850 = vmatmul.f32.gmra.mxu0 %v2849
      %v2851 = vpop.f32.mrf.mxu0
      %v2852 = vadd.f32 %v2719, %v2851
      %v2853 = vand.u32 %v433, 4294901760
      %v2854 = vsub.f32 %v433, %v2853
      %v2855 = vand.u32 %v2854, 4294901760
      %v2856 = vsub.f32 %v2854, %v2855
      %v2857 = vand.u32 %v2856, 4294901760
      %2858 = vmatmul.f32.gmra.mxu0 %v2857
      %v2859 = vpop.f32.mrf.mxu0
      %v2860 = vadd.f32 %v2719, %v2859
      %v2861 = vand.u32 %v436, 4294901760
      %v2862 = vsub.f32 %v436, %v2861
      %v2863 = vand.u32 %v2862, 4294901760
      %v2864 = vsub.f32 %v2862, %v2863
      %v2865 = vand.u32 %v2864, 4294901760
      %2866 = vmatmul.f32.gmra.mxu0 %v2865
      %v2867 = vpop.f32.mrf.mxu0
      %v2868 = vadd.f32 %v2719, %v2867
      %2869 = vdwg.mxu0
      %2870 = vmatpush.msra.mxu0 0.0
      %2871 = vmatpush.msra.mxu0 0.0
      %2872 = vmatpush.msra.mxu0 0.0
      %2873 = vmatpush.msra.mxu0 0.0
      %2874 = vmatpush.msra.mxu0 0.0
      %2875 = vmatpush.msra.mxu0 0.0
      %2876 = vmatpush.msra.mxu0 0.0
      %2877 = vmatpush.msra.mxu0 0.0
      %2878 = vmatpush.msra.mxu0 0.0
      %2879 = vmatpush.msra.mxu0 0.0
      %2880 = vmatpush.msra.mxu0 0.0
      %2881 = vmatpush.msra.mxu0 0.0
      %v2882 = vand.u32 %v2715, 4294901760
      %v2883 = vsub.f32 %v2715, %v2882
      %v2884 = vand.u32 %v2883, 4294901760
      %v2885 = vsub.f32 %v2883, %v2884
      %v2886 = vand.u32 %v2885, 4294901760
      %2887 = vmatpush.msra.mxu0 %v2886
      %v2888 = vand.u32 %v2714, 4294901760
      %v2889 = vsub.f32 %v2714, %v2888
      %v2890 = vand.u32 %v2889, 4294901760
      %v2891 = vsub.f32 %v2889, %v2890
      %v2892 = vand.u32 %v2891, 4294901760
      %2893 = vmatpush.msra.mxu0 %v2892
      %v2894 = vand.u32 %v2713, 4294901760
      %v2895 = vsub.f32 %v2713, %v2894
      %v2896 = vand.u32 %v2895, 4294901760
      %v2897 = vsub.f32 %v2895, %v2896
      %v2898 = vand.u32 %v2897, 4294901760
      %2899 = vmatpush.msra.mxu0 %v2898
      %v2900 = vand.u32 %v2712, 4294901760
      %v2901 = vsub.f32 %v2712, %v2900
      %v2902 = vand.u32 %v2901, 4294901760
      %v2903 = vsub.f32 %v2901, %v2902
      %v2904 = vand.u32 %v2903, 4294901760
      %2905 = vmatpush.msra.mxu0 %v2904
      %v2906 = vand.u32 %v391, 4294901760
      %2907 = vmatmul.f32.gmra.mxu0 %v2906
      %v2908 = vpop.f32.mrf.mxu0
      %v2909 = vadd.f32 %v2748, %v2908
      %v2910 = vand.u32 %v394, 4294901760
      %2911 = vmatmul.f32.gmra.mxu0 %v2910
      %v2912 = vpop.f32.mrf.mxu0
      %v2913 = vadd.f32 %v2756, %v2912
      %v2914 = vand.u32 %v397, 4294901760
      %2915 = vmatmul.f32.gmra.mxu0 %v2914
      %v2916 = vpop.f32.mrf.mxu0
      %v2917 = vadd.f32 %v2764, %v2916
      %v2918 = vand.u32 %v400, 4294901760
      %2919 = vmatmul.f32.gmra.mxu0 %v2918
      %v2920 = vpop.f32.mrf.mxu0
      %v2921 = vadd.f32 %v2772, %v2920
      %v2922 = vand.u32 %v403, 4294901760
      %2923 = vmatmul.f32.gmra.mxu0 %v2922
      %v2924 = vpop.f32.mrf.mxu0
      %v2925 = vadd.f32 %v2780, %v2924
      %v2926 = vand.u32 %v406, 4294901760
      %2927 = vmatmul.f32.gmra.mxu0 %v2926
      %v2928 = vpop.f32.mrf.mxu0
      %v2929 = vadd.f32 %v2788, %v2928
      %v2930 = vand.u32 %v409, 4294901760
      %2931 = vmatmul.f32.gmra.mxu0 %v2930
      %v2932 = vpop.f32.mrf.mxu0
      %v2933 = vadd.f32 %v2796, %v2932
      %v2934 = vand.u32 %v412, 4294901760
      %2935 = vmatmul.f32.gmra.mxu0 %v2934
      %v2936 = vpop.f32.mrf.mxu0
      %v2937 = vadd.f32 %v2804, %v2936
      %v2938 = vand.u32 %v415, 4294901760
      %2939 = vmatmul.f32.gmra.mxu0 %v2938
      %v2940 = vpop.f32.mrf.mxu0
      %v2941 = vadd.f32 %v2812, %v2940
      %v2942 = vand.u32 %v418, 4294901760
      %2943 = vmatmul.f32.gmra.mxu0 %v2942
      %v2944 = vpop.f32.mrf.mxu0
      %v2945 = vadd.f32 %v2820, %v2944
      %v2946 = vand.u32 %v421, 4294901760
      %2947 = vmatmul.f32.gmra.mxu0 %v2946
      %v2948 = vpop.f32.mrf.mxu0
      %v2949 = vadd.f32 %v2828, %v2948
      %v2950 = vand.u32 %v424, 4294901760
      %2951 = vmatmul.f32.gmra.mxu0 %v2950
      %v2952 = vpop.f32.mrf.mxu0
      %v2953 = vadd.f32 %v2836, %v2952
      %v2954 = vand.u32 %v427, 4294901760
      %2955 = vmatmul.f32.gmra.mxu0 %v2954
      %v2956 = vpop.f32.mrf.mxu0
      %v2957 = vadd.f32 %v2844, %v2956
      %v2958 = vand.u32 %v430, 4294901760
      %2959 = vmatmul.f32.gmra.mxu0 %v2958
      %v2960 = vpop.f32.mrf.mxu0
      %v2961 = vadd.f32 %v2852, %v2960
      %v2962 = vand.u32 %v433, 4294901760
      %2963 = vmatmul.f32.gmra.mxu0 %v2962
      %v2964 = vpop.f32.mrf.mxu0
      %v2965 = vadd.f32 %v2860, %v2964
      %v2966 = vand.u32 %v436, 4294901760
      %2967 = vmatmul.f32.gmra.mxu0 %v2966
      %v2968 = vpop.f32.mrf.mxu0
      %v2969 = vadd.f32 %v2868, %v2968
      %2970 = vdwg.mxu0
      %2971 = vmatpush.msra.mxu0 0.0
      %2972 = vmatpush.msra.mxu0 0.0
      %2973 = vmatpush.msra.mxu0 0.0
      %2974 = vmatpush.msra.mxu0 0.0
      %2975 = vmatpush.msra.mxu0 0.0
      %2976 = vmatpush.msra.mxu0 0.0
      %2977 = vmatpush.msra.mxu0 0.0
      %2978 = vmatpush.msra.mxu0 0.0
      %2979 = vmatpush.msra.mxu0 0.0
      %2980 = vmatpush.msra.mxu0 0.0
      %2981 = vmatpush.msra.mxu0 0.0
      %2982 = vmatpush.msra.mxu0 0.0
      %v2983 = vand.u32 %v2715, 4294901760
      %v2984 = vsub.f32 %v2715, %v2983
      %2985 = vmatpush.msra.mxu0 %v2984
      %v2986 = vand.u32 %v2714, 4294901760
      %v2987 = vsub.f32 %v2714, %v2986
      %2988 = vmatpush.msra.mxu0 %v2987
      %v2989 = vand.u32 %v2713, 4294901760
      %v2990 = vsub.f32 %v2713, %v2989
      %2991 = vmatpush.msra.mxu0 %v2990
      %v2992 = vand.u32 %v2712, 4294901760
      %v2993 = vsub.f32 %v2712, %v2992
      %2994 = vmatpush.msra.mxu0 %v2993
      %v2995 = vand.u32 %v391, 4294901760
      %v2996 = vsub.f32 %v391, %v2995
      %2997 = vmatmul.f32.gmra.mxu0 %v2996
      %v2998 = vpop.f32.mrf.mxu0
      %v2999 = vadd.f32 %v2909, %v2998
      %v3000 = vand.u32 %v394, 4294901760
      %v3001 = vsub.f32 %v394, %v3000
      %3002 = vmatmul.f32.gmra.mxu0 %v3001
      %v3003 = vpop.f32.mrf.mxu0
      %v3004 = vadd.f32 %v2913, %v3003
      %v3005 = vand.u32 %v397, 4294901760
      %v3006 = vsub.f32 %v397, %v3005
      %3007 = vmatmul.f32.gmra.mxu0 %v3006
      %v3008 = vpop.f32.mrf.mxu0
      %v3009 = vadd.f32 %v2917, %v3008
      %v3010 = vand.u32 %v400, 4294901760
      %v3011 = vsub.f32 %v400, %v3010
      %3012 = vmatmul.f32.gmra.mxu0 %v3011
      %v3013 = vpop.f32.mrf.mxu0
      %v3014 = vadd.f32 %v2921, %v3013
      %v3015 = vand.u32 %v403, 4294901760
      %v3016 = vsub.f32 %v403, %v3015
      %3017 = vmatmul.f32.gmra.mxu0 %v3016
      %v3018 = vpop.f32.mrf.mxu0
      %v3019 = vadd.f32 %v2925, %v3018
      %v3020 = vand.u32 %v406, 4294901760
      %v3021 = vsub.f32 %v406, %v3020
      %3022 = vmatmul.f32.gmra.mxu0 %v3021
      %v3023 = vpop.f32.mrf.mxu0
      %v3024 = vadd.f32 %v2929, %v3023
      %v3025 = vand.u32 %v409, 4294901760
      %v3026 = vsub.f32 %v409, %v3025
      %3027 = vmatmul.f32.gmra.mxu0 %v3026
      %v3028 = vpop.f32.mrf.mxu0
      %v3029 = vadd.f32 %v2933, %v3028
      %v3030 = vand.u32 %v412, 4294901760
      %v3031 = vsub.f32 %v412, %v3030
      %3032 = vmatmul.f32.gmra.mxu0 %v3031
      %v3033 = vpop.f32.mrf.mxu0
      %v3034 = vadd.f32 %v2937, %v3033
      %v3035 = vand.u32 %v415, 4294901760
      %v3036 = vsub.f32 %v415, %v3035
      %3037 = vmatmul.f32.gmra.mxu0 %v3036
      %v3038 = vpop.f32.mrf.mxu0
      %v3039 = vadd.f32 %v2941, %v3038
      %v3040 = vand.u32 %v418, 4294901760
      %v3041 = vsub.f32 %v418, %v3040
      %3042 = vmatmul.f32.gmra.mxu0 %v3041
      %v3043 = vpop.f32.mrf.mxu0
      %v3044 = vadd.f32 %v2945, %v3043
      %v3045 = vand.u32 %v421, 4294901760
      %v3046 = vsub.f32 %v421, %v3045
      %3047 = vmatmul.f32.gmra.mxu0 %v3046
      %v3048 = vpop.f32.mrf.mxu0
      %v3049 = vadd.f32 %v2949, %v3048
      %v3050 = vand.u32 %v424, 4294901760
      %v3051 = vsub.f32 %v424, %v3050
      %3052 = vmatmul.f32.gmra.mxu0 %v3051
      %v3053 = vpop.f32.mrf.mxu0
      %v3054 = vadd.f32 %v2953, %v3053
      %v3055 = vand.u32 %v427, 4294901760
      %v3056 = vsub.f32 %v427, %v3055
      %3057 = vmatmul.f32.gmra.mxu0 %v3056
      %v3058 = vpop.f32.mrf.mxu0
      %v3059 = vadd.f32 %v2957, %v3058
      %v3060 = vand.u32 %v430, 4294901760
      %v3061 = vsub.f32 %v430, %v3060
      %3062 = vmatmul.f32.gmra.mxu0 %v3061
      %v3063 = vpop.f32.mrf.mxu0
      %v3064 = vadd.f32 %v2961, %v3063
      %v3065 = vand.u32 %v433, 4294901760
      %v3066 = vsub.f32 %v433, %v3065
      %3067 = vmatmul.f32.gmra.mxu0 %v3066
      %v3068 = vpop.f32.mrf.mxu0
      %v3069 = vadd.f32 %v2965, %v3068
      %v3070 = vand.u32 %v436, 4294901760
      %v3071 = vsub.f32 %v436, %v3070
      %3072 = vmatmul.f32.gmra.mxu0 %v3071
      %v3073 = vpop.f32.mrf.mxu0
      %v3074 = vadd.f32 %v2969, %v3073
      %3075 = vdwg.mxu0
      %3076 = vmatpush.msra.mxu0 0.0
      %3077 = vmatpush.msra.mxu0 0.0
      %3078 = vmatpush.msra.mxu0 0.0
      %3079 = vmatpush.msra.mxu0 0.0
      %3080 = vmatpush.msra.mxu0 0.0
      %3081 = vmatpush.msra.mxu0 0.0
      %3082 = vmatpush.msra.mxu0 0.0
      %3083 = vmatpush.msra.mxu0 0.0
      %3084 = vmatpush.msra.mxu0 0.0
      %3085 = vmatpush.msra.mxu0 0.0
      %3086 = vmatpush.msra.mxu0 0.0
      %3087 = vmatpush.msra.mxu0 0.0
      %v3088 = vand.u32 %v2715, 4294901760
      %3089 = vmatpush.msra.mxu0 %v3088
      %v3090 = vand.u32 %v2714, 4294901760
      %3091 = vmatpush.msra.mxu0 %v3090
      %v3092 = vand.u32 %v2713, 4294901760
      %3093 = vmatpush.msra.mxu0 %v3092
      %v3094 = vand.u32 %v2712, 4294901760
      %3095 = vmatpush.msra.mxu0 %v3094
      %v3096 = vand.u32 %v391, 4294901760
      %v3097 = vsub.f32 %v391, %v3096
      %v3098 = vand.u32 %v3097, 4294901760
      %3099 = vmatmul.f32.gmra.mxu0 %v3098
      %v3100 = vpop.f32.mrf.mxu0
      %v3101 = vadd.f32 %v2999, %v3100
      %v3102 = vand.u32 %v394, 4294901760
      %v3103 = vsub.f32 %v394, %v3102
      %v3104 = vand.u32 %v3103, 4294901760
      %3105 = vmatmul.f32.gmra.mxu0 %v3104
      %v3106 = vpop.f32.mrf.mxu0
      %v3107 = vadd.f32 %v3004, %v3106
      %v3108 = vand.u32 %v397, 4294901760
      %v3109 = vsub.f32 %v397, %v3108
      %v3110 = vand.u32 %v3109, 4294901760
      %3111 = vmatmul.f32.gmra.mxu0 %v3110
      %v3112 = vpop.f32.mrf.mxu0
      %v3113 = vadd.f32 %v3009, %v3112
      %v3114 = vand.u32 %v400, 4294901760
      %v3115 = vsub.f32 %v400, %v3114
      %v3116 = vand.u32 %v3115, 4294901760
      %3117 = vmatmul.f32.gmra.mxu0 %v3116
      %v3118 = vpop.f32.mrf.mxu0
      %v3119 = vadd.f32 %v3014, %v3118
      %v3120 = vand.u32 %v403, 4294901760
      %v3121 = vsub.f32 %v403, %v3120
      %v3122 = vand.u32 %v3121, 4294901760
      %3123 = vmatmul.f32.gmra.mxu0 %v3122
      %v3124 = vpop.f32.mrf.mxu0
      %v3125 = vadd.f32 %v3019, %v3124
      %v3126 = vand.u32 %v406, 4294901760
      %v3127 = vsub.f32 %v406, %v3126
      %v3128 = vand.u32 %v3127, 4294901760
      %3129 = vmatmul.f32.gmra.mxu0 %v3128
      %v3130 = vpop.f32.mrf.mxu0
      %v3131 = vadd.f32 %v3024, %v3130
      %v3132 = vand.u32 %v409, 4294901760
      %v3133 = vsub.f32 %v409, %v3132
      %v3134 = vand.u32 %v3133, 4294901760
      %3135 = vmatmul.f32.gmra.mxu0 %v3134
      %v3136 = vpop.f32.mrf.mxu0
      %v3137 = vadd.f32 %v3029, %v3136
      %v3138 = vand.u32 %v412, 4294901760
      %v3139 = vsub.f32 %v412, %v3138
      %v3140 = vand.u32 %v3139, 4294901760
      %3141 = vmatmul.f32.gmra.mxu0 %v3140
      %v3142 = vpop.f32.mrf.mxu0
      %v3143 = vadd.f32 %v3034, %v3142
      %v3144 = vand.u32 %v415, 4294901760
      %v3145 = vsub.f32 %v415, %v3144
      %v3146 = vand.u32 %v3145, 4294901760
      %3147 = vmatmul.f32.gmra.mxu0 %v3146
      %v3148 = vpop.f32.mrf.mxu0
      %v3149 = vadd.f32 %v3039, %v3148
      %v3150 = vand.u32 %v418, 4294901760
      %v3151 = vsub.f32 %v418, %v3150
      %v3152 = vand.u32 %v3151, 4294901760
      %3153 = vmatmul.f32.gmra.mxu0 %v3152
      %v3154 = vpop.f32.mrf.mxu0
      %v3155 = vadd.f32 %v3044, %v3154
      %v3156 = vand.u32 %v421, 4294901760
      %v3157 = vsub.f32 %v421, %v3156
      %v3158 = vand.u32 %v3157, 4294901760
      %3159 = vmatmul.f32.gmra.mxu0 %v3158
      %v3160 = vpop.f32.mrf.mxu0
      %v3161 = vadd.f32 %v3049, %v3160
      %v3162 = vand.u32 %v424, 4294901760
      %v3163 = vsub.f32 %v424, %v3162
      %v3164 = vand.u32 %v3163, 4294901760
      %3165 = vmatmul.f32.gmra.mxu0 %v3164
      %v3166 = vpop.f32.mrf.mxu0
      %v3167 = vadd.f32 %v3054, %v3166
      %v3168 = vand.u32 %v427, 4294901760
      %v3169 = vsub.f32 %v427, %v3168
      %v3170 = vand.u32 %v3169, 4294901760
      %3171 = vmatmul.f32.gmra.mxu0 %v3170
      %v3172 = vpop.f32.mrf.mxu0
      %v3173 = vadd.f32 %v3059, %v3172
      %v3174 = vand.u32 %v430, 4294901760
      %v3175 = vsub.f32 %v430, %v3174
      %v3176 = vand.u32 %v3175, 4294901760
      %3177 = vmatmul.f32.gmra.mxu0 %v3176
      %v3178 = vpop.f32.mrf.mxu0
      %v3179 = vadd.f32 %v3064, %v3178
      %v3180 = vand.u32 %v433, 4294901760
      %v3181 = vsub.f32 %v433, %v3180
      %v3182 = vand.u32 %v3181, 4294901760
      %3183 = vmatmul.f32.gmra.mxu0 %v3182
      %v3184 = vpop.f32.mrf.mxu0
      %v3185 = vadd.f32 %v3069, %v3184
      %v3186 = vand.u32 %v436, 4294901760
      %v3187 = vsub.f32 %v436, %v3186
      %v3188 = vand.u32 %v3187, 4294901760
      %3189 = vmatmul.f32.gmra.mxu0 %v3188
      %v3190 = vpop.f32.mrf.mxu0
      %v3191 = vadd.f32 %v3074, %v3190
      %3192 = vdwg.mxu0
      %3193 = vmatpush.msra.mxu0 0.0
      %3194 = vmatpush.msra.mxu0 0.0
      %3195 = vmatpush.msra.mxu0 0.0
      %3196 = vmatpush.msra.mxu0 0.0
      %3197 = vmatpush.msra.mxu0 0.0
      %3198 = vmatpush.msra.mxu0 0.0
      %3199 = vmatpush.msra.mxu0 0.0
      %3200 = vmatpush.msra.mxu0 0.0
      %3201 = vmatpush.msra.mxu0 0.0
      %3202 = vmatpush.msra.mxu0 0.0
      %3203 = vmatpush.msra.mxu0 0.0
      %3204 = vmatpush.msra.mxu0 0.0
      %v3205 = vand.u32 %v2715, 4294901760
      %v3206 = vsub.f32 %v2715, %v3205
      %v3207 = vand.u32 %v3206, 4294901760
      %3208 = vmatpush.msra.mxu0 %v3207
      %v3209 = vand.u32 %v2714, 4294901760
      %v3210 = vsub.f32 %v2714, %v3209
      %v3211 = vand.u32 %v3210, 4294901760
      %3212 = vmatpush.msra.mxu0 %v3211
      %v3213 = vand.u32 %v2713, 4294901760
      %v3214 = vsub.f32 %v2713, %v3213
      %v3215 = vand.u32 %v3214, 4294901760
      %3216 = vmatpush.msra.mxu0 %v3215
      %v3217 = vand.u32 %v2712, 4294901760
      %v3218 = vsub.f32 %v2712, %v3217
      %v3219 = vand.u32 %v3218, 4294901760
      %3220 = vmatpush.msra.mxu0 %v3219
      %v3221 = vand.u32 %v391, 4294901760
      %3222 = vmatmul.f32.gmra.mxu0 %v3221
      %v3223 = vpop.f32.mrf.mxu0
      %v3224 = vadd.f32 %v3101, %v3223
      %v3225 = vand.u32 %v394, 4294901760
      %3226 = vmatmul.f32.gmra.mxu0 %v3225
      %v3227 = vpop.f32.mrf.mxu0
      %v3228 = vadd.f32 %v3107, %v3227
      %v3229 = vand.u32 %v397, 4294901760
      %3230 = vmatmul.f32.gmra.mxu0 %v3229
      %v3231 = vpop.f32.mrf.mxu0
      %v3232 = vadd.f32 %v3113, %v3231
      %v3233 = vand.u32 %v400, 4294901760
      %3234 = vmatmul.f32.gmra.mxu0 %v3233
      %v3235 = vpop.f32.mrf.mxu0
      %v3236 = vadd.f32 %v3119, %v3235
      %v3237 = vand.u32 %v403, 4294901760
      %3238 = vmatmul.f32.gmra.mxu0 %v3237
      %v3239 = vpop.f32.mrf.mxu0
      %v3240 = vadd.f32 %v3125, %v3239
      %v3241 = vand.u32 %v406, 4294901760
      %3242 = vmatmul.f32.gmra.mxu0 %v3241
      %v3243 = vpop.f32.mrf.mxu0
      %v3244 = vadd.f32 %v3131, %v3243
      %v3245 = vand.u32 %v409, 4294901760
      %3246 = vmatmul.f32.gmra.mxu0 %v3245
      %v3247 = vpop.f32.mrf.mxu0
      %v3248 = vadd.f32 %v3137, %v3247
      %v3249 = vand.u32 %v412, 4294901760
      %3250 = vmatmul.f32.gmra.mxu0 %v3249
      %v3251 = vpop.f32.mrf.mxu0
      %v3252 = vadd.f32 %v3143, %v3251
      %v3253 = vand.u32 %v415, 4294901760
      %3254 = vmatmul.f32.gmra.mxu0 %v3253
      %v3255 = vpop.f32.mrf.mxu0
      %v3256 = vadd.f32 %v3149, %v3255
      %v3257 = vand.u32 %v418, 4294901760
      %3258 = vmatmul.f32.gmra.mxu0 %v3257
      %v3259 = vpop.f32.mrf.mxu0
      %v3260 = vadd.f32 %v3155, %v3259
      %v3261 = vand.u32 %v421, 4294901760
      %3262 = vmatmul.f32.gmra.mxu0 %v3261
      %v3263 = vpop.f32.mrf.mxu0
      %v3264 = vadd.f32 %v3161, %v3263
      %v3265 = vand.u32 %v424, 4294901760
      %3266 = vmatmul.f32.gmra.mxu0 %v3265
      %v3267 = vpop.f32.mrf.mxu0
      %v3268 = vadd.f32 %v3167, %v3267
      %v3269 = vand.u32 %v427, 4294901760
      %3270 = vmatmul.f32.gmra.mxu0 %v3269
      %v3271 = vpop.f32.mrf.mxu0
      %v3272 = vadd.f32 %v3173, %v3271
      %v3273 = vand.u32 %v430, 4294901760
      %3274 = vmatmul.f32.gmra.mxu0 %v3273
      %v3275 = vpop.f32.mrf.mxu0
      %v3276 = vadd.f32 %v3179, %v3275
      %v3277 = vand.u32 %v433, 4294901760
      %3278 = vmatmul.f32.gmra.mxu0 %v3277
      %v3279 = vpop.f32.mrf.mxu0
      %v3280 = vadd.f32 %v3185, %v3279
      %v3281 = vand.u32 %v436, 4294901760
      %3282 = vmatmul.f32.gmra.mxu0 %v3281
      %v3283 = vpop.f32.mrf.mxu0
      %v3284 = vadd.f32 %v3191, %v3283
      %3285 = vdwg.mxu0
      %3286 = vmatpush.msra.mxu0 0.0
      %3287 = vmatpush.msra.mxu0 0.0
      %3288 = vmatpush.msra.mxu0 0.0
      %3289 = vmatpush.msra.mxu0 0.0
      %3290 = vmatpush.msra.mxu0 0.0
      %3291 = vmatpush.msra.mxu0 0.0
      %3292 = vmatpush.msra.mxu0 0.0
      %3293 = vmatpush.msra.mxu0 0.0
      %3294 = vmatpush.msra.mxu0 0.0
      %3295 = vmatpush.msra.mxu0 0.0
      %3296 = vmatpush.msra.mxu0 0.0
      %3297 = vmatpush.msra.mxu0 0.0
      %v3298 = vand.u32 %v2715, 4294901760
      %3299 = vmatpush.msra.mxu0 %v3298
      %v3300 = vand.u32 %v2714, 4294901760
      %3301 = vmatpush.msra.mxu0 %v3300
      %v3302 = vand.u32 %v2713, 4294901760
      %3303 = vmatpush.msra.mxu0 %v3302
      %v3304 = vand.u32 %v2712, 4294901760
      %3305 = vmatpush.msra.mxu0 %v3304
      %v3306 = vand.u32 %v391, 4294901760
      %3307 = vmatmul.f32.gmra.mxu0 %v3306
      %v3308 = vpop.f32.mrf.mxu0
      %v3309 = vadd.f32 %v3224, %v3308
      %v3310 = vand.u32 %v394, 4294901760
      %3311 = vmatmul.f32.gmra.mxu0 %v3310
      %v3312 = vpop.f32.mrf.mxu0
      %v3313 = vadd.f32 %v3228, %v3312
      %v3314 = vand.u32 %v397, 4294901760
      %3315 = vmatmul.f32.gmra.mxu0 %v3314
      %v3316 = vpop.f32.mrf.mxu0
      %v3317 = vadd.f32 %v3232, %v3316
      %v3318 = vand.u32 %v400, 4294901760
      %3319 = vmatmul.f32.gmra.mxu0 %v3318
      %v3320 = vpop.f32.mrf.mxu0
      %v3321 = vadd.f32 %v3236, %v3320
      %v3322 = vand.u32 %v403, 4294901760
      %3323 = vmatmul.f32.gmra.mxu0 %v3322
      %v3324 = vpop.f32.mrf.mxu0
      %v3325 = vadd.f32 %v3240, %v3324
      %v3326 = vand.u32 %v406, 4294901760
      %3327 = vmatmul.f32.gmra.mxu0 %v3326
      %v3328 = vpop.f32.mrf.mxu0
      %v3329 = vadd.f32 %v3244, %v3328
      %v3330 = vand.u32 %v409, 4294901760
      %3331 = vmatmul.f32.gmra.mxu0 %v3330
      %v3332 = vpop.f32.mrf.mxu0
      %v3333 = vadd.f32 %v3248, %v3332
      %v3334 = vand.u32 %v412, 4294901760
      %3335 = vmatmul.f32.gmra.mxu0 %v3334
      %v3336 = vpop.f32.mrf.mxu0
      %v3337 = vadd.f32 %v3252, %v3336
      %v3338 = vand.u32 %v415, 4294901760
      %3339 = vmatmul.f32.gmra.mxu0 %v3338
      %v3340 = vpop.f32.mrf.mxu0
      %v3341 = vadd.f32 %v3256, %v3340
      %v3342 = vand.u32 %v418, 4294901760
      %3343 = vmatmul.f32.gmra.mxu0 %v3342
      %v3344 = vpop.f32.mrf.mxu0
      %v3345 = vadd.f32 %v3260, %v3344
      %v3346 = vand.u32 %v421, 4294901760
      %3347 = vmatmul.f32.gmra.mxu0 %v3346
      %v3348 = vpop.f32.mrf.mxu0
      %v3349 = vadd.f32 %v3264, %v3348
      %v3350 = vand.u32 %v424, 4294901760
      %3351 = vmatmul.f32.gmra.mxu0 %v3350
      %v3352 = vpop.f32.mrf.mxu0
      %v3353 = vadd.f32 %v3268, %v3352
      %v3354 = vand.u32 %v427, 4294901760
      %3355 = vmatmul.f32.gmra.mxu0 %v3354
      %v3356 = vpop.f32.mrf.mxu0
      %v3357 = vadd.f32 %v3272, %v3356
      %v3358 = vand.u32 %v430, 4294901760
      %3359 = vmatmul.f32.gmra.mxu0 %v3358
      %v3360 = vpop.f32.mrf.mxu0
      %v3361 = vadd.f32 %v3276, %v3360
      %v3362 = vand.u32 %v433, 4294901760
      %3363 = vmatmul.f32.gmra.mxu0 %v3362
      %v3364 = vpop.f32.mrf.mxu0
      %v3365 = vadd.f32 %v3280, %v3364
      %v3366 = vand.u32 %v436, 4294901760
      %3367 = vmatmul.f32.gmra.mxu0 %v3366
      %v3368 = vpop.f32.mrf.mxu0
      %v3369 = vadd.f32 %v3284, %v3368
      %3370 = vdwg.mxu0
      %v3371 = vmul.f32 %v2649, %v2649
      %v3372 = vmul.f32 %v2653, %v2653
      %v3373 = vmul.f32 %v2657, %v2657
      %v3374 = vmul.f32 %v2661, %v2661
      %v3375 = vmul.f32 %v2665, %v2665
      %v3376 = vmul.f32 %v2669, %v2669
      %v3377 = vmul.f32 %v2673, %v2673
      %v3378 = vmul.f32 %v2677, %v2677
      %v3379 = vmul.f32 %v2681, %v2681
      %v3380 = vmul.f32 %v2685, %v2685
      %v3381 = vmul.f32 %v2689, %v2689
      %v3382 = vmul.f32 %v2693, %v2693
      %v3383 = vmul.f32 %v2697, %v2697
      %v3384 = vmul.f32 %v2701, %v2701
      %v3385 = vmul.f32 %v2705, %v2705
      %v3386 = vmul.f32 %v2709, %v2709
      %v3387 = vsel %vm1762, %v3371, 0.0
      %3388 = vadd.xlane.f32.xlu0 %v3387
      %v3389 = vpop.xlane.xlu0 %3388
      %v3390 = vsel %vm1762, %v3372, 0.0
      %3391 = vadd.xlane.f32.xlu0 %v3390
      %v3392 = vpop.xlane.xlu0 %3391
      %v3393 = vsel %vm1762, %v3373, 0.0
      %3394 = vadd.xlane.f32.xlu0 %v3393
      %v3395 = vpop.xlane.xlu0 %3394
      %v3396 = vsel %vm1762, %v3374, 0.0
      %3397 = vadd.xlane.f32.xlu0 %v3396
      %v3398 = vpop.xlane.xlu0 %3397
      %v3399 = vsel %vm1762, %v3375, 0.0
      %3400 = vadd.xlane.f32.xlu0 %v3399
      %v3401 = vpop.xlane.xlu0 %3400
      %v3402 = vsel %vm1762, %v3376, 0.0
      %3403 = vadd.xlane.f32.xlu0 %v3402
      %v3404 = vpop.xlane.xlu0 %3403
      %v3405 = vsel %vm1762, %v3377, 0.0
      %3406 = vadd.xlane.f32.xlu0 %v3405
      %v3407 = vpop.xlane.xlu0 %3406
      %v3408 = vsel %vm1762, %v3378, 0.0
      %3409 = vadd.xlane.f32.xlu0 %v3408
      %v3410 = vpop.xlane.xlu0 %3409
      %v3411 = vsel %vm1762, %v3379, 0.0
      %3412 = vadd.xlane.f32.xlu0 %v3411
      %v3413 = vpop.xlane.xlu0 %3412
      %v3414 = vsel %vm1762, %v3380, 0.0
      %3415 = vadd.xlane.f32.xlu0 %v3414
      %v3416 = vpop.xlane.xlu0 %3415
      %v3417 = vsel %vm1762, %v3381, 0.0
      %3418 = vadd.xlane.f32.xlu0 %v3417
      %v3419 = vpop.xlane.xlu0 %3418
      %v3420 = vsel %vm1762, %v3382, 0.0
      %3421 = vadd.xlane.f32.xlu0 %v3420
      %v3422 = vpop.xlane.xlu0 %3421
      %v3423 = vsel %vm1762, %v3383, 0.0
      %3424 = vadd.xlane.f32.xlu0 %v3423
      %v3425 = vpop.xlane.xlu0 %3424
      %v3426 = vsel %vm1762, %v3384, 0.0
      %3427 = vadd.xlane.f32.xlu0 %v3426
      %v3428 = vpop.xlane.xlu0 %3427
      %v3429 = vsel %vm1762, %v3385, 0.0
      %3430 = vadd.xlane.f32.xlu0 %v3429
      %v3431 = vpop.xlane.xlu0 %3430
      %v3432 = vsel %vm1762, %v3386, 0.0
      %3433 = vadd.xlane.f32.xlu0 %v3432
      %v3434 = vpop.xlane.xlu0 %3433
      %v3435 = vadd.f32 %v3389, 1e-12
      %v3436 = vadd.f32 %v3392, 1e-12
      %v3437 = vadd.f32 %v3395, 1e-12
      %v3438 = vadd.f32 %v3398, 1e-12
      %v3439 = vadd.f32 %v3401, 1e-12
      %v3440 = vadd.f32 %v3404, 1e-12
      %v3441 = vadd.f32 %v3407, 1e-12
      %v3442 = vadd.f32 %v3410, 1e-12
      %v3443 = vadd.f32 %v3413, 1e-12
      %v3444 = vadd.f32 %v3416, 1e-12
      %v3445 = vadd.f32 %v3419, 1e-12
      %v3446 = vadd.f32 %v3422, 1e-12
      %v3447 = vadd.f32 %v3425, 1e-12
      %v3448 = vadd.f32 %v3428, 1e-12
      %v3449 = vadd.f32 %v3431, 1e-12
      %v3450 = vadd.f32 %v3434, 1e-12
      %v3451 = vrsqrt.pop %v3435
      %v3452 = vmul.f32 %v3451, %v3435
      %v3453 = vmul.f32 %v3452, %v3451
      %v3454 = vmul.f32 0.5, %v3453
      %v3455 = vsub.f32 1.5, %v3454
      %v3456 = vmul.f32 %v3451, %v3455
      %vm3457 = vweird.f32 %v3435
      %vm3458 = vweird.f32 %v3451
      %vm3459 = vmor %vm3457, %vm3458
      %v3460 = vsel %vm3459, %v3451, %v3456
      %v3461 = vrsqrt.pop %v3436
      %v3462 = vmul.f32 %v3461, %v3436
      %v3463 = vmul.f32 %v3462, %v3461
      %v3464 = vmul.f32 0.5, %v3463
      %v3465 = vsub.f32 1.5, %v3464
      %v3466 = vmul.f32 %v3461, %v3465
      %vm3467 = vweird.f32 %v3436
      %vm3468 = vweird.f32 %v3461
      %vm3469 = vmor %vm3467, %vm3468
      %v3470 = vsel %vm3469, %v3461, %v3466
      %v3471 = vrsqrt.pop %v3437
      %v3472 = vmul.f32 %v3471, %v3437
      %v3473 = vmul.f32 %v3472, %v3471
      %v3474 = vmul.f32 0.5, %v3473
      %v3475 = vsub.f32 1.5, %v3474
      %v3476 = vmul.f32 %v3471, %v3475
      %vm3477 = vweird.f32 %v3437
      %vm3478 = vweird.f32 %v3471
      %vm3479 = vmor %vm3477, %vm3478
      %v3480 = vsel %vm3479, %v3471, %v3476
      %v3481 = vrsqrt.pop %v3438
      %v3482 = vmul.f32 %v3481, %v3438
      %v3483 = vmul.f32 %v3482, %v3481
      %v3484 = vmul.f32 0.5, %v3483
      %v3485 = vsub.f32 1.5, %v3484
      %v3486 = vmul.f32 %v3481, %v3485
      %vm3487 = vweird.f32 %v3438
      %vm3488 = vweird.f32 %v3481
      %vm3489 = vmor %vm3487, %vm3488
      %v3490 = vsel %vm3489, %v3481, %v3486
      %v3491 = vrsqrt.pop %v3439
      %v3492 = vmul.f32 %v3491, %v3439
      %v3493 = vmul.f32 %v3492, %v3491
      %v3494 = vmul.f32 0.5, %v3493
      %v3495 = vsub.f32 1.5, %v3494
      %v3496 = vmul.f32 %v3491, %v3495
      %vm3497 = vweird.f32 %v3439
      %vm3498 = vweird.f32 %v3491
      %vm3499 = vmor %vm3497, %vm3498
      %v3500 = vsel %vm3499, %v3491, %v3496
      %v3501 = vrsqrt.pop %v3440
      %v3502 = vmul.f32 %v3501, %v3440
      %v3503 = vmul.f32 %v3502, %v3501
      %v3504 = vmul.f32 0.5, %v3503
      %v3505 = vsub.f32 1.5, %v3504
      %v3506 = vmul.f32 %v3501, %v3505
      %vm3507 = vweird.f32 %v3440
      %vm3508 = vweird.f32 %v3501
      %vm3509 = vmor %vm3507, %vm3508
      %v3510 = vsel %vm3509, %v3501, %v3506
      %v3511 = vrsqrt.pop %v3441
      %v3512 = vmul.f32 %v3511, %v3441
      %v3513 = vmul.f32 %v3512, %v3511
      %v3514 = vmul.f32 0.5, %v3513
      %v3515 = vsub.f32 1.5, %v3514
      %v3516 = vmul.f32 %v3511, %v3515
      %vm3517 = vweird.f32 %v3441
      %vm3518 = vweird.f32 %v3511
      %vm3519 = vmor %vm3517, %vm3518
      %v3520 = vsel %vm3519, %v3511, %v3516
      %v3521 = vrsqrt.pop %v3442
      %v3522 = vmul.f32 %v3521, %v3442
      %v3523 = vmul.f32 %v3522, %v3521
      %v3524 = vmul.f32 0.5, %v3523
      %v3525 = vsub.f32 1.5, %v3524
      %v3526 = vmul.f32 %v3521, %v3525
      %vm3527 = vweird.f32 %v3442
      %vm3528 = vweird.f32 %v3521
      %vm3529 = vmor %vm3527, %vm3528
      %v3530 = vsel %vm3529, %v3521, %v3526
      %v3531 = vrsqrt.pop %v3443
      %v3532 = vmul.f32 %v3531, %v3443
      %v3533 = vmul.f32 %v3532, %v3531
      %v3534 = vmul.f32 0.5, %v3533
      %v3535 = vsub.f32 1.5, %v3534
      %v3536 = vmul.f32 %v3531, %v3535
      %vm3537 = vweird.f32 %v3443
      %vm3538 = vweird.f32 %v3531
      %vm3539 = vmor %vm3537, %vm3538
      %v3540 = vsel %vm3539, %v3531, %v3536
      %v3541 = vrsqrt.pop %v3444
      %v3542 = vmul.f32 %v3541, %v3444
      %v3543 = vmul.f32 %v3542, %v3541
      %v3544 = vmul.f32 0.5, %v3543
      %v3545 = vsub.f32 1.5, %v3544
      %v3546 = vmul.f32 %v3541, %v3545
      %vm3547 = vweird.f32 %v3444
      %vm3548 = vweird.f32 %v3541
      %vm3549 = vmor %vm3547, %vm3548
      %v3550 = vsel %vm3549, %v3541, %v3546
      %v3551 = vrsqrt.pop %v3445
      %v3552 = vmul.f32 %v3551, %v3445
      %v3553 = vmul.f32 %v3552, %v3551
      %v3554 = vmul.f32 0.5, %v3553
      %v3555 = vsub.f32 1.5, %v3554
      %v3556 = vmul.f32 %v3551, %v3555
      %vm3557 = vweird.f32 %v3445
      %vm3558 = vweird.f32 %v3551
      %vm3559 = vmor %vm3557, %vm3558
      %v3560 = vsel %vm3559, %v3551, %v3556
      %v3561 = vrsqrt.pop %v3446
      %v3562 = vmul.f32 %v3561, %v3446
      %v3563 = vmul.f32 %v3562, %v3561
      %v3564 = vmul.f32 0.5, %v3563
      %v3565 = vsub.f32 1.5, %v3564
      %v3566 = vmul.f32 %v3561, %v3565
      %vm3567 = vweird.f32 %v3446
      %vm3568 = vweird.f32 %v3561
      %vm3569 = vmor %vm3567, %vm3568
      %v3570 = vsel %vm3569, %v3561, %v3566
      %v3571 = vrsqrt.pop %v3447
      %v3572 = vmul.f32 %v3571, %v3447
      %v3573 = vmul.f32 %v3572, %v3571
      %v3574 = vmul.f32 0.5, %v3573
      %v3575 = vsub.f32 1.5, %v3574
      %v3576 = vmul.f32 %v3571, %v3575
      %vm3577 = vweird.f32 %v3447
      %vm3578 = vweird.f32 %v3571
      %vm3579 = vmor %vm3577, %vm3578
      %v3580 = vsel %vm3579, %v3571, %v3576
      %v3581 = vrsqrt.pop %v3448
      %v3582 = vmul.f32 %v3581, %v3448
      %v3583 = vmul.f32 %v3582, %v3581
      %v3584 = vmul.f32 0.5, %v3583
      %v3585 = vsub.f32 1.5, %v3584
      %v3586 = vmul.f32 %v3581, %v3585
      %vm3587 = vweird.f32 %v3448
      %vm3588 = vweird.f32 %v3581
      %vm3589 = vmor %vm3587, %vm3588
      %v3590 = vsel %vm3589, %v3581, %v3586
      %v3591 = vrsqrt.pop %v3449
      %v3592 = vmul.f32 %v3591, %v3449
      %v3593 = vmul.f32 %v3592, %v3591
      %v3594 = vmul.f32 0.5, %v3593
      %v3595 = vsub.f32 1.5, %v3594
      %v3596 = vmul.f32 %v3591, %v3595
      %vm3597 = vweird.f32 %v3449
      %vm3598 = vweird.f32 %v3591
      %vm3599 = vmor %vm3597, %vm3598
      %v3600 = vsel %vm3599, %v3591, %v3596
      %v3601 = vrsqrt.pop %v3450
      %v3602 = vmul.f32 %v3601, %v3450
      %v3603 = vmul.f32 %v3602, %v3601
      %v3604 = vmul.f32 0.5, %v3603
      %v3605 = vsub.f32 1.5, %v3604
      %v3606 = vmul.f32 %v3601, %v3605
      %vm3607 = vweird.f32 %v3450
      %vm3608 = vweird.f32 %v3601
      %vm3609 = vmor %vm3607, %vm3608
      %v3610 = vsel %vm3609, %v3601, %v3606
      %s3611 = scalar_lea.vmem %s343, 128
      %3612 = vst.msk [vmem:[%s3611] sm:$0xff] %vm1762, %v2649
      %3613 = vst.msk [vmem:[%s3611 + $0x8] sm:$0xff] %vm1762, %v2653
      %3614 = vst.msk [vmem:[%s3611 + $0x10] sm:$0xff] %vm1762, %v2657
      %3615 = vst.msk [vmem:[%s3611 + $0x18] sm:$0xff] %vm1762, %v2661
      %3616 = vst.msk [vmem:[%s3611 + $0x20] sm:$0xff] %vm1762, %v2665
      %3617 = vst.msk [vmem:[%s3611 + $0x28] sm:$0xff] %vm1762, %v2669
      %3618 = vst.msk [vmem:[%s3611 + $0x30] sm:$0xff] %vm1762, %v2673
      %3619 = vst.msk [vmem:[%s3611 + $0x38] sm:$0xff] %vm1762, %v2677
      %3620 = vst.msk [vmem:[%s3611 + $0x40] sm:$0xff] %vm1762, %v2681
      %3621 = vst.msk [vmem:[%s3611 + $0x48] sm:$0xff] %vm1762, %v2685
      %3622 = vst.msk [vmem:[%s3611 + $0x50] sm:$0xff] %vm1762, %v2689
      %3623 = vst.msk [vmem:[%s3611 + $0x58] sm:$0xff] %vm1762, %v2693
      %3624 = vst.msk [vmem:[%s3611 + $0x60] sm:$0xff] %vm1762, %v2697
      %3625 = vst.msk [vmem:[%s3611 + $0x68] sm:$0xff] %vm1762, %v2701
      %3626 = vst.msk [vmem:[%s3611 + $0x70] sm:$0xff] %vm1762, %v2705
      %3627 = vst.msk [vmem:[%s3611 + $0x78] sm:$0xff] %vm1762, %v2709
      %v3628 = vmul.f32 %v2649, %v3460
      %v3629 = vmul.f32 %v2653, %v3470
      %v3630 = vmul.f32 %v2657, %v3480
      %v3631 = vmul.f32 %v2661, %v3490
      %v3632 = vmul.f32 %v2665, %v3500
      %v3633 = vmul.f32 %v2669, %v3510
      %v3634 = vmul.f32 %v2673, %v3520
      %v3635 = vmul.f32 %v2677, %v3530
      %v3636 = vmul.f32 %v2681, %v3540
      %v3637 = vmul.f32 %v2685, %v3550
      %v3638 = vmul.f32 %v2689, %v3560
      %v3639 = vmul.f32 %v2693, %v3570
      %v3640 = vmul.f32 %v2697, %v3580
      %v3641 = vmul.f32 %v2701, %v3590
      %v3642 = vmul.f32 %v2705, %v3600
      %v3643 = vmul.f32 %v2709, %v3610
      %s3644 = scalar_lea.vmem %s353, 128
      %3645 = vst.msk [vmem:[%s3644] sm:$0xff] %vm1762, %v3628
      %3646 = vst.msk [vmem:[%s3644 + $0x8] sm:$0xff] %vm1762, %v3629
      %3647 = vst.msk [vmem:[%s3644 + $0x10] sm:$0xff] %vm1762, %v3630
      %3648 = vst.msk [vmem:[%s3644 + $0x18] sm:$0xff] %vm1762, %v3631
      %3649 = vst.msk [vmem:[%s3644 + $0x20] sm:$0xff] %vm1762, %v3632
      %3650 = vst.msk [vmem:[%s3644 + $0x28] sm:$0xff] %vm1762, %v3633
      %3651 = vst.msk [vmem:[%s3644 + $0x30] sm:$0xff] %vm1762, %v3634
      %3652 = vst.msk [vmem:[%s3644 + $0x38] sm:$0xff] %vm1762, %v3635
      %3653 = vst.msk [vmem:[%s3644 + $0x40] sm:$0xff] %vm1762, %v3636
      %3654 = vst.msk [vmem:[%s3644 + $0x48] sm:$0xff] %vm1762, %v3637
      %3655 = vst.msk [vmem:[%s3644 + $0x50] sm:$0xff] %vm1762, %v3638
      %3656 = vst.msk [vmem:[%s3644 + $0x58] sm:$0xff] %vm1762, %v3639
      %3657 = vst.msk [vmem:[%s3644 + $0x60] sm:$0xff] %vm1762, %v3640
      %3658 = vst.msk [vmem:[%s3644 + $0x68] sm:$0xff] %vm1762, %v3641
      %3659 = vst.msk [vmem:[%s3644 + $0x70] sm:$0xff] %vm1762, %v3642
      %3660 = vst.msk [vmem:[%s3644 + $0x78] sm:$0xff] %vm1762, %v3643
      %s3661 = scalar_lea.vmem %s363, 128
      %3662 = vst.msk [vmem:[%s3661] sm:$0xff] %vm1762, %v3309
      %3663 = vst.msk [vmem:[%s3661 + $0x8] sm:$0xff] %vm1762, %v3313
      %3664 = vst.msk [vmem:[%s3661 + $0x10] sm:$0xff] %vm1762, %v3317
      %3665 = vst.msk [vmem:[%s3661 + $0x18] sm:$0xff] %vm1762, %v3321
      %3666 = vst.msk [vmem:[%s3661 + $0x20] sm:$0xff] %vm1762, %v3325
      %3667 = vst.msk [vmem:[%s3661 + $0x28] sm:$0xff] %vm1762, %v3329
      %3668 = vst.msk [vmem:[%s3661 + $0x30] sm:$0xff] %vm1762, %v3333
      %3669 = vst.msk [vmem:[%s3661 + $0x38] sm:$0xff] %vm1762, %v3337
      %3670 = vst.msk [vmem:[%s3661 + $0x40] sm:$0xff] %vm1762, %v3341
      %3671 = vst.msk [vmem:[%s3661 + $0x48] sm:$0xff] %vm1762, %v3345
      %3672 = vst.msk [vmem:[%s3661 + $0x50] sm:$0xff] %vm1762, %v3349
      %3673 = vst.msk [vmem:[%s3661 + $0x58] sm:$0xff] %vm1762, %v3353
      %3674 = vst.msk [vmem:[%s3661 + $0x60] sm:$0xff] %vm1762, %v3357
      %3675 = vst.msk [vmem:[%s3661 + $0x68] sm:$0xff] %vm1762, %v3361
      %3676 = vst.msk [vmem:[%s3661 + $0x70] sm:$0xff] %vm1762, %v3365
      %3677 = vst.msk [vmem:[%s3661 + $0x78] sm:$0xff] %vm1762, %v3369
      %s3678 = smul.u32 16, %s24
      %p3679 = scmp.lt.s32.totalorder %s23, 1
      %s3680 = scalar_select %p3679, %s23, 1
      %p3681 = scmp.lt.s32.totalorder %s3678, 15
      %s3682 = scalar_select %p3681, %s3678, 15
      %s3683 = smul.addr %s3680, 32
      %s3684 = sadd.s32 %s3682, %s3683
      %s3685 = smul.addr %s3684, 8
      %s3686 = scalar_lea.vmem %s5, %s3685
      %s3687 = smul.u32 16, %s24
      %p3688 = scmp.lt.s32.totalorder %s23, 1
      %s3689 = scalar_select %p3688, %s23, 1
      %p3690 = scmp.lt.s32.totalorder %s3687, 15
      %s3691 = scalar_select %p3690, %s3687, 15
      %s3692 = smul.addr %s3689, 32
      %s3693 = sadd.s32 %s3691, %s3692
      %s3694 = smul.addr %s3693, 8
      %s3695 = scalar_lea.vmem %s6, %s3694
      %s3696 = smul.u32 16, %s24
      %p3697 = scmp.lt.s32.totalorder %s23, 1
      %s3698 = scalar_select %p3697, %s23, 1
      %p3699 = scmp.lt.s32.totalorder %s3696, 15
      %s3700 = scalar_select %p3699, %s3696, 15
      %s3701 = smul.addr %s3698, 32
      %s3702 = sadd.s32 %s3700, %s3701
      %s3703 = smul.addr %s3702, 8
      %s3704 = scalar_lea.vmem %s7, %s3703
      // Predicated region
      $region41: #{tpu_custom_call.1} parent=39 // pred_check
        %p3705 = pneg %p163
      $region42: #{tpu_custom_call.1} parent=39 // pred_check_branch
        %3707 = sbr.rel (%p3705) target = $region44
      $region43: #{tpu_custom_call.1} parent=39 // pred_region
        %s3708 = smul.u32 16, %s24
      $region44: #{tpu_custom_call.1} parent=39 // pred_fallthru
        _
      // Predicated region
      $region45: #{tpu_custom_call.1} parent=39 // pred_check
        %p3709 = pneg %p191
      $region46: #{tpu_custom_call.1} parent=39 // pred_check_branch
        %3711 = sbr.rel (%p3709) target = $region48
      $region47: #{tpu_custom_call.1} parent=39 // pred_region
        %s3712 = smul.u32 16, %s24
      $region48: #{tpu_custom_call.1} parent=39 // pred_fallthru
        _
      // Predicated region
      $region49: #{tpu_custom_call.1} parent=39 // pred_check
        %p3713 = pneg %p219
      $region50: #{tpu_custom_call.1} parent=39 // pred_check_branch
        %3715 = sbr.rel (%p3713) target = $region52
      $region51: #{tpu_custom_call.1} parent=39 // pred_region
        %s3716 = smul.u32 16, %s24
      $region52: #{tpu_custom_call.1} parent=39 // pred_fallthru
        _
    $region40: #{tpu_custom_call.1} parent=5 // pred_fallthru
      _
    %p3717 = scmp.le.s32.totalorder 2, %s14
    // Predicated region
    $region53: #{tpu_custom_call.1} parent=5 // pred_check
      %p3718 = pneg %p3717
    $region54: #{tpu_custom_call.1} parent=5 // pred_check_branch
      %3720 = sbr.rel (%p3718) target = $region56
    $region55: #{tpu_custom_call.1} parent=5 // pred_region
      %s3721 = ssub.s32 %s14, 2
      // Predicated region
      $region57: #{tpu_custom_call.1} parent=55 // pred_check
        %p3722 = pneg %p169
      $region58: #{tpu_custom_call.1} parent=55 // pred_check_branch
        %3724 = sbr.rel (%p3722) target = $region60
      $region59: #{tpu_custom_call.1} parent=55 // pred_region
        %s3725 = smul.u32 16, %s26
        %p3726 = scmp.lt.s32.totalorder %s25, 1
        %s3727 = scalar_select %p3726, %s25, 1
        %p3728 = scmp.lt.s32.totalorder %s3725, 15
        %s3729 = scalar_select %p3728, %s3725, 15
        %s3730 = smul.addr %s3727, 32
        %s3731 = sadd.s32 %s3729, %s3730
        %s3732 = smul.addr %s3731, 8
        %s3733 = scalar_lea.vmem %s5, %s3732
      $region60: #{tpu_custom_call.1} parent=55 // pred_fallthru
        _
      // Predicated region
      $region61: #{tpu_custom_call.1} parent=55 // pred_check
        %p3734 = pneg %p197
      $region62: #{tpu_custom_call.1} parent=55 // pred_check_branch
        %3736 = sbr.rel (%p3734) target = $region64
      $region63: #{tpu_custom_call.1} parent=55 // pred_region
        %s3737 = smul.u32 16, %s26
        %p3738 = scmp.lt.s32.totalorder %s25, 1
        %s3739 = scalar_select %p3738, %s25, 1
        %p3740 = scmp.lt.s32.totalorder %s3737, 15
        %s3741 = scalar_select %p3740, %s3737, 15
        %s3742 = smul.addr %s3739, 32
        %s3743 = sadd.s32 %s3741, %s3742
        %s3744 = smul.addr %s3743, 8
        %s3745 = scalar_lea.vmem %s6, %s3744
      $region64: #{tpu_custom_call.1} parent=55 // pred_fallthru
        _
      // Predicated region
      $region65: #{tpu_custom_call.1} parent=55 // pred_check
        %p3746 = pneg %p225
      $region66: #{tpu_custom_call.1} parent=55 // pred_check_branch
        %3748 = sbr.rel (%p3746) target = $region68
      $region67: #{tpu_custom_call.1} parent=55 // pred_region
        %s3749 = smul.u32 16, %s26
        %p3750 = scmp.lt.s32.totalorder %s25, 1
        %s3751 = scalar_select %p3750, %s25, 1
        %p3752 = scmp.lt.s32.totalorder %s3749, 15
        %s3753 = scalar_select %p3752, %s3749, 15
        %s3754 = smul.addr %s3751, 32
        %s3755 = sadd.s32 %s3753, %s3754
        %s3756 = smul.addr %s3755, 8
        %s3757 = scalar_lea.vmem %s7, %s3756
      $region68: #{tpu_custom_call.1} parent=55 // pred_fallthru
        _
    $region56: #{tpu_custom_call.1} parent=5 // pred_fallthru
      _
  $region6: #{tpu_custom_call.1} parent=0 // loop_footer
    %s18 = sadd.s32 1, %s14
  $region7: #{tpu_custom_call.1} parent=0 // loop_footer_branch
    %13 = sbr.rel target = $region3
  $region8: #{tpu_custom_call.1} parent=0 // loop_exit
    _

</llo_original>
